<compile_context>
chip_gen: v7x
topology: tpu7x:2x2x1
jax: 0.10.0
libtpu: 0.0.40
codegen_flags: <defaults>
</compile_context>

<pallas_src>
import functools
import math

import jax
import jax.numpy as jnp
from jax import lax
from jax.experimental import pallas as pl
from jax.experimental.pallas import tpu as pltpu

MIN_NORM = 1e-15
MIN_SS = MIN_NORM * MIN_NORM        # clamp applied to sums of squares
BALL_EPS = 4e-3                     # PoincareBall eps for float32 (hgcn reference)
ARTANH_CLIP = 1.0 - 1e-7            # float32-representable clip (1 - 1e-15 rounds to 1.0)
C_IN = 1.0                          # curvature c_in
C_OUT = 1.0                         # curvature c_out

VMEM_LIMIT_A = 32 * 1024 * 1024     # Kernel A is tiny; 32 MiB is safe on all gens
VMEM_LIMIT_MIN = 32 * 1024 * 1024
VMEM_LIMIT_MAX = 64 * 1024 * 1024   # never exceed v7x physical VMEM
RESIDENT_XT_CAP = 40 * 1024 * 1024  # keep headroom for 2-core v7x when xt is resident


# ---------------- Poincare-ball helpers (pure jnp; reference + wrapper-side precompute) ----------------

def _artanh(x):
    x = jnp.clip(x, -ARTANH_CLIP, ARTANH_CLIP)
    return 0.5 * jnp.log((1.0 + x) / (1.0 - x))


def _row_norm(x):
    return jnp.maximum(jnp.sqrt(jnp.sum(x * x, axis=-1, keepdims=True)), MIN_NORM)


def _proj(x, c):
    norm = _row_norm(x)
    maxnorm = (1.0 - BALL_EPS) / math.sqrt(c)
    return jnp.where(norm > maxnorm, x / norm * maxnorm, x)


def _expmap0(u, c):
    sqrt_c = math.sqrt(c)
    u_norm = _row_norm(u)
    return jnp.tanh(sqrt_c * u_norm) * u / (sqrt_c * u_norm)


def _logmap0(p, c):
    sqrt_c = math.sqrt(c)
    p_norm = _row_norm(p)
    return _artanh(sqrt_c * p_norm) / (sqrt_c * p_norm) * p


def _mobius_add(x, y, c):
    x2 = jnp.sum(x * x, axis=-1, keepdims=True)
    y2 = jnp.sum(y * y, axis=-1, keepdims=True)
    xy = jnp.sum(x * y, axis=-1, keepdims=True)
    num = (1.0 + 2.0 * c * xy + c * y2) * x + (1.0 - c * x2) * y
    denom = 1.0 + 2.0 * c * xy + c * c * x2 * y2
    return num / jnp.maximum(denom, MIN_NORM)


def _mobius_matvec_from_wt(x, w_t, c):
    # w_t is W^T with shape [F_in, F_out]; mx = x @ W^T matches torch mobius_matvec.
    sqrt_c = math.sqrt(c)
    x_norm = _row_norm(x)
    mx = jnp.dot(x, w_t, precision=lax.Precision.HIGHEST)
    mx_norm = _row_norm(mx)
    res_c = jnp.tanh(mx_norm / x_norm * _artanh(sqrt_c * x_norm)) * mx / (mx_norm * sqrt_c)
    cond = jnp.all(mx == 0.0, axis=-1, keepdims=True)
    return jnp.where(cond, jnp.zeros_like(res_c), res_c)


# ---------------- Kernel A: HypLinear + logmap0 (row-tiled) ----------------

def _hyp_linear_logmap_kernel(x_ref, wt_ref, hb_ref, xt_ref):
    x = x_ref[...]                # [tA, Din]    f32
    w_t = wt_ref[...]             # [Din, Dout_p] matmul dtype (f32 or bf16)
    hyp_bias = hb_ref[...]        # [1, Dout_p]  f32, precomputed proj(expmap0(bias))

    sqrt_c = math.sqrt(C_IN)
    maxnorm = (1.0 - BALL_EPS) / sqrt_c

    # ---- mobius_matvec(W, x) with the following proj fused as a clamp of the tanh factor ----
    x_ss = jnp.sum(x * x, axis=-1, keepdims=True)
    x_norm = jnp.sqrt(jnp.maximum(x_ss, MIN_SS))
    inv_x_norm = lax.rsqrt(jnp.maximum(x_ss, MIN_SS))

    mx = jnp.dot(x.astype(w_t.dtype), w_t, preferred_element_type=jnp.float32)
    mx_ss = jnp.sum(mx * mx, axis=-1, keepdims=True)
    mx_norm = jnp.sqrt(jnp.maximum(mx_ss, MIN_SS))
    inv_mx_norm = lax.rsqrt(jnp.maximum(mx_ss, MIN_SS))

    t = jnp.tanh((mx_norm * inv_x_norm) * _artanh(sqrt_c * x_norm))
    t = jnp.minimum(t, 1.0 - BALL_EPS)                      # fused proj: ||res|| = t / sqrt_c
    # zero-row check via the already-computed reduction (deviates from the torch
    # reference only when subnormal mx values square-underflow to 0).
    zero_rows = mx_ss == 0.0
    res = jnp.where(zero_rows, jnp.zeros_like(mx), (t / sqrt_c) * (mx * inv_mx_norm))
    res_ss = jnp.where(zero_rows, jnp.zeros_like(t), (t / sqrt_c) ** 2)   # reused below

    # ---- mobius_add(res, hyp_bias) -> proj -> logmap0 (one shared norm) ----
    hb_ss = jnp.sum(hyp_bias * hyp_bias, axis=-1, keepdims=True)          # [1, 1]
    xy = jnp.sum(res * hyp_bias, axis=-1, keepdims=True)                  # [tA, 1]
    num = (1.0 + 2.0 * C_IN * xy + C_IN * hb_ss) * res + (1.0 - C_IN * res_ss) * hyp_bias
    denom = 1.0 + 2.0 * C_IN * xy + C_IN * C_IN * res_ss * hb_ss
    y = num * (1.0 / jnp.maximum(denom, MIN_NORM))

    y_ss = jnp.sum(y * y, axis=-1, keepdims=True)
    y_norm = jnp.sqrt(jnp.maximum(y_ss, MIN_SS))
    inv_y_norm = lax.rsqrt(jnp.maximum(y_ss, MIN_SS))
    p = jnp.where(y_norm > maxnorm, (maxnorm * inv_y_norm) * y, y)        # proj
    p_norm = jnp.minimum(y_norm, maxnorm)                                 # ||p|| without re-reducing

    scale = _artanh(sqrt_c * p_norm) / (sqrt_c * p_norm)                  # logmap0
    xt_ref[...] = (scale * p).astype(xt_ref.dtype)


# ---------------- Kernel B: HypAgg (tiled adj @ x_tangent) + HypAct ----------------

def _hyp_agg_act_kernel(adj_ref, xt_ref, out_ref, acc_ref, *, tk, xt_resident):
    k = pl.program_id(1)

    @pl.when(k == 0)
    def _init():
        acc_ref[...] = jnp.zeros_like(acc_ref)

    if xt_resident:
        # Whole x_tangent panel is VMEM-resident (constant block index -> fetched once);
        # slice out the current k-slab.
        start = pl.multiple_of(k * tk, 8)
        xt_blk = xt_ref[pl.ds(start, tk), :]
    else:
        xt_blk = xt_ref[...]

    acc_ref[...] += jnp.dot(adj_ref[...], xt_blk,
                            preferred_element_type=jnp.float32)

    @pl.when(k == pl.num_programs(1) - 1)
    def _finalize():
        sqrt_ci = math.sqrt(C_IN)
        sqrt_co = math.sqrt(C_OUT)

        u = acc_ref[...]                                     # support_t, f32
        u_ss = jnp.sum(u * u, axis=-1, keepdims=True)
        u_norm = jnp.sqrt(jnp.maximum(u_ss, MIN_SS))
        inv_u_norm = lax.rsqrt(jnp.maximum(u_ss, MIN_SS))

        # ht = ReLU(logmap0(proj(expmap0(u, c_in)), c_in))
        #    = ReLU(artanh(min(tanh(sqrt_ci*||u||), 1-eps)) / sqrt_ci * u/||u||)
        t_in = jnp.minimum(jnp.tanh(sqrt_ci * u_norm), 1.0 - BALL_EPS)
        ht = jnp.maximum((_artanh(t_in) / sqrt_ci) * (u * inv_u_norm), 0.0)

        # out = proj(expmap0(ht, c_out), c_out)
        v_ss = jnp.sum(ht * ht, axis=-1, keepdims=True)
        v_norm = jnp.sqrt(jnp.maximum(v_ss, MIN_SS))
        inv_v_norm = lax.rsqrt(jnp.maximum(v_ss, MIN_SS))
        t_out = jnp.minimum(jnp.tanh(sqrt_co * v_norm), 1.0 - BALL_EPS)
        out_ref[...] = ((t_out / sqrt_co) * (ht * inv_v_norm)).astype(out_ref.dtype)


# ---------------- Wrapper ----------------

def _round_up(v, m):
    return ((v + m - 1) // m) * m


def _kernel_b_vmem_bytes(tm, tk, n_pk, dout_p, mat_bytes, xt_resident):
    adj_buf = 2 * tm * tk * mat_bytes                               # double-buffered adj tile
    xt_buf = 2 * (n_pk if xt_resident else tk) * dout_p * mat_bytes  # resident panel or k-slab
    out_buf = 2 * tm * dout_p * 4
    acc_buf = tm * dout_p * 4
    return int((adj_buf + xt_buf + out_buf + acc_buf) * 1.25) + (2 << 20)


def hyperbolic_graph_conv(x, adj, weight, bias, *,
                          matmul_dtype=jnp.bfloat16,
                          tm=512, tk=256,
                          use_core_parallel=False):
    """HyperbolicGraphConvolution forward (eval mode, use_att=False, local_agg=False).

    x:      [N, Din]    points on the Poincare ball (float32)
    adj:    [N, N]      dense row-normalized adjacency
    weight: [Dout, Din] HypLinear weight (torch layout)
    bias:   [Dout]      HypLinear bias
    matmul_dtype: dtype of MXU operands (adj, W^T, x_tangent); accumulation is f32.
                  bf16 default (Kernel B is HBM-bound on adj); pass float32 for a
                  bit-tighter numerical match.
    tm, tk: Kernel B row / contraction tile sizes (multiples of 8).
    use_core_parallel: on 2-TC chips (v7x) shard the row axis across TensorCores.
    """
    N, Din = x.shape
    Dout, Din_w = weight.shape
    assert Din_w == Din

    # Clamp tiles for small graphs (keep them multiples of 8).
    tm = min(tm, _round_up(N, 8))
    tk = min(tk, _round_up(N, 8))
    assert tm % 8 == 0 and tk % 8 == 0

    Dout_p = _round_up(Dout, 128)
    N_pm = _round_up(N, tm)       # adj row / output row padding
    N_pk = _round_up(N, tk)       # adj column / x_tangent row padding
    mat_bytes = jnp.dtype(matmul_dtype).itemsize

    # Constant hyperbolic bias, hoisted out of the kernel: proj(expmap0(proj_tan0(bias))).
    hyp_bias = _proj(_expmap0(bias.reshape(1, -1).astype(jnp.float32), C_IN), C_IN)
    hb_p = jnp.pad(hyp_bias, ((0, 0), (0, Dout_p - Dout)))

    # x: pad rows only (Din stays unpadded; block last dim == full array dim is legal).
    x_p = x.astype(jnp.float32)
    if N_pk != N:
        x_p = jnp.pad(x_p, ((0, N_pk - N), (0, 0)))

    w_t_p = jnp.pad(jnp.transpose(weight).astype(jnp.float32),
                    ((0, 0), (0, Dout_p - Dout))).astype(matmul_dtype)

    # adj: cast first (half-size copy when bf16), pad only if needed. Padded columns
    # must stay exactly zero (padded x_tangent rows are NOT zero).
    adj_m = adj if adj.dtype == matmul_dtype else adj.astype(matmul_dtype)
    if adj_m.shape != (N_pm, N_pk):
        adj_m = jnp.pad(adj_m, ((0, N_pm - N), (0, N_pk - N)))

    if use_core_parallel:
        row_sem, red_sem = pltpu.CORE_PARALLEL, pltpu.ARBITRARY
    else:
        row_sem, red_sem = "parallel", "arbitrary"

    # --- Kernel A: HypLinear + logmap0, row-tiled & pipelined ---
    x_tangent = pl.pallas_call(
        _hyp_linear_logmap_kernel,
        out_shape=jax.ShapeDtypeStruct((N_pk, Dout_p), matmul_dtype),
        grid=(N_pk // tk,),
        in_specs=[
            pl.BlockSpec((tk, Din), lambda i: (i, 0)),
            pl.BlockSpec((Din, Dout_p), lambda i: (0, 0)),
            pl.BlockSpec((1, Dout_p), lambda i: (0, 0)),
        ],
        out_specs=pl.BlockSpec((tk, Dout_p), lambda i: (i, 0)),
        compiler_params=pltpu.CompilerParams(
            dimension_semantics=(row_sem,),
            vmem_limit_bytes=VMEM_LIMIT_A),
    )(x_p, w_t_p, hb_p)

    # --- Kernel B: tiled adj @ x_tangent with f32 VMEM accumulator, fused HypAct ---
    xt_resident = _kernel_b_vmem_bytes(tm, tk, N_pk, Dout_p, mat_bytes, True) <= RESIDENT_XT_CAP
    vmem_b = _kernel_b_vmem_bytes(tm, tk, N_pk, Dout_p, mat_bytes, xt_resident)
    vmem_b = min(max(vmem_b, VMEM_LIMIT_MIN), VMEM_LIMIT_MAX)

    if xt_resident:
        # Constant block index => x_tangent fetched into VMEM once, reused for all (i, k).
        xt_spec = pl.BlockSpec((N_pk, Dout_p), lambda i, k: (0, 0))
    else:
        xt_spec = pl.BlockSpec((tk, Dout_p), lambda i, k: (k, 0))

    kernel_b = functools.partial(_hyp_agg_act_kernel, tk=tk, xt_resident=xt_resident)

    out_p = pl.pallas_call(
        kernel_b,
        out_shape=jax.ShapeDtypeStruct((N_pm, Dout_p), jnp.float32),
        grid_spec=pltpu.PrefetchScalarGridSpec(
            num_scalar_prefetch=0,
            grid=(N_pm // tm, N_pk // tk),                   # reduction (k) axis last
            in_specs=[
                pl.BlockSpec((tm, tk), lambda i, k: (i, k)),  # adj tile
                xt_spec,                                      # x_tangent (resident or k-slab)
            ],
            out_specs=pl.BlockSpec((tm, Dout_p), lambda i, k: (i, 0)),
            scratch_shapes=[pltpu.VMEM((tm, Dout_p), jnp.float32)]),
        compiler_params=pltpu.CompilerParams(
            dimension_semantics=(row_sem, red_sem),
            vmem_limit_bytes=vmem_b),
    )(adj_m, x_tangent)

    return out_p[:N, :Dout]


# ---------------- Pure-JAX reference (original un-fused math) ----------------

def _reference(x, adj, weight, bias):
    w_t = jnp.transpose(weight)
    mv = _mobius_matvec_from_wt(x, w_t, C_IN)
    res = _proj(mv, C_IN)
    hyp_bias = _proj(_expmap0(bias.reshape(1, -1), C_IN), C_IN)
    res = _proj(_mobius_add(res, hyp_bias, C_IN), C_IN)
    xt = _logmap0(res, C_IN)
    support_t = jnp.dot(adj, xt, precision=lax.Precision.HIGHEST)
    h = _proj(_expmap0(support_t, C_IN), C_IN)
    ht = jnp.maximum(_logmap0(h, C_IN), 0.0)
    return _proj(_expmap0(ht, C_OUT), C_OUT)


def _make_inputs(key, n, in_f, out_f):
    k_w, k_b, k_x, k_a = jax.random.split(key, 4)
    bound = math.sqrt(2.0) * math.sqrt(6.0 / (in_f + out_f))
    weight = jax.random.uniform(k_w, (out_f, in_f), jnp.float32, -bound, bound)
    bias = 0.02 * jax.random.normal(k_b, (out_f,), jnp.float32)
    u0 = 0.1 * jax.random.normal(k_x, (n, in_f), jnp.float32)
    x = _proj(_expmap0(u0, C_IN), C_IN)
    a = jax.random.uniform(k_a, (n, n), jnp.float32)
    a = ((a + a.T) > 1.9).astype(jnp.float32) + jnp.eye(n, dtype=jnp.float32)
    adj = a / jnp.sum(a, axis=1, keepdims=True)
    return x, adj, weight, bias


if __name__ == "__main__":
    key = jax.random.PRNGKey(0)
    k1, k2 = jax.random.split(key)

    # --- Shape 1: N=512 (tile-aligned path) ---
    N, IN_F, OUT_F = 512, 16, 32
    x, adj, weight, bias = _make_inputs(k1, N, IN_F, OUT_F)
    ref = _reference(x, adj, weight, bias)

    # f32 MXU path (tight check).
    out_f32 = hyperbolic_graph_conv(x, adj, weight, bias, matmul_dtype=jnp.float32)
    out_f32 = jax.block_until_ready(out_f32)
    assert out_f32.shape == (N, OUT_F)
    assert bool(jnp.allclose(out_f32, ref, atol=2e-4, rtol=2e-4)), \
        "f32 kernel mismatch vs pure-JAX reference"

    # Default bf16 MXU operands with f32 accumulation (perf path): looser tolerance.
    out_bf16 = hyperbolic_graph_conv(x, adj, weight, bias)
    out_bf16 = jax.block_until_ready(out_bf16)
    max_err = float(jnp.max(jnp.abs(out_bf16 - ref)))
    assert max_err < 5e-2, f"bf16 kernel error too large vs reference: {max_err}"

    # --- Shape 2: N=200 (exercises padding / clamped-tile path) ---
    N2, IN_F2, OUT_F2 = 200, 16, 32
    x2, adj2, weight2, bias2 = _make_inputs(k2, N2, IN_F2, OUT_F2)
    ref2 = _reference(x2, adj2, weight2, bias2)
    out2 = hyperbolic_graph_conv(x2, adj2, weight2, bias2, matmul_dtype=jnp.float32)
    out2 = jax.block_until_ready(out2)
    assert out2.shape == (N2, OUT_F2)
    assert bool(jnp.allclose(out2, ref2, atol=2e-4, rtol=2e-4)), \
        "f32 kernel (padded shape) mismatch vs pure-JAX reference"

    # TODO(synk): training-mode weight dropout and the use_att / local_agg attention
    # branches are not implemented (dropout=0.0, use_att=False chosen at construction).
    # TODO(synk): generation-specific fp8 (v7x) / int8 (v5e) adj quantization paths not
    # implemented; bf16 adj is the portable default.
    print("KERNEL_OK")
</pallas_src>

<mosaic_0001>
module attributes {stable_mosaic.version = 11 : i64} {
  func.func @_hyp_linear_logmap_kernel(%arg0: i32, %arg1: memref<256x16xf32, #tpu.memory_space<vmem>>, %arg2: memref<16x128xf32, #tpu.memory_space<vmem>>, %arg3: memref<1x128xf32, #tpu.memory_space<vmem>>, %arg4: memref<256x128xf32, #tpu.memory_space<vmem>>) attributes {dimension_semantics = [#tpu.dimension_semantics<parallel>], iteration_bounds = array<i64: 2>, scalar_prefetch = 0 : i64, scratch_operands = 0 : i64, tpu.core_type = #tpu.core_type<tc>, window_params = [{transform_indices = @transform_0, window_bounds = array<i64: 256, 16>}, {pipeline_mode = #tpu.pipeline_mode<synchronous>, transform_indices = @transform_1, window_bounds = array<i64: 16, 128>}, {pipeline_mode = #tpu.pipeline_mode<synchronous>, transform_indices = @transform_2, window_bounds = array<i64: 1, 128>}, {transform_indices = @transform_3, window_bounds = array<i64: 256, 128>}]} {
    %c0 = arith.constant 0 : index
    %c0_0 = arith.constant 0 : index
    %0 = vector.load %arg1[%c0, %c0_0] : memref<256x16xf32, #tpu.memory_space<vmem>>, vector<256x16xf32>
    %c0_1 = arith.constant 0 : index
    %c0_2 = arith.constant 0 : index
    %1 = vector.load %arg2[%c0_1, %c0_2] : memref<16x128xf32, #tpu.memory_space<vmem>>, vector<16x128xf32>
    %c0_3 = arith.constant 0 : index
    %c0_4 = arith.constant 0 : index
    %2 = vector.load %arg3[%c0_3, %c0_4] : memref<1x128xf32, #tpu.memory_space<vmem>>, vector<1x128xf32>
    %3 = arith.mulf %0, %0 : vector<256x16xf32>
    %cst = arith.constant dense<0.000000e+00> : vector<256xf32>
    %4 = vector.multi_reduction <add>, %3, %cst [1] : vector<256x16xf32> to vector<256xf32>
    %5 = vector.shape_cast %4 : vector<256xf32> to vector<256x1xf32>
    %cst_5 = arith.constant 1.000000e-30 : f32
    %6 = vector.broadcast %cst_5 : f32 to vector<256x1xf32>
    %7 = arith.maximumf %5, %6 : vector<256x1xf32>
    %8 = math.sqrt %7 : vector<256x1xf32>
    %cst_6 = arith.constant 1.000000e-30 : f32
    %9 = vector.broadcast %cst_6 : f32 to vector<256x1xf32>
    %10 = arith.maximumf %5, %9 : vector<256x1xf32>
    %11 = math.rsqrt %10 : vector<256x1xf32>
    %cst_7 = arith.constant dense<0.000000e+00> : vector<256x128xf32>
    %12 = tpu.matmul %0, %1, %cst_7 {dimension_numbers = #tpu.dot_dimension_numbers<[1], [0], [0], [1], [0, 0, 1, 1], [], []>} : vector<256x16xf32>, vector<16x128xf32>, vector<256x128xf32> -> vector<256x128xf32>
    %13 = arith.mulf %12, %12 : vector<256x128xf32>
    %cst_8 = arith.constant dense<0.000000e+00> : vector<256xf32>
    %14 = vector.multi_reduction <add>, %13, %cst_8 [1] : vector<256x128xf32> to vector<256xf32>
    %15 = vector.shape_cast %14 : vector<256xf32> to vector<256x1xf32>
    %cst_9 = arith.constant 1.000000e-30 : f32
    %16 = vector.broadcast %cst_9 : f32 to vector<256x1xf32>
    %17 = arith.maximumf %15, %16 : vector<256x1xf32>
    %18 = math.sqrt %17 : vector<256x1xf32>
    %cst_10 = arith.constant 1.000000e-30 : f32
    %19 = vector.broadcast %cst_10 : f32 to vector<256x1xf32>
    %20 = arith.maximumf %15, %19 : vector<256x1xf32>
    %21 = math.rsqrt %20 : vector<256x1xf32>
    %22 = arith.mulf %18, %11 : vector<256x1xf32>
    %cst_11 = arith.constant 1.000000e+00 : f32
    %23 = vector.broadcast %cst_11 : f32 to vector<256x1xf32>
    %24 = arith.mulf %23, %8 : vector<256x1xf32>
    %cst_12 = arith.constant -0.99999988 : f32
    %cst_13 = arith.constant 0.99999988 : f32
    %25 = vector.broadcast %cst_12 : f32 to vector<256x1xf32>
    %26 = arith.maximumf %25, %24 : vector<256x1xf32>
    %27 = vector.broadcast %cst_13 : f32 to vector<256x1xf32>
    %28 = arith.minimumf %27, %26 : vector<256x1xf32>
    %cst_14 = arith.constant 1.000000e+00 : f32
    %29 = vector.broadcast %cst_14 : f32 to vector<256x1xf32>
    %30 = arith.addf %29, %28 : vector<256x1xf32>
    %cst_15 = arith.constant 1.000000e+00 : f32
    %31 = vector.broadcast %cst_15 : f32 to vector<256x1xf32>
    %32 = arith.subf %31, %28 : vector<256x1xf32>
    %33 = arith.divf %30, %32 : vector<256x1xf32>
    %34 = math.log %33 : vector<256x1xf32>
    %cst_16 = arith.constant 5.000000e-01 : f32
    %35 = vector.broadcast %cst_16 : f32 to vector<256x1xf32>
    %36 = arith.mulf %35, %34 : vector<256x1xf32>
    %37 = arith.mulf %22, %36 : vector<256x1xf32>
    %38 = math.tanh %37 : vector<256x1xf32>
    %cst_17 = arith.constant 0.995999991 : f32
    %39 = vector.broadcast %cst_17 : f32 to vector<256x1xf32>
    %40 = arith.minimumf %38, %39 : vector<256x1xf32>
    %cst_18 = arith.constant 0.000000e+00 : f32
    %41 = vector.broadcast %cst_18 : f32 to vector<256x1xf32>
    %42 = arith.cmpf oeq, %15, %41 : vector<256x1xf32>
    %cst_19 = arith.constant 0.000000e+00 : f32
    %43 = vector.broadcast %cst_19 : f32 to vector<256x128xf32>
    %cst_20 = arith.constant 1.000000e+00 : f32
    %44 = vector.broadcast %cst_20 : f32 to vector<256x1xf32>
    %45 = arith.divf %40, %44 : vector<256x1xf32>
    %46 = vector.broadcast %21 : vector<256x1xf32> to vector<256x128xf32>
    %47 = arith.mulf %12, %46 : vector<256x128xf32>
    %48 = vector.broadcast %45 : vector<256x1xf32> to vector<256x128xf32>
    %49 = arith.mulf %48, %47 : vector<256x128xf32>
    %50 = vector.shape_cast %42 : vector<256x1xi1> to vector<256x1xi1>
    %51 = vector.broadcast %50 : vector<256x1xi1> to vector<256x128xi1>
    %52 = arith.select %51, %43, %49 : vector<256x128xi1>, vector<256x128xf32>
    %cst_21 = arith.constant 0.000000e+00 : f32
    %53 = vector.broadcast %cst_21 : f32 to vector<256x1xf32>
    %cst_22 = arith.constant 1.000000e+00 : f32
    %54 = vector.broadcast %cst_22 : f32 to vector<256x1xf32>
    %55 = arith.divf %40, %54 : vector<256x1xf32>
    %56 = arith.mulf %55, %55 : vector<256x1xf32>
    %57 = arith.select %42, %53, %56 : vector<256x1xi1>, vector<256x1xf32>
    %58 = arith.mulf %2, %2 : vector<1x128xf32>
    %cst_23 = arith.constant dense<0.000000e+00> : vector<1xf32>
    %59 = vector.multi_reduction <add>, %58, %cst_23 [1] : vector<1x128xf32> to vector<1xf32>
    %60 = vector.shape_cast %59 : vector<1xf32> to vector<1x1xf32>
    %61 = vector.broadcast %2 : vector<1x128xf32> to vector<256x128xf32>
    %62 = arith.mulf %52, %61 : vector<256x128xf32>
    %cst_24 = arith.constant dense<0.000000e+00> : vector<256xf32>
    %63 = vector.multi_reduction <add>, %62, %cst_24 [1] : vector<256x128xf32> to vector<256xf32>
    %64 = vector.shape_cast %63 : vector<256xf32> to vector<256x1xf32>
    %cst_25 = arith.constant 2.000000e+00 : f32
    %65 = vector.broadcast %cst_25 : f32 to vector<256x1xf32>
    %66 = arith.mulf %65, %64 : vector<256x1xf32>
    %cst_26 = arith.constant 1.000000e+00 : f32
    %67 = vector.broadcast %cst_26 : f32 to vector<256x1xf32>
    %68 = arith.addf %67, %66 : vector<256x1xf32>
    %cst_27 = arith.constant 1.000000e+00 : f32
    %69 = vector.broadcast %cst_27 : f32 to vector<1x1xf32>
    %70 = arith.mulf %69, %60 : vector<1x1xf32>
    %71 = vector.broadcast %70 : vector<1x1xf32> to vector<256x1xf32>
    %72 = arith.addf %68, %71 : vector<256x1xf32>
    %73 = vector.broadcast %72 : vector<256x1xf32> to vector<256x128xf32>
    %74 = arith.mulf %73, %52 : vector<256x128xf32>
    %cst_28 = arith.constant 1.000000e+00 : f32
    %75 = vector.broadcast %cst_28 : f32 to vector<256x1xf32>
    %76 = arith.mulf %75, %57 : vector<256x1xf32>
    %cst_29 = arith.constant 1.000000e+00 : f32
    %77 = vector.broadcast %cst_29 : f32 to vector<256x1xf32>
    %78 = arith.subf %77, %76 : vector<256x1xf32>
    %79 = vector.broadcast %78 : vector<256x1xf32> to vector<256x128xf32>
    %80 = vector.broadcast %2 : vector<1x128xf32> to vector<256x128xf32>
    %81 = arith.mulf %79, %80 : vector<256x128xf32>
    %82 = arith.addf %74, %81 : vector<256x128xf32>
    %cst_30 = arith.constant 2.000000e+00 : f32
    %83 = vector.broadcast %cst_30 : f32 to vector<256x1xf32>
    %84 = arith.mulf %83, %64 : vector<256x1xf32>
    %cst_31 = arith.constant 1.000000e+00 : f32
    %85 = vector.broadcast %cst_31 : f32 to vector<256x1xf32>
    %86 = arith.addf %85, %84 : vector<256x1xf32>
    %cst_32 = arith.constant 1.000000e+00 : f32
    %87 = vector.broadcast %cst_32 : f32 to vector<256x1xf32>
    %88 = arith.mulf %87, %57 : vector<256x1xf32>
    %89 = vector.broadcast %60 : vector<1x1xf32> to vector<256x1xf32>
    %90 = arith.mulf %88, %89 : vector<256x1xf32>
    %91 = arith.addf %86, %90 : vector<256x1xf32>
    %cst_33 = arith.constant 1.000000e-15 : f32
    %92 = vector.broadcast %cst_33 : f32 to vector<256x1xf32>
    %93 = arith.maximumf %91, %92 : vector<256x1xf32>
    %cst_34 = arith.constant 1.000000e+00 : f32
    %94 = vector.broadcast %cst_34 : f32 to vector<256x1xf32>
    %95 = arith.divf %94, %93 : vector<256x1xf32>
    %96 = vector.broadcast %95 : vector<256x1xf32> to vector<256x128xf32>
    %97 = arith.mulf %82, %96 : vector<256x128xf32>
    %98 = arith.mulf %97, %97 : vector<256x128xf32>
    %cst_35 = arith.constant dense<0.000000e+00> : vector<256xf32>
    %99 = vector.multi_reduction <add>, %98, %cst_35 [1] : vector<256x128xf32> to vector<256xf32>
    %100 = vector.shape_cast %99 : vector<256xf32> to vector<256x1xf32>
    %cst_36 = arith.constant 1.000000e-30 : f32
    %101 = vector.broadcast %cst_36 : f32 to vector<256x1xf32>
    %102 = arith.maximumf %100, %101 : vector<256x1xf32>
    %103 = math.sqrt %102 : vector<256x1xf32>
    %cst_37 = arith.constant 1.000000e-30 : f32
    %104 = vector.broadcast %cst_37 : f32 to vector<256x1xf32>
    %105 = arith.maximumf %100, %104 : vector<256x1xf32>
    %106 = math.rsqrt %105 : vector<256x1xf32>
    %cst_38 = arith.constant 0.995999991 : f32
    %107 = vector.broadcast %cst_38 : f32 to vector<256x1xf32>
    %108 = arith.cmpf ogt, %103, %107 : vector<256x1xf32>
    %cst_39 = arith.constant 0.995999991 : f32
    %109 = vector.broadcast %cst_39 : f32 to vector<256x1xf32>
    %110 = arith.mulf %109, %106 : vector<256x1xf32>
    %111 = vector.broadcast %110 : vector<256x1xf32> to vector<256x128xf32>
    %112 = arith.mulf %111, %97 : vector<256x128xf32>
    %113 = vector.shape_cast %108 : vector<256x1xi1> to vector<256x1xi1>
    %114 = vector.broadcast %113 : vector<256x1xi1> to vector<256x128xi1>
    %115 = arith.select %114, %112, %97 : vector<256x128xi1>, vector<256x128xf32>
    %cst_40 = arith.constant 0.995999991 : f32
    %116 = vector.broadcast %cst_40 : f32 to vector<256x1xf32>
    %117 = arith.minimumf %103, %116 : vector<256x1xf32>
    %cst_41 = arith.constant 1.000000e+00 : f32
    %118 = vector.broadcast %cst_41 : f32 to vector<256x1xf32>
    %119 = arith.mulf %118, %117 : vector<256x1xf32>
    %cst_42 = arith.constant -0.99999988 : f32
    %cst_43 = arith.constant 0.99999988 : f32
    %120 = vector.broadcast %cst_42 : f32 to vector<256x1xf32>
    %121 = arith.maximumf %120, %119 : vector<256x1xf32>
    %122 = vector.broadcast %cst_43 : f32 to vector<256x1xf32>
    %123 = arith.minimumf %122, %121 : vector<256x1xf32>
    %cst_44 = arith.constant 1.000000e+00 : f32
    %124 = vector.broadcast %cst_44 : f32 to vector<256x1xf32>
    %125 = arith.addf %124, %123 : vector<256x1xf32>
    %cst_45 = arith.constant 1.000000e+00 : f32
    %126 = vector.broadcast %cst_45 : f32 to vector<256x1xf32>
    %127 = arith.subf %126, %123 : vector<256x1xf32>
    %128 = arith.divf %125, %127 : vector<256x1xf32>
    %129 = math.log %128 : vector<256x1xf32>
    %cst_46 = arith.constant 5.000000e-01 : f32
    %130 = vector.broadcast %cst_46 : f32 to vector<256x1xf32>
    %131 = arith.mulf %130, %129 : vector<256x1xf32>
    %cst_47 = arith.constant 1.000000e+00 : f32
    %132 = vector.broadcast %cst_47 : f32 to vector<256x1xf32>
    %133 = arith.mulf %132, %117 : vector<256x1xf32>
    %134 = arith.divf %131, %133 : vector<256x1xf32>
    %135 = vector.broadcast %134 : vector<256x1xf32> to vector<256x128xf32>
    %136 = arith.mulf %135, %115 : vector<256x128xf32>
    %c0_48 = arith.constant 0 : index
    %c0_49 = arith.constant 0 : index
    %137 = vector.load %arg4[%c0_48, %c0_49] : memref<256x128xf32, #tpu.memory_space<vmem>>, vector<256x128xf32>
    tpu.vector_store %arg4[%c0_48, %c0_49], %136 {strides = array<i32>} : memref<256x128xf32, #tpu.memory_space<vmem>>, vector<256x128xf32>,
    return
  }
  func.func @transform_0(%arg0: i32) -> (i32, i32) {
    %c0_i32 = arith.constant 0 : i32
    %c0_i32_0 = arith.constant 0 : i32
    return %arg0, %c0_i32 : i32, i32
  }
  func.func @transform_1(%arg0: i32) -> (i32, i32) {
    %c0_i32 = arith.constant 0 : i32
    %c0_i32_0 = arith.constant 0 : i32
    %c0_i32_1 = arith.constant 0 : i32
    return %c0_i32, %c0_i32_0 : i32, i32
  }
  func.func @transform_2(%arg0: i32) -> (i32, i32) {
    %c0_i32 = arith.constant 0 : i32
    %c0_i32_0 = arith.constant 0 : i32
    %c0_i32_1 = arith.constant 0 : i32
    return %c0_i32, %c0_i32_0 : i32, i32
  }
  func.func @transform_3(%arg0: i32) -> (i32, i32) {
    %c0_i32 = arith.constant 0 : i32
    %c0_i32_0 = arith.constant 0 : i32
    return %arg0, %c0_i32 : i32, i32
  }
}

</mosaic_0001>

<llo_original>
// kernel: tpu_custom_call.1
$region0: #{tpu_custom_call.1}
  #allocation0 [shape = 'u32[]', space=smem, size = 0x4, offset = 0x4, fixed_abs, tag = 'smem constant byte address 0x4 - core index']
  #allocation1 [shape = 'u32[144,128]{1,0:T(1,128)}', space=vmem, size = 0x12000, scoped, tag = 'internal scratch']
  %s0 = inlined_call_operand.vmem [shape: f32[512,16], index: 0, kind: input, shape index: {}]
  %s1 = inlined_call_operand.vmem [shape: f32[16,128], index: 1, kind: input, shape index: {}]
  %s2 = inlined_call_operand.vmem [shape: f32[1,128], index: 2, kind: input, shape index: {}]
  %s3 = inlined_call_operand.hbm [shape: f32[512,128], index: 3, kind: output, shape index: {}]
  %s4 = sld [smem:[#allocation0]]
  $region45: #{tpu_custom_call.1} parent=0
    _
  %s6 = ssub.s32 1, %s4
  %s7 = scalar_select 0, %s6, %s4
  $region1: #{tpu_custom_call.1} parent=0
    #allocation2 [shape = 'u8[262144]{0}', space=vmem, size = 0x40000, scoped, tag = 'output window, operand 0']
    #allocation3 [shape = 's32[2]{0}', space=sflag, size = 0x8, scoped, tag = 'scoped memory for tpu_custom_call.1']
    %8 = vsyncpa [#allocation3], 0
    %s9 = scalar_lea.sflag [#allocation3], 1
    %10 = vsyncpa %s9, 0
    loop: start=0, step=1, limit=4
    $region2: #{tpu_custom_call.1} parent=1 // loop_pre_header
      _
    $region3: #{tpu_custom_call.1} parent=1 // loop_header
      %s12 = sphi 0, %s16
      %p13 = scmp.ge.s32.totalorder %s12, 4
      %s22 = sphi 0, %s24
      %s25 = sphi 0, %s22
      %s26 = sphi 0, %s25
      %s42 = sphi 0, %s26
      %s46 = sphi 0, %s46
      %s48 = sphi 0, %s46
      %s49 = sphi 0, %s48
      %s63 = sphi 0, %s49
      %s67 = sphi 0, %s67
      %s69 = sphi 0, %s67
      %s70 = sphi 0, %s69
      %s84 = sphi 0, %s70
      %s90 = sphi 0, %s92
      %s93 = sphi 0, %s90
      %s94 = sphi 0, %s93
      %s110 = sphi 0, %s94
    $region4: #{tpu_custom_call.1} parent=1 // loop_header_branch
      %15 = sbr.rel (%p13) target = $region8
    $region5: #{tpu_custom_call.1} parent=1 // loop_body
      %s17 = ssub.s32 %s12, 1
      %s18 = ssub.s32 %s12, 2
      %s19 = sadd.s32 %s12, 1
      %s20 = ssub.s32 %s12, %s19
      %p21 = scmp.eq.s32.totalorder %s20, 0
      %s23 = sadd.s32 %s22, 1
      %s24 = scalar_select %p21, %s22, %s23
      %p27 = pneg %p21
      %p28 = scmp.eq.s32.totalorder %s12, 1
      %p29 = por %p27, %p28
      %p30 = scmp.ne.s32.totalorder %s22, %s25
      %p31 = scmp.eq.s32.totalorder %s12, 0
      %p32 = por %p30, %p31
      %p33 = scmp.ne.s32.totalorder %s22, %s25
      %p34 = scmp.eq.s32.totalorder %s17, 1
      %p35 = por %p33, %p34
      %p36 = scmp.ne.s32.totalorder %s25, %s26
      %p37 = scmp.eq.s32.totalorder %s17, 0
      %p38 = por %p36, %p37
      %p39 = scmp.ne.s32.totalorder %s25, %s26
      %p40 = scmp.eq.s32.totalorder %s18, 1
      %p41 = por %p39, %p40
      %p43 = scmp.ne.s32.totalorder %s26, %s42
      %p44 = scmp.eq.s32.totalorder %s18, 0
      %p45 = por %p43, %p44
      %s47 = sadd.s32 %s46, 1
      %p50 = scmp.eq.s32.totalorder %s12, 1
      %p51 = scmp.ne.s32.totalorder %s46, %s48
      %p52 = scmp.eq.s32.totalorder %s12, 0
      %p53 = por %p51, %p52
      %p54 = scmp.ne.s32.totalorder %s46, %s48
      %p55 = scmp.eq.s32.totalorder %s17, 1
      %p56 = por %p54, %p55
      %p57 = scmp.ne.s32.totalorder %s48, %s49
      %p58 = scmp.eq.s32.totalorder %s17, 0
      %p59 = por %p57, %p58
      %p60 = scmp.ne.s32.totalorder %s48, %s49
      %p61 = scmp.eq.s32.totalorder %s18, 1
      %p62 = por %p60, %p61
      %p64 = scmp.ne.s32.totalorder %s49, %s63
      %p65 = scmp.eq.s32.totalorder %s18, 0
      %p66 = por %p64, %p65
      %s68 = sadd.s32 %s67, 1
      %p71 = scmp.eq.s32.totalorder %s12, 1
      %p72 = scmp.ne.s32.totalorder %s67, %s69
      %p73 = scmp.eq.s32.totalorder %s12, 0
      %p74 = por %p72, %p73
      %p75 = scmp.ne.s32.totalorder %s67, %s69
      %p76 = scmp.eq.s32.totalorder %s17, 1
      %p77 = por %p75, %p76
      %p78 = scmp.ne.s32.totalorder %s69, %s70
      %p79 = scmp.eq.s32.totalorder %s17, 0
      %p80 = por %p78, %p79
      %p81 = scmp.ne.s32.totalorder %s69, %s70
      %p82 = scmp.eq.s32.totalorder %s18, 1
      %p83 = por %p81, %p82
      %p85 = scmp.ne.s32.totalorder %s70, %s84
      %p86 = scmp.eq.s32.totalorder %s18, 0
      %p87 = por %p85, %p86
      %s88 = ssub.s32 %s12, %s19
      %p89 = scmp.eq.s32.totalorder %s88, 0
      %s91 = sadd.s32 %s90, 1
      %s92 = scalar_select %p89, %s90, %s91
      %p95 = pneg %p89
      %p96 = scmp.eq.s32.totalorder %s12, 1
      %p97 = por %p95, %p96
      %p98 = scmp.ne.s32.totalorder %s90, %s93
      %p99 = scmp.eq.s32.totalorder %s12, 0
      %p100 = por %p98, %p99
      %p101 = scmp.ne.s32.totalorder %s90, %s93
      %p102 = scmp.eq.s32.totalorder %s17, 1
      %p103 = por %p101, %p102
      %p104 = scmp.ne.s32.totalorder %s93, %s94
      %p105 = scmp.eq.s32.totalorder %s17, 0
      %p106 = por %p104, %p105
      %p107 = scmp.ne.s32.totalorder %s93, %s94
      %p108 = scmp.eq.s32.totalorder %s18, 1
      %p109 = por %p107, %p108
      %p111 = scmp.ne.s32.totalorder %s94, %s110
      %p112 = scmp.eq.s32.totalorder %s18, 0
      %p113 = por %p111, %p112
      %p114 = scmp.le.s32.totalorder 1, %s12
      %p115 = scmp.lt.s32.totalorder %s12, 3
      %p116 = pnand %p114, %p115
      %p117 = pneg %p116
      // Predicated region
      $region9: #{tpu_custom_call.1} parent=5 // pred_check
        _
      $region10: #{tpu_custom_call.1} parent=5 // pred_check_branch
        %119 = sbr.rel (%p116) target = $region12
      $region11: #{tpu_custom_call.1} parent=5 // pred_region
        %s120 = ssub.s32 %s12, 1
        // Predicated region
        $region13: #{tpu_custom_call.1} parent=11 // pred_check
          %p121 = pneg %p59
        $region14: #{tpu_custom_call.1} parent=11 // pred_check_branch
          %123 = sbr.rel (%p121) target = $region16
        $region15: #{tpu_custom_call.1} parent=11 // pred_region
          _
        $region16: #{tpu_custom_call.1} parent=11 // pred_fallthru
          _
        // Predicated region
        $region17: #{tpu_custom_call.1} parent=11 // pred_check
          %p124 = pneg %p80
        $region18: #{tpu_custom_call.1} parent=11 // pred_check_branch
          %126 = sbr.rel (%p124) target = $region20
        $region19: #{tpu_custom_call.1} parent=11 // pred_region
          _
        $region20: #{tpu_custom_call.1} parent=11 // pred_fallthru
          _
      $region12: #{tpu_custom_call.1} parent=5 // pred_fallthru
        _
      %p127 = scmp.lt.s32.totalorder %s12, 2
      // Predicated region
      $region21: #{tpu_custom_call.1} parent=5 // pred_check
        %p128 = pneg %p127
      $region22: #{tpu_custom_call.1} parent=5 // pred_check_branch
        %130 = sbr.rel (%p128) target = $region24
      $region23: #{tpu_custom_call.1} parent=5 // pred_region
        // Predicated region
        $region25: #{tpu_custom_call.1} parent=23 // pred_check
          %p131 = pneg %p32
        $region26: #{tpu_custom_call.1} parent=23 // pred_check_branch
          %133 = sbr.rel (%p131) target = $region28
        $region27: #{tpu_custom_call.1} parent=23 // pred_region
          %s134 = smul.u32 32, %s12
          %p135 = scmp.lt.s32.totalorder %s134, 63
          %s136 = scalar_select %p135, %s134, 63
          %s137 = smul.addr %s136, 8
          %s138 = scalar_lea.vmem %s0, %s137
          %s139 = smul.u32 32, %s12
        $region28: #{tpu_custom_call.1} parent=23 // pred_fallthru
          _
      $region24: #{tpu_custom_call.1} parent=5 // pred_fallthru
        _
      %p140 = scmp.le.s32.totalorder 1, %s12
      %p141 = scmp.lt.s32.totalorder %s12, 3
      %p142 = pnand %p140, %p141
      %p143 = pneg %p142
      // Predicated region
      $region29: #{tpu_custom_call.1} parent=5 // pred_check
        _
      $region30: #{tpu_custom_call.1} parent=5 // pred_check_branch
        %145 = sbr.rel (%p142) target = $region32
      $region31: #{tpu_custom_call.1} parent=5 // pred_region
        %s146 = ssub.s32 %s12, 1
        %s147 = smul.u32 32, %s17
        %p148 = scmp.lt.s32.totalorder %s147, 63
        %s149 = scalar_select %p148, %s147, 63
        %s150 = smul.addr %s149, 8
        %s151 = scalar_lea.vmem %s0, %s150
        %p152 = pneg %p38
        %p153 = pneg %p35
        %p154 = pneg %p59
        %p155 = pneg %p56
        %p156 = pneg %p80
        %p157 = pneg %p77
        %p158 = pneg %p106
        %p159 = pneg %p103
        %s160 = sand.u32 %s93, 1
        %s161 = scalar_lea.sflag [#allocation3], %s160
        %s162 = sand.u32 %s93, 1
        %s163 = smul.addr %s162, 256
        %s164 = scalar_lea.vmem [#allocation2], %s163
        %s165 = smul.u32 32, %s17
        %p166 = scmp.lt.s32.totalorder %s165, 63
        %s167 = scalar_select %p166, %s165, 63
        %s168 = smul.addr %s167, 8
        %s169 = scalar_lea.vmem %s0, %s168
        %s170 = smul.u32 32, %s17
        %s171 = smul.u32 32, %s17
        %v172 = vld [vmem:[%s169] sm:$0xff]
        %v173 = vld [vmem:[%s169 + $0x8] sm:$0xff]
        %v174 = vld [vmem:[%s169 + $0x10] sm:$0xff]
        %v175 = vld [vmem:[%s169 + $0x18] sm:$0xff]
        %v176 = vld [vmem:[%s169 + $0x20] sm:$0xff]
        %v177 = vld [vmem:[%s169 + $0x28] sm:$0xff]
        %v178 = vld [vmem:[%s169 + $0x30] sm:$0xff]
        %v179 = vld [vmem:[%s169 + $0x38] sm:$0xff]
        %v180 = vld [vmem:[%s169 + $0x40] sm:$0xff]
        %v181 = vld [vmem:[%s169 + $0x48] sm:$0xff]
        %v182 = vld [vmem:[%s169 + $0x50] sm:$0xff]
        %v183 = vld [vmem:[%s169 + $0x58] sm:$0xff]
        %v184 = vld [vmem:[%s169 + $0x60] sm:$0xff]
        %v185 = vld [vmem:[%s169 + $0x68] sm:$0xff]
        %v186 = vld [vmem:[%s169 + $0x70] sm:$0xff]
        %v187 = vld [vmem:[%s169 + $0x78] sm:$0xff]
        %v188 = vld [vmem:[%s169 + $0x80] sm:$0xff]
        %v189 = vld [vmem:[%s169 + $0x88] sm:$0xff]
        %v190 = vld [vmem:[%s169 + $0x90] sm:$0xff]
        %v191 = vld [vmem:[%s169 + $0x98] sm:$0xff]
        %v192 = vld [vmem:[%s169 + $0xa0] sm:$0xff]
        %v193 = vld [vmem:[%s169 + $0xa8] sm:$0xff]
        %v194 = vld [vmem:[%s169 + $0xb0] sm:$0xff]
        %v195 = vld [vmem:[%s169 + $0xb8] sm:$0xff]
        %v196 = vld [vmem:[%s169 + $0xc0] sm:$0xff]
        %v197 = vld [vmem:[%s169 + $0xc8] sm:$0xff]
        %v198 = vld [vmem:[%s169 + $0xd0] sm:$0xff]
        %v199 = vld [vmem:[%s169 + $0xd8] sm:$0xff]
        %v200 = vld [vmem:[%s169 + $0xe0] sm:$0xff]
        %v201 = vld [vmem:[%s169 + $0xe8] sm:$0xff]
        %v202 = vld [vmem:[%s169 + $0xf0] sm:$0xff]
        %v203 = vld [vmem:[%s169 + $0xf8] sm:$0xff]
        %v204 = vld [vmem:[%s1] sm:$0xff]
        %v205 = vld [vmem:[%s1 + $0x8] sm:$0xff]
        %v206 = vld [vmem:[%s2] sm:$0x1]
        %v207 = vmul.f32 %v172, %v172
        %v208 = vmul.f32 %v173, %v173
        %v209 = vmul.f32 %v174, %v174
        %v210 = vmul.f32 %v175, %v175
        %v211 = vmul.f32 %v176, %v176
        %v212 = vmul.f32 %v177, %v177
        %v213 = vmul.f32 %v178, %v178
        %v214 = vmul.f32 %v179, %v179
        %v215 = vmul.f32 %v180, %v180
        %v216 = vmul.f32 %v181, %v181
        %v217 = vmul.f32 %v182, %v182
        %v218 = vmul.f32 %v183, %v183
        %v219 = vmul.f32 %v184, %v184
        %v220 = vmul.f32 %v185, %v185
        %v221 = vmul.f32 %v186, %v186
        %v222 = vmul.f32 %v187, %v187
        %v223 = vmul.f32 %v188, %v188
        %v224 = vmul.f32 %v189, %v189
        %v225 = vmul.f32 %v190, %v190
        %v226 = vmul.f32 %v191, %v191
        %v227 = vmul.f32 %v192, %v192
        %v228 = vmul.f32 %v193, %v193
        %v229 = vmul.f32 %v194, %v194
        %v230 = vmul.f32 %v195, %v195
        %v231 = vmul.f32 %v196, %v196
        %v232 = vmul.f32 %v197, %v197
        %v233 = vmul.f32 %v198, %v198
        %v234 = vmul.f32 %v199, %v199
        %v235 = vmul.f32 %v200, %v200
        %v236 = vmul.f32 %v201, %v201
        %v237 = vmul.f32 %v202, %v202
        %v238 = vmul.f32 %v203, %v203
        %vm239 = vcmask 130048
        %v240 = vsel %vm239, %v207, 0.0
        %241 = vadd.xlane.f32.xlu0 %v240
        %v242 = vpop.xlane.xlu0 %241
        %v243 = vsel %vm239, %v208, 0.0
        %244 = vadd.xlane.f32.xlu0 %v243
        %v245 = vpop.xlane.xlu0 %244
        %v246 = vsel %vm239, %v209, 0.0
        %247 = vadd.xlane.f32.xlu0 %v246
        %v248 = vpop.xlane.xlu0 %247
        %v249 = vsel %vm239, %v210, 0.0
        %250 = vadd.xlane.f32.xlu0 %v249
        %v251 = vpop.xlane.xlu0 %250
        %v252 = vsel %vm239, %v211, 0.0
        %253 = vadd.xlane.f32.xlu0 %v252
        %v254 = vpop.xlane.xlu0 %253
        %v255 = vsel %vm239, %v212, 0.0
        %256 = vadd.xlane.f32.xlu0 %v255
        %v257 = vpop.xlane.xlu0 %256
        %v258 = vsel %vm239, %v213, 0.0
        %259 = vadd.xlane.f32.xlu0 %v258
        %v260 = vpop.xlane.xlu0 %259
        %v261 = vsel %vm239, %v214, 0.0
        %262 = vadd.xlane.f32.xlu0 %v261
        %v263 = vpop.xlane.xlu0 %262
        %v264 = vsel %vm239, %v215, 0.0
        %265 = vadd.xlane.f32.xlu0 %v264
        %v266 = vpop.xlane.xlu0 %265
        %v267 = vsel %vm239, %v216, 0.0
        %268 = vadd.xlane.f32.xlu0 %v267
        %v269 = vpop.xlane.xlu0 %268
        %v270 = vsel %vm239, %v217, 0.0
        %271 = vadd.xlane.f32.xlu0 %v270
        %v272 = vpop.xlane.xlu0 %271
        %v273 = vsel %vm239, %v218, 0.0
        %274 = vadd.xlane.f32.xlu0 %v273
        %v275 = vpop.xlane.xlu0 %274
        %v276 = vsel %vm239, %v219, 0.0
        %277 = vadd.xlane.f32.xlu0 %v276
        %v278 = vpop.xlane.xlu0 %277
        %v279 = vsel %vm239, %v220, 0.0
        %280 = vadd.xlane.f32.xlu0 %v279
        %v281 = vpop.xlane.xlu0 %280
        %v282 = vsel %vm239, %v221, 0.0
        %283 = vadd.xlane.f32.xlu0 %v282
        %v284 = vpop.xlane.xlu0 %283
        %v285 = vsel %vm239, %v222, 0.0
        %286 = vadd.xlane.f32.xlu0 %v285
        %v287 = vpop.xlane.xlu0 %286
        %v288 = vsel %vm239, %v223, 0.0
        %289 = vadd.xlane.f32.xlu0 %v288
        %v290 = vpop.xlane.xlu0 %289
        %v291 = vsel %vm239, %v224, 0.0
        %292 = vadd.xlane.f32.xlu0 %v291
        %v293 = vpop.xlane.xlu0 %292
        %v294 = vsel %vm239, %v225, 0.0
        %295 = vadd.xlane.f32.xlu0 %v294
        %v296 = vpop.xlane.xlu0 %295
        %v297 = vsel %vm239, %v226, 0.0
        %298 = vadd.xlane.f32.xlu0 %v297
        %v299 = vpop.xlane.xlu0 %298
        %v300 = vsel %vm239, %v227, 0.0
        %301 = vadd.xlane.f32.xlu0 %v300
        %v302 = vpop.xlane.xlu0 %301
        %v303 = vsel %vm239, %v228, 0.0
        %304 = vadd.xlane.f32.xlu0 %v303
        %v305 = vpop.xlane.xlu0 %304
        %v306 = vsel %vm239, %v229, 0.0
        %307 = vadd.xlane.f32.xlu0 %v306
        %v308 = vpop.xlane.xlu0 %307
        %v309 = vsel %vm239, %v230, 0.0
        %310 = vadd.xlane.f32.xlu0 %v309
        %v311 = vpop.xlane.xlu0 %310
        %v312 = vsel %vm239, %v231, 0.0
        %313 = vadd.xlane.f32.xlu0 %v312
        %v314 = vpop.xlane.xlu0 %313
        %v315 = vsel %vm239, %v232, 0.0
        %316 = vadd.xlane.f32.xlu0 %v315
        %v317 = vpop.xlane.xlu0 %316
        %v318 = vsel %vm239, %v233, 0.0
        %319 = vadd.xlane.f32.xlu0 %v318
        %v320 = vpop.xlane.xlu0 %319
        %v321 = vsel %vm239, %v234, 0.0
        %322 = vadd.xlane.f32.xlu0 %v321
        %v323 = vpop.xlane.xlu0 %322
        %v324 = vsel %vm239, %v235, 0.0
        %325 = vadd.xlane.f32.xlu0 %v324
        %v326 = vpop.xlane.xlu0 %325
        %v327 = vsel %vm239, %v236, 0.0
        %328 = vadd.xlane.f32.xlu0 %v327
        %v329 = vpop.xlane.xlu0 %328
        %v330 = vsel %vm239, %v237, 0.0
        %331 = vadd.xlane.f32.xlu0 %v330
        %v332 = vpop.xlane.xlu0 %331
        %v333 = vsel %vm239, %v238, 0.0
        %334 = vadd.xlane.f32.xlu0 %v333
        %v335 = vpop.xlane.xlu0 %334
        %v336 = vmax.f32 %v242, 1e-30
        %v337 = vmax.f32 %v245, 1e-30
        %v338 = vmax.f32 %v248, 1e-30
        %v339 = vmax.f32 %v251, 1e-30
        %v340 = vmax.f32 %v254, 1e-30
        %v341 = vmax.f32 %v257, 1e-30
        %v342 = vmax.f32 %v260, 1e-30
        %v343 = vmax.f32 %v263, 1e-30
        %v344 = vmax.f32 %v266, 1e-30
        %v345 = vmax.f32 %v269, 1e-30
        %v346 = vmax.f32 %v272, 1e-30
        %v347 = vmax.f32 %v275, 1e-30
        %v348 = vmax.f32 %v278, 1e-30
        %v349 = vmax.f32 %v281, 1e-30
        %v350 = vmax.f32 %v284, 1e-30
        %v351 = vmax.f32 %v287, 1e-30
        %v352 = vmax.f32 %v290, 1e-30
        %v353 = vmax.f32 %v293, 1e-30
        %v354 = vmax.f32 %v296, 1e-30
        %v355 = vmax.f32 %v299, 1e-30
        %v356 = vmax.f32 %v302, 1e-30
        %v357 = vmax.f32 %v305, 1e-30
        %v358 = vmax.f32 %v308, 1e-30
        %v359 = vmax.f32 %v311, 1e-30
        %v360 = vmax.f32 %v314, 1e-30
        %v361 = vmax.f32 %v317, 1e-30
        %v362 = vmax.f32 %v320, 1e-30
        %v363 = vmax.f32 %v323, 1e-30
        %v364 = vmax.f32 %v326, 1e-30
        %v365 = vmax.f32 %v329, 1e-30
        %v366 = vmax.f32 %v332, 1e-30
        %v367 = vmax.f32 %v335, 1e-30
        %v368 = vrsqrt.pop %v336
        %v369 = vmul.f32 %v336, %v368
        %vm370 = vcmp.eq.f32.partialorder %v336, inf
        %v371 = vsel %vm370, %v336, %v369
        %vm372 = vcmp.eq.f32.partialorder %v336, 0.0
        %v373 = vand.u32 %v336, 2147483648
        %v374 = vsel %vm372, %v373, %v371
        %v375 = vrsqrt.pop %v337
        %v376 = vmul.f32 %v337, %v375
        %vm377 = vcmp.eq.f32.partialorder %v337, inf
        %v378 = vsel %vm377, %v337, %v376
        %vm379 = vcmp.eq.f32.partialorder %v337, 0.0
        %v380 = vand.u32 %v337, 2147483648
        %v381 = vsel %vm379, %v380, %v378
        %v382 = vrsqrt.pop %v338
        %v383 = vmul.f32 %v338, %v382
        %vm384 = vcmp.eq.f32.partialorder %v338, inf
        %v385 = vsel %vm384, %v338, %v383
        %vm386 = vcmp.eq.f32.partialorder %v338, 0.0
        %v387 = vand.u32 %v338, 2147483648
        %v388 = vsel %vm386, %v387, %v385
        %v389 = vrsqrt.pop %v339
        %v390 = vmul.f32 %v339, %v389
        %vm391 = vcmp.eq.f32.partialorder %v339, inf
        %v392 = vsel %vm391, %v339, %v390
        %vm393 = vcmp.eq.f32.partialorder %v339, 0.0
        %v394 = vand.u32 %v339, 2147483648
        %v395 = vsel %vm393, %v394, %v392
        %v396 = vrsqrt.pop %v340
        %v397 = vmul.f32 %v340, %v396
        %vm398 = vcmp.eq.f32.partialorder %v340, inf
        %v399 = vsel %vm398, %v340, %v397
        %vm400 = vcmp.eq.f32.partialorder %v340, 0.0
        %v401 = vand.u32 %v340, 2147483648
        %v402 = vsel %vm400, %v401, %v399
        %v403 = vrsqrt.pop %v341
        %v404 = vmul.f32 %v341, %v403
        %vm405 = vcmp.eq.f32.partialorder %v341, inf
        %v406 = vsel %vm405, %v341, %v404
        %vm407 = vcmp.eq.f32.partialorder %v341, 0.0
        %v408 = vand.u32 %v341, 2147483648
        %v409 = vsel %vm407, %v408, %v406
        %v410 = vrsqrt.pop %v342
        %v411 = vmul.f32 %v342, %v410
        %vm412 = vcmp.eq.f32.partialorder %v342, inf
        %v413 = vsel %vm412, %v342, %v411
        %vm414 = vcmp.eq.f32.partialorder %v342, 0.0
        %v415 = vand.u32 %v342, 2147483648
        %v416 = vsel %vm414, %v415, %v413
        %v417 = vrsqrt.pop %v343
        %v418 = vmul.f32 %v343, %v417
        %vm419 = vcmp.eq.f32.partialorder %v343, inf
        %v420 = vsel %vm419, %v343, %v418
        %vm421 = vcmp.eq.f32.partialorder %v343, 0.0
        %v422 = vand.u32 %v343, 2147483648
        %v423 = vsel %vm421, %v422, %v420
        %v424 = vrsqrt.pop %v344
        %v425 = vmul.f32 %v344, %v424
        %vm426 = vcmp.eq.f32.partialorder %v344, inf
        %v427 = vsel %vm426, %v344, %v425
        %vm428 = vcmp.eq.f32.partialorder %v344, 0.0
        %v429 = vand.u32 %v344, 2147483648
        %v430 = vsel %vm428, %v429, %v427
        %v431 = vrsqrt.pop %v345
        %v432 = vmul.f32 %v345, %v431
        %vm433 = vcmp.eq.f32.partialorder %v345, inf
        %v434 = vsel %vm433, %v345, %v432
        %vm435 = vcmp.eq.f32.partialorder %v345, 0.0
        %v436 = vand.u32 %v345, 2147483648
        %v437 = vsel %vm435, %v436, %v434
        %v438 = vrsqrt.pop %v346
        %v439 = vmul.f32 %v346, %v438
        %vm440 = vcmp.eq.f32.partialorder %v346, inf
        %v441 = vsel %vm440, %v346, %v439
        %vm442 = vcmp.eq.f32.partialorder %v346, 0.0
        %v443 = vand.u32 %v346, 2147483648
        %v444 = vsel %vm442, %v443, %v441
        %v445 = vrsqrt.pop %v347
        %v446 = vmul.f32 %v347, %v445
        %vm447 = vcmp.eq.f32.partialorder %v347, inf
        %v448 = vsel %vm447, %v347, %v446
        %vm449 = vcmp.eq.f32.partialorder %v347, 0.0
        %v450 = vand.u32 %v347, 2147483648
        %v451 = vsel %vm449, %v450, %v448
        %v452 = vrsqrt.pop %v348
        %v453 = vmul.f32 %v348, %v452
        %vm454 = vcmp.eq.f32.partialorder %v348, inf
        %v455 = vsel %vm454, %v348, %v453
        %vm456 = vcmp.eq.f32.partialorder %v348, 0.0
        %v457 = vand.u32 %v348, 2147483648
        %v458 = vsel %vm456, %v457, %v455
        %v459 = vrsqrt.pop %v349
        %v460 = vmul.f32 %v349, %v459
        %vm461 = vcmp.eq.f32.partialorder %v349, inf
        %v462 = vsel %vm461, %v349, %v460
        %vm463 = vcmp.eq.f32.partialorder %v349, 0.0
        %v464 = vand.u32 %v349, 2147483648
        %v465 = vsel %vm463, %v464, %v462
        %v466 = vrsqrt.pop %v350
        %v467 = vmul.f32 %v350, %v466
        %vm468 = vcmp.eq.f32.partialorder %v350, inf
        %v469 = vsel %vm468, %v350, %v467
        %vm470 = vcmp.eq.f32.partialorder %v350, 0.0
        %v471 = vand.u32 %v350, 2147483648
        %v472 = vsel %vm470, %v471, %v469
        %v473 = vrsqrt.pop %v351
        %v474 = vmul.f32 %v351, %v473
        %vm475 = vcmp.eq.f32.partialorder %v351, inf
        %v476 = vsel %vm475, %v351, %v474
        %vm477 = vcmp.eq.f32.partialorder %v351, 0.0
        %v478 = vand.u32 %v351, 2147483648
        %v479 = vsel %vm477, %v478, %v476
        %v480 = vrsqrt.pop %v352
        %v481 = vmul.f32 %v352, %v480
        %vm482 = vcmp.eq.f32.partialorder %v352, inf
        %v483 = vsel %vm482, %v352, %v481
        %vm484 = vcmp.eq.f32.partialorder %v352, 0.0
        %v485 = vand.u32 %v352, 2147483648
        %v486 = vsel %vm484, %v485, %v483
        %v487 = vrsqrt.pop %v353
        %v488 = vmul.f32 %v353, %v487
        %vm489 = vcmp.eq.f32.partialorder %v353, inf
        %v490 = vsel %vm489, %v353, %v488
        %vm491 = vcmp.eq.f32.partialorder %v353, 0.0
        %v492 = vand.u32 %v353, 2147483648
        %v493 = vsel %vm491, %v492, %v490
        %v494 = vrsqrt.pop %v354
        %v495 = vmul.f32 %v354, %v494
        %vm496 = vcmp.eq.f32.partialorder %v354, inf
        %v497 = vsel %vm496, %v354, %v495
        %vm498 = vcmp.eq.f32.partialorder %v354, 0.0
        %v499 = vand.u32 %v354, 2147483648
        %v500 = vsel %vm498, %v499, %v497
        %v501 = vrsqrt.pop %v355
        %v502 = vmul.f32 %v355, %v501
        %vm503 = vcmp.eq.f32.partialorder %v355, inf
        %v504 = vsel %vm503, %v355, %v502
        %vm505 = vcmp.eq.f32.partialorder %v355, 0.0
        %v506 = vand.u32 %v355, 2147483648
        %v507 = vsel %vm505, %v506, %v504
        %v508 = vrsqrt.pop %v356
        %v509 = vmul.f32 %v356, %v508
        %vm510 = vcmp.eq.f32.partialorder %v356, inf
        %v511 = vsel %vm510, %v356, %v509
        %vm512 = vcmp.eq.f32.partialorder %v356, 0.0
        %v513 = vand.u32 %v356, 2147483648
        %v514 = vsel %vm512, %v513, %v511
        %v515 = vrsqrt.pop %v357
        %v516 = vmul.f32 %v357, %v515
        %vm517 = vcmp.eq.f32.partialorder %v357, inf
        %v518 = vsel %vm517, %v357, %v516
        %vm519 = vcmp.eq.f32.partialorder %v357, 0.0
        %v520 = vand.u32 %v357, 2147483648
        %v521 = vsel %vm519, %v520, %v518
        %v522 = vrsqrt.pop %v358
        %v523 = vmul.f32 %v358, %v522
        %vm524 = vcmp.eq.f32.partialorder %v358, inf
        %v525 = vsel %vm524, %v358, %v523
        %vm526 = vcmp.eq.f32.partialorder %v358, 0.0
        %v527 = vand.u32 %v358, 2147483648
        %v528 = vsel %vm526, %v527, %v525
        %v529 = vrsqrt.pop %v359
        %v530 = vmul.f32 %v359, %v529
        %vm531 = vcmp.eq.f32.partialorder %v359, inf
        %v532 = vsel %vm531, %v359, %v530
        %vm533 = vcmp.eq.f32.partialorder %v359, 0.0
        %v534 = vand.u32 %v359, 2147483648
        %v535 = vsel %vm533, %v534, %v532
        %v536 = vrsqrt.pop %v360
        %v537 = vmul.f32 %v360, %v536
        %vm538 = vcmp.eq.f32.partialorder %v360, inf
        %v539 = vsel %vm538, %v360, %v537
        %vm540 = vcmp.eq.f32.partialorder %v360, 0.0
        %v541 = vand.u32 %v360, 2147483648
        %v542 = vsel %vm540, %v541, %v539
        %v543 = vrsqrt.pop %v361
        %v544 = vmul.f32 %v361, %v543
        %vm545 = vcmp.eq.f32.partialorder %v361, inf
        %v546 = vsel %vm545, %v361, %v544
        %vm547 = vcmp.eq.f32.partialorder %v361, 0.0
        %v548 = vand.u32 %v361, 2147483648
        %v549 = vsel %vm547, %v548, %v546
        %v550 = vrsqrt.pop %v362
        %v551 = vmul.f32 %v362, %v550
        %vm552 = vcmp.eq.f32.partialorder %v362, inf
        %v553 = vsel %vm552, %v362, %v551
        %vm554 = vcmp.eq.f32.partialorder %v362, 0.0
        %v555 = vand.u32 %v362, 2147483648
        %v556 = vsel %vm554, %v555, %v553
        %v557 = vrsqrt.pop %v363
        %v558 = vmul.f32 %v363, %v557
        %vm559 = vcmp.eq.f32.partialorder %v363, inf
        %v560 = vsel %vm559, %v363, %v558
        %vm561 = vcmp.eq.f32.partialorder %v363, 0.0
        %v562 = vand.u32 %v363, 2147483648
        %v563 = vsel %vm561, %v562, %v560
        %v564 = vrsqrt.pop %v364
        %v565 = vmul.f32 %v364, %v564
        %vm566 = vcmp.eq.f32.partialorder %v364, inf
        %v567 = vsel %vm566, %v364, %v565
        %vm568 = vcmp.eq.f32.partialorder %v364, 0.0
        %v569 = vand.u32 %v364, 2147483648
        %v570 = vsel %vm568, %v569, %v567
        %v571 = vrsqrt.pop %v365
        %v572 = vmul.f32 %v365, %v571
        %vm573 = vcmp.eq.f32.partialorder %v365, inf
        %v574 = vsel %vm573, %v365, %v572
        %vm575 = vcmp.eq.f32.partialorder %v365, 0.0
        %v576 = vand.u32 %v365, 2147483648
        %v577 = vsel %vm575, %v576, %v574
        %v578 = vrsqrt.pop %v366
        %v579 = vmul.f32 %v366, %v578
        %vm580 = vcmp.eq.f32.partialorder %v366, inf
        %v581 = vsel %vm580, %v366, %v579
        %vm582 = vcmp.eq.f32.partialorder %v366, 0.0
        %v583 = vand.u32 %v366, 2147483648
        %v584 = vsel %vm582, %v583, %v581
        %v585 = vrsqrt.pop %v367
        %v586 = vmul.f32 %v367, %v585
        %vm587 = vcmp.eq.f32.partialorder %v367, inf
        %v588 = vsel %vm587, %v367, %v586
        %vm589 = vcmp.eq.f32.partialorder %v367, 0.0
        %v590 = vand.u32 %v367, 2147483648
        %v591 = vsel %vm589, %v590, %v588
        %v592 = vrsqrt.pop %v336
        %v593 = vrsqrt.pop %v337
        %v594 = vrsqrt.pop %v338
        %v595 = vrsqrt.pop %v339
        %v596 = vrsqrt.pop %v340
        %v597 = vrsqrt.pop %v341
        %v598 = vrsqrt.pop %v342
        %v599 = vrsqrt.pop %v343
        %v600 = vrsqrt.pop %v344
        %v601 = vrsqrt.pop %v345
        %v602 = vrsqrt.pop %v346
        %v603 = vrsqrt.pop %v347
        %v604 = vrsqrt.pop %v348
        %v605 = vrsqrt.pop %v349
        %v606 = vrsqrt.pop %v350
        %v607 = vrsqrt.pop %v351
        %v608 = vrsqrt.pop %v352
        %v609 = vrsqrt.pop %v353
        %v610 = vrsqrt.pop %v354
        %v611 = vrsqrt.pop %v355
        %v612 = vrsqrt.pop %v356
        %v613 = vrsqrt.pop %v357
        %v614 = vrsqrt.pop %v358
        %v615 = vrsqrt.pop %v359
        %v616 = vrsqrt.pop %v360
        %v617 = vrsqrt.pop %v361
        %v618 = vrsqrt.pop %v362
        %v619 = vrsqrt.pop %v363
        %v620 = vrsqrt.pop %v364
        %v621 = vrsqrt.pop %v365
        %v622 = vrsqrt.pop %v366
        %v623 = vrsqrt.pop %v367
        %v625 = vsel %vm239, %v172, 0
        %v628 = vsel %vm239, %v173, 0
        %v631 = vsel %vm239, %v174, 0
        %v634 = vsel %vm239, %v175, 0
        %v637 = vsel %vm239, %v176, 0
        %v640 = vsel %vm239, %v177, 0
        %v643 = vsel %vm239, %v178, 0
        %v646 = vsel %vm239, %v179, 0
        %v649 = vsel %vm239, %v180, 0
        %v652 = vsel %vm239, %v181, 0
        %v655 = vsel %vm239, %v182, 0
        %v658 = vsel %vm239, %v183, 0
        %v661 = vsel %vm239, %v184, 0
        %v664 = vsel %vm239, %v185, 0
        %v667 = vsel %vm239, %v186, 0
        %v670 = vsel %vm239, %v187, 0
        %v673 = vsel %vm239, %v188, 0
        %v676 = vsel %vm239, %v189, 0
        %v679 = vsel %vm239, %v190, 0
        %v682 = vsel %vm239, %v191, 0
        %v685 = vsel %vm239, %v192, 0
        %v688 = vsel %vm239, %v193, 0
        %v691 = vsel %vm239, %v194, 0
        %v694 = vsel %vm239, %v195, 0
        %v697 = vsel %vm239, %v196, 0
        %v700 = vsel %vm239, %v197, 0
        %v703 = vsel %vm239, %v198, 0
        %v706 = vsel %vm239, %v199, 0
        %v709 = vsel %vm239, %v200, 0
        %v712 = vsel %vm239, %v201, 0
        %v715 = vsel %vm239, %v202, 0
        %v718 = vsel %vm239, %v203, 0
        %720 = vmatprep.subr.mxu0 0.0
        %721 = vmatpush1.msra.mxu0 %v204
        %722 = vmatprep.subr.mxu0 0.0
        %723 = vmatpush1.msra.mxu0 %v205
        %724 = vmatprep.subr.mxu0 0.0
        %725 = vmatpush1.msra.mxu0 0.0
        %726 = vmatprep.subr.mxu0 0.0
        %727 = vmatpush1.msra.mxu0 0.0
        %728 = vmatprep.subr.mxu0 0.0
        %729 = vmatpush1.msra.mxu0 0.0
        %730 = vmatprep.subr.mxu0 0.0
        %731 = vmatpush1.msra.mxu0 0.0
        %732 = vmatprep.subr.mxu0 0.0
        %733 = vmatpush1.msra.mxu0 0.0
        %734 = vmatprep.subr.mxu0 0.0
        %735 = vmatpush1.msra.mxu0 0.0
        %736 = vmatprep.subr.mxu0 0.0
        %737 = vmatpush1.msra.mxu0 0.0
        %738 = vmatprep.subr.mxu0 0.0
        %739 = vmatpush1.msra.mxu0 0.0
        %740 = vmatprep.subr.mxu0 0.0
        %741 = vmatpush1.msra.mxu0 0.0
        %742 = vmatprep.subr.mxu0 0.0
        %743 = vmatpush1.msra.mxu0 0.0
        %744 = vmatprep.subr.mxu0 0.0
        %745 = vmatpush1.msra.mxu0 0.0
        %746 = vmatprep.subr.mxu0 0.0
        %747 = vmatpush1.msra.mxu0 0.0
        %748 = vmatprep.subr.mxu0 0.0
        %749 = vmatpush1.msra.mxu0 0.0
        %750 = vmatprep.subr.mxu0 0.0
        %751 = vmatpush1.msra.mxu0 0.0
        %752 = vmatprep.subr.mxu0 0.0
        %753 = vmatpush1.msra.mxu0 0.0
        %754 = vmatprep.subr.mxu0 0.0
        %755 = vmatpush1.msra.mxu0 0.0
        %756 = vmatprep.subr.mxu0 0.0
        %757 = vmatpush1.msra.mxu0 0.0
        %758 = vmatprep.subr.mxu0 0.0
        %759 = vmatpush1.msra.mxu0 0.0
        %760 = vmatprep.subr.mxu0 0.0
        %761 = vmatpush1.msra.mxu0 0.0
        %762 = vmatprep.subr.mxu0 0.0
        %763 = vmatpush1.msra.mxu0 0.0
        %764 = vmatprep.subr.mxu0 0.0
        %765 = vmatpush1.msra.mxu0 0.0
        %766 = vmatprep.subr.mxu0 0.0
        %767 = vmatpush1.msra.mxu0 0.0
        %768 = vmatprep.subr.mxu0 0.0
        %769 = vmatpush1.msra.mxu0 0.0
        %770 = vmatprep.subr.mxu0 0.0
        %771 = vmatpush1.msra.mxu0 0.0
        %772 = vmatprep.subr.mxu0 0.0
        %773 = vmatpush1.msra.mxu0 0.0
        %774 = vmatprep.subr.mxu0 0.0
        %775 = vmatpush1.msra.mxu0 0.0
        %776 = vmatprep.subr.mxu0 0.0
        %777 = vmatpush1.msra.mxu0 0.0
        %778 = vmatprep.subr.mxu0 0.0
        %779 = vmatpush1.msra.mxu0 0.0
        %780 = vmatprep.subr.mxu0 0.0
        %781 = vmatpush1.msra.mxu0 0.0
        %782 = vmatprep.subr.mxu0 0.0
        %783 = vmatpush1.msra.mxu0 0.0
        %784 = vmatprep.mubr.f32.mxu0 0.0
        %785 = vmatmul.mubr.f32.gmra.mrb[0].mxu0 %v625
        %v786 = vpop.f32.mrb[0].mxu0
        %v787 = vadd.f32 0.0, %v786
        %v788 = vpop.f32.mrb[0].mxu0
        %789 = vmatprep.mubr.f32.mxu0 0.0
        %790 = vmatmul.mubr.f32.gmra.mrb[0].mxu0 %v628
        %v791 = vpop.f32.mrb[0].mxu0
        %v792 = vadd.f32 0.0, %v791
        %v793 = vpop.f32.mrb[0].mxu0
        %794 = vmatprep.mubr.f32.mxu0 0.0
        %795 = vmatmul.mubr.f32.gmra.mrb[0].mxu0 %v631
        %v796 = vpop.f32.mrb[0].mxu0
        %v797 = vadd.f32 0.0, %v796
        %v798 = vpop.f32.mrb[0].mxu0
        %799 = vmatprep.mubr.f32.mxu0 0.0
        %800 = vmatmul.mubr.f32.gmra.mrb[0].mxu0 %v634
        %v801 = vpop.f32.mrb[0].mxu0
        %v802 = vadd.f32 0.0, %v801
        %v803 = vpop.f32.mrb[0].mxu0
        %804 = vmatprep.mubr.f32.mxu0 0.0
        %805 = vmatmul.mubr.f32.gmra.mrb[0].mxu0 %v637
        %v806 = vpop.f32.mrb[0].mxu0
        %v807 = vadd.f32 0.0, %v806
        %v808 = vpop.f32.mrb[0].mxu0
        %809 = vmatprep.mubr.f32.mxu0 0.0
        %810 = vmatmul.mubr.f32.gmra.mrb[0].mxu0 %v640
        %v811 = vpop.f32.mrb[0].mxu0
        %v812 = vadd.f32 0.0, %v811
        %v813 = vpop.f32.mrb[0].mxu0
        %814 = vmatprep.mubr.f32.mxu0 0.0
        %815 = vmatmul.mubr.f32.gmra.mrb[0].mxu0 %v643
        %v816 = vpop.f32.mrb[0].mxu0
        %v817 = vadd.f32 0.0, %v816
        %v818 = vpop.f32.mrb[0].mxu0
        %819 = vmatprep.mubr.f32.mxu0 0.0
        %820 = vmatmul.mubr.f32.gmra.mrb[0].mxu0 %v646
        %v821 = vpop.f32.mrb[0].mxu0
        %v822 = vadd.f32 0.0, %v821
        %v823 = vpop.f32.mrb[0].mxu0
        %824 = vmatprep.mubr.f32.mxu0 0.0
        %825 = vmatmul.mubr.f32.gmra.mrb[0].mxu0 %v649
        %v826 = vpop.f32.mrb[0].mxu0
        %v827 = vadd.f32 0.0, %v826
        %v828 = vpop.f32.mrb[0].mxu0
        %829 = vmatprep.mubr.f32.mxu0 0.0
        %830 = vmatmul.mubr.f32.gmra.mrb[0].mxu0 %v652
        %v831 = vpop.f32.mrb[0].mxu0
        %v832 = vadd.f32 0.0, %v831
        %v833 = vpop.f32.mrb[0].mxu0
        %834 = vmatprep.mubr.f32.mxu0 0.0
        %835 = vmatmul.mubr.f32.gmra.mrb[0].mxu0 %v655
        %v836 = vpop.f32.mrb[0].mxu0
        %v837 = vadd.f32 0.0, %v836
        %v838 = vpop.f32.mrb[0].mxu0
        %839 = vmatprep.mubr.f32.mxu0 0.0
        %840 = vmatmul.mubr.f32.gmra.mrb[0].mxu0 %v658
        %v841 = vpop.f32.mrb[0].mxu0
        %v842 = vadd.f32 0.0, %v841
        %v843 = vpop.f32.mrb[0].mxu0
        %844 = vmatprep.mubr.f32.mxu0 0.0
        %845 = vmatmul.mubr.f32.gmra.mrb[0].mxu0 %v661
        %v846 = vpop.f32.mrb[0].mxu0
        %v847 = vadd.f32 0.0, %v846
        %v848 = vpop.f32.mrb[0].mxu0
        %849 = vmatprep.mubr.f32.mxu0 0.0
        %850 = vmatmul.mubr.f32.gmra.mrb[0].mxu0 %v664
        %v851 = vpop.f32.mrb[0].mxu0
        %v852 = vadd.f32 0.0, %v851
        %v853 = vpop.f32.mrb[0].mxu0
        %854 = vmatprep.mubr.f32.mxu0 0.0
        %855 = vmatmul.mubr.f32.gmra.mrb[0].mxu0 %v667
        %v856 = vpop.f32.mrb[0].mxu0
        %v857 = vadd.f32 0.0, %v856
        %v858 = vpop.f32.mrb[0].mxu0
        %859 = vmatprep.mubr.f32.mxu0 0.0
        %860 = vmatmul.mubr.f32.gmra.mrb[0].mxu0 %v670
        %v861 = vpop.f32.mrb[0].mxu0
        %v862 = vadd.f32 0.0, %v861
        %v863 = vpop.f32.mrb[0].mxu0
        %864 = vmatprep.mubr.f32.mxu0 0.0
        %865 = vmatmul.mubr.f32.gmra.mrb[0].mxu0 %v673
        %v866 = vpop.f32.mrb[0].mxu0
        %v867 = vadd.f32 0.0, %v866
        %v868 = vpop.f32.mrb[0].mxu0
        %869 = vmatprep.mubr.f32.mxu0 0.0
        %870 = vmatmul.mubr.f32.gmra.mrb[0].mxu0 %v676
        %v871 = vpop.f32.mrb[0].mxu0
        %v872 = vadd.f32 0.0, %v871
        %v873 = vpop.f32.mrb[0].mxu0
        %874 = vmatprep.mubr.f32.mxu0 0.0
        %875 = vmatmul.mubr.f32.gmra.mrb[0].mxu0 %v679
        %v876 = vpop.f32.mrb[0].mxu0
        %v877 = vadd.f32 0.0, %v876
        %v878 = vpop.f32.mrb[0].mxu0
        %879 = vmatprep.mubr.f32.mxu0 0.0
        %880 = vmatmul.mubr.f32.gmra.mrb[0].mxu0 %v682
        %v881 = vpop.f32.mrb[0].mxu0
        %v882 = vadd.f32 0.0, %v881
        %v883 = vpop.f32.mrb[0].mxu0
        %884 = vmatprep.mubr.f32.mxu0 0.0
        %885 = vmatmul.mubr.f32.gmra.mrb[0].mxu0 %v685
        %v886 = vpop.f32.mrb[0].mxu0
        %v887 = vadd.f32 0.0, %v886
        %v888 = vpop.f32.mrb[0].mxu0
        %889 = vmatprep.mubr.f32.mxu0 0.0
        %890 = vmatmul.mubr.f32.gmra.mrb[0].mxu0 %v688
        %v891 = vpop.f32.mrb[0].mxu0
        %v892 = vadd.f32 0.0, %v891
        %v893 = vpop.f32.mrb[0].mxu0
        %894 = vmatprep.mubr.f32.mxu0 0.0
        %895 = vmatmul.mubr.f32.gmra.mrb[0].mxu0 %v691
        %v896 = vpop.f32.mrb[0].mxu0
        %v897 = vadd.f32 0.0, %v896
        %v898 = vpop.f32.mrb[0].mxu0
        %899 = vmatprep.mubr.f32.mxu0 0.0
        %900 = vmatmul.mubr.f32.gmra.mrb[0].mxu0 %v694
        %v901 = vpop.f32.mrb[0].mxu0
        %v902 = vadd.f32 0.0, %v901
        %v903 = vpop.f32.mrb[0].mxu0
        %904 = vmatprep.mubr.f32.mxu0 0.0
        %905 = vmatmul.mubr.f32.gmra.mrb[0].mxu0 %v697
        %v906 = vpop.f32.mrb[0].mxu0
        %v907 = vadd.f32 0.0, %v906
        %v908 = vpop.f32.mrb[0].mxu0
        %909 = vmatprep.mubr.f32.mxu0 0.0
        %910 = vmatmul.mubr.f32.gmra.mrb[0].mxu0 %v700
        %v911 = vpop.f32.mrb[0].mxu0
        %v912 = vadd.f32 0.0, %v911
        %v913 = vpop.f32.mrb[0].mxu0
        %914 = vmatprep.mubr.f32.mxu0 0.0
        %915 = vmatmul.mubr.f32.gmra.mrb[0].mxu0 %v703
        %v916 = vpop.f32.mrb[0].mxu0
        %v917 = vadd.f32 0.0, %v916
        %v918 = vpop.f32.mrb[0].mxu0
        %919 = vmatprep.mubr.f32.mxu0 0.0
        %920 = vmatmul.mubr.f32.gmra.mrb[0].mxu0 %v706
        %v921 = vpop.f32.mrb[0].mxu0
        %v922 = vadd.f32 0.0, %v921
        %v923 = vpop.f32.mrb[0].mxu0
        %924 = vmatprep.mubr.f32.mxu0 0.0
        %925 = vmatmul.mubr.f32.gmra.mrb[0].mxu0 %v709
        %v926 = vpop.f32.mrb[0].mxu0
        %v927 = vadd.f32 0.0, %v926
        %v928 = vpop.f32.mrb[0].mxu0
        %929 = vmatprep.mubr.f32.mxu0 0.0
        %930 = vmatmul.mubr.f32.gmra.mrb[0].mxu0 %v712
        %v931 = vpop.f32.mrb[0].mxu0
        %v932 = vadd.f32 0.0, %v931
        %v933 = vpop.f32.mrb[0].mxu0
        %934 = vmatprep.mubr.f32.mxu0 0.0
        %935 = vmatmul.mubr.f32.gmra.mrb[0].mxu0 %v715
        %v936 = vpop.f32.mrb[0].mxu0
        %v937 = vadd.f32 0.0, %v936
        %v938 = vpop.f32.mrb[0].mxu0
        %939 = vmatprep.mubr.f32.mxu0 0.0
        %940 = vmatmul.mubr.f32.gmra.mrb[0].mxu0 %v718
        %v941 = vpop.f32.mrb[0].mxu0
        %v942 = vadd.f32 0.0, %v941
        %v943 = vpop.f32.mrb[0].mxu0
        %944 = vdwg.mxu0
        %v945 = vmul.f32 %v787, %v787
        %v946 = vmul.f32 %v792, %v792
        %v947 = vmul.f32 %v797, %v797
        %v948 = vmul.f32 %v802, %v802
        %v949 = vmul.f32 %v807, %v807
        %v950 = vmul.f32 %v812, %v812
        %v951 = vmul.f32 %v817, %v817
        %v952 = vmul.f32 %v822, %v822
        %v953 = vmul.f32 %v827, %v827
        %v954 = vmul.f32 %v832, %v832
        %v955 = vmul.f32 %v837, %v837
        %v956 = vmul.f32 %v842, %v842
        %v957 = vmul.f32 %v847, %v847
        %v958 = vmul.f32 %v852, %v852
        %v959 = vmul.f32 %v857, %v857
        %v960 = vmul.f32 %v862, %v862
        %v961 = vmul.f32 %v867, %v867
        %v962 = vmul.f32 %v872, %v872
        %v963 = vmul.f32 %v877, %v877
        %v964 = vmul.f32 %v882, %v882
        %v965 = vmul.f32 %v887, %v887
        %v966 = vmul.f32 %v892, %v892
        %v967 = vmul.f32 %v897, %v897
        %v968 = vmul.f32 %v902, %v902
        %v969 = vmul.f32 %v907, %v907
        %v970 = vmul.f32 %v912, %v912
        %v971 = vmul.f32 %v917, %v917
        %v972 = vmul.f32 %v922, %v922
        %v973 = vmul.f32 %v927, %v927
        %v974 = vmul.f32 %v932, %v932
        %v975 = vmul.f32 %v937, %v937
        %v976 = vmul.f32 %v942, %v942
        %977 = vadd.xlane.f32.xlu0 %v945
        %v978 = vpop.xlane.xlu0 %977
        %979 = vadd.xlane.f32.xlu0 %v946
        %v980 = vpop.xlane.xlu0 %979
        %981 = vadd.xlane.f32.xlu0 %v947
        %v982 = vpop.xlane.xlu0 %981
        %983 = vadd.xlane.f32.xlu0 %v948
        %v984 = vpop.xlane.xlu0 %983
        %985 = vadd.xlane.f32.xlu0 %v949
        %v986 = vpop.xlane.xlu0 %985
        %987 = vadd.xlane.f32.xlu0 %v950
        %v988 = vpop.xlane.xlu0 %987
        %989 = vadd.xlane.f32.xlu0 %v951
        %v990 = vpop.xlane.xlu0 %989
        %991 = vadd.xlane.f32.xlu0 %v952
        %v992 = vpop.xlane.xlu0 %991
        %993 = vadd.xlane.f32.xlu0 %v953
        %v994 = vpop.xlane.xlu0 %993
        %995 = vadd.xlane.f32.xlu0 %v954
        %v996 = vpop.xlane.xlu0 %995
        %997 = vadd.xlane.f32.xlu0 %v955
        %v998 = vpop.xlane.xlu0 %997
        %999 = vadd.xlane.f32.xlu0 %v956
        %v1000 = vpop.xlane.xlu0 %999
        %1001 = vadd.xlane.f32.xlu0 %v957
        %v1002 = vpop.xlane.xlu0 %1001
        %1003 = vadd.xlane.f32.xlu0 %v958
        %v1004 = vpop.xlane.xlu0 %1003
        %1005 = vadd.xlane.f32.xlu0 %v959
        %v1006 = vpop.xlane.xlu0 %1005
        %1007 = vadd.xlane.f32.xlu0 %v960
        %v1008 = vpop.xlane.xlu0 %1007
        %1009 = vadd.xlane.f32.xlu0 %v961
        %v1010 = vpop.xlane.xlu0 %1009
        %1011 = vadd.xlane.f32.xlu0 %v962
        %v1012 = vpop.xlane.xlu0 %1011
        %1013 = vadd.xlane.f32.xlu0 %v963
        %v1014 = vpop.xlane.xlu0 %1013
        %1015 = vadd.xlane.f32.xlu0 %v964
        %v1016 = vpop.xlane.xlu0 %1015
        %1017 = vadd.xlane.f32.xlu0 %v965
        %v1018 = vpop.xlane.xlu0 %1017
        %1019 = vadd.xlane.f32.xlu0 %v966
        %v1020 = vpop.xlane.xlu0 %1019
        %1021 = vadd.xlane.f32.xlu0 %v967
        %v1022 = vpop.xlane.xlu0 %1021
        %1023 = vadd.xlane.f32.xlu0 %v968
        %v1024 = vpop.xlane.xlu0 %1023
        %1025 = vadd.xlane.f32.xlu0 %v969
        %v1026 = vpop.xlane.xlu0 %1025
        %1027 = vadd.xlane.f32.xlu0 %v970
        %v1028 = vpop.xlane.xlu0 %1027
        %1029 = vadd.xlane.f32.xlu0 %v971
        %v1030 = vpop.xlane.xlu0 %1029
        %1031 = vadd.xlane.f32.xlu0 %v972
        %v1032 = vpop.xlane.xlu0 %1031
        %1033 = vadd.xlane.f32.xlu0 %v973
        %v1034 = vpop.xlane.xlu0 %1033
        %1035 = vadd.xlane.f32.xlu0 %v974
        %v1036 = vpop.xlane.xlu0 %1035
        %1037 = vadd.xlane.f32.xlu0 %v975
        %v1038 = vpop.xlane.xlu0 %1037
        %1039 = vadd.xlane.f32.xlu0 %v976
        %v1040 = vpop.xlane.xlu0 %1039
        %v1041 = vmax.f32 %v978, 1e-30
        %v1042 = vmax.f32 %v980, 1e-30
        %v1043 = vmax.f32 %v982, 1e-30
        %v1044 = vmax.f32 %v984, 1e-30
        %v1045 = vmax.f32 %v986, 1e-30
        %v1046 = vmax.f32 %v988, 1e-30
        %v1047 = vmax.f32 %v990, 1e-30
        %v1048 = vmax.f32 %v992, 1e-30
        %v1049 = vmax.f32 %v994, 1e-30
        %v1050 = vmax.f32 %v996, 1e-30
        %v1051 = vmax.f32 %v998, 1e-30
        %v1052 = vmax.f32 %v1000, 1e-30
        %v1053 = vmax.f32 %v1002, 1e-30
        %v1054 = vmax.f32 %v1004, 1e-30
        %v1055 = vmax.f32 %v1006, 1e-30
        %v1056 = vmax.f32 %v1008, 1e-30
        %v1057 = vmax.f32 %v1010, 1e-30
        %v1058 = vmax.f32 %v1012, 1e-30
        %v1059 = vmax.f32 %v1014, 1e-30
        %v1060 = vmax.f32 %v1016, 1e-30
        %v1061 = vmax.f32 %v1018, 1e-30
        %v1062 = vmax.f32 %v1020, 1e-30
        %v1063 = vmax.f32 %v1022, 1e-30
        %v1064 = vmax.f32 %v1024, 1e-30
        %v1065 = vmax.f32 %v1026, 1e-30
        %v1066 = vmax.f32 %v1028, 1e-30
        %v1067 = vmax.f32 %v1030, 1e-30
        %v1068 = vmax.f32 %v1032, 1e-30
        %v1069 = vmax.f32 %v1034, 1e-30
        %v1070 = vmax.f32 %v1036, 1e-30
        %v1071 = vmax.f32 %v1038, 1e-30
        %v1072 = vmax.f32 %v1040, 1e-30
        %v1073 = vrsqrt.pop %v1041
        %v1074 = vmul.f32 %v1041, %v1073
        %vm1075 = vcmp.eq.f32.partialorder %v1041, inf
        %v1076 = vsel %vm1075, %v1041, %v1074
        %vm1077 = vcmp.eq.f32.partialorder %v1041, 0.0
        %v1078 = vand.u32 %v1041, 2147483648
        %v1079 = vsel %vm1077, %v1078, %v1076
        %v1080 = vrsqrt.pop %v1042
        %v1081 = vmul.f32 %v1042, %v1080
        %vm1082 = vcmp.eq.f32.partialorder %v1042, inf
        %v1083 = vsel %vm1082, %v1042, %v1081
        %vm1084 = vcmp.eq.f32.partialorder %v1042, 0.0
        %v1085 = vand.u32 %v1042, 2147483648
        %v1086 = vsel %vm1084, %v1085, %v1083
        %v1087 = vrsqrt.pop %v1043
        %v1088 = vmul.f32 %v1043, %v1087
        %vm1089 = vcmp.eq.f32.partialorder %v1043, inf
        %v1090 = vsel %vm1089, %v1043, %v1088
        %vm1091 = vcmp.eq.f32.partialorder %v1043, 0.0
        %v1092 = vand.u32 %v1043, 2147483648
        %v1093 = vsel %vm1091, %v1092, %v1090
        %v1094 = vrsqrt.pop %v1044
        %v1095 = vmul.f32 %v1044, %v1094
        %vm1096 = vcmp.eq.f32.partialorder %v1044, inf
        %v1097 = vsel %vm1096, %v1044, %v1095
        %vm1098 = vcmp.eq.f32.partialorder %v1044, 0.0
        %v1099 = vand.u32 %v1044, 2147483648
        %v1100 = vsel %vm1098, %v1099, %v1097
        %v1101 = vrsqrt.pop %v1045
        %v1102 = vmul.f32 %v1045, %v1101
        %vm1103 = vcmp.eq.f32.partialorder %v1045, inf
        %v1104 = vsel %vm1103, %v1045, %v1102
        %vm1105 = vcmp.eq.f32.partialorder %v1045, 0.0
        %v1106 = vand.u32 %v1045, 2147483648
        %v1107 = vsel %vm1105, %v1106, %v1104
        %v1108 = vrsqrt.pop %v1046
        %v1109 = vmul.f32 %v1046, %v1108
        %vm1110 = vcmp.eq.f32.partialorder %v1046, inf
        %v1111 = vsel %vm1110, %v1046, %v1109
        %vm1112 = vcmp.eq.f32.partialorder %v1046, 0.0
        %v1113 = vand.u32 %v1046, 2147483648
        %v1114 = vsel %vm1112, %v1113, %v1111
        %v1115 = vrsqrt.pop %v1047
        %v1116 = vmul.f32 %v1047, %v1115
        %vm1117 = vcmp.eq.f32.partialorder %v1047, inf
        %v1118 = vsel %vm1117, %v1047, %v1116
        %vm1119 = vcmp.eq.f32.partialorder %v1047, 0.0
        %v1120 = vand.u32 %v1047, 2147483648
        %v1121 = vsel %vm1119, %v1120, %v1118
        %v1122 = vrsqrt.pop %v1048
        %v1123 = vmul.f32 %v1048, %v1122
        %vm1124 = vcmp.eq.f32.partialorder %v1048, inf
        %v1125 = vsel %vm1124, %v1048, %v1123
        %vm1126 = vcmp.eq.f32.partialorder %v1048, 0.0
        %v1127 = vand.u32 %v1048, 2147483648
        %v1128 = vsel %vm1126, %v1127, %v1125
        %v1129 = vrsqrt.pop %v1049
        %v1130 = vmul.f32 %v1049, %v1129
        %vm1131 = vcmp.eq.f32.partialorder %v1049, inf
        %v1132 = vsel %vm1131, %v1049, %v1130
        %vm1133 = vcmp.eq.f32.partialorder %v1049, 0.0
        %v1134 = vand.u32 %v1049, 2147483648
        %v1135 = vsel %vm1133, %v1134, %v1132
        %v1136 = vrsqrt.pop %v1050
        %v1137 = vmul.f32 %v1050, %v1136
        %vm1138 = vcmp.eq.f32.partialorder %v1050, inf
        %v1139 = vsel %vm1138, %v1050, %v1137
        %vm1140 = vcmp.eq.f32.partialorder %v1050, 0.0
        %v1141 = vand.u32 %v1050, 2147483648
        %v1142 = vsel %vm1140, %v1141, %v1139
        %v1143 = vrsqrt.pop %v1051
        %v1144 = vmul.f32 %v1051, %v1143
        %vm1145 = vcmp.eq.f32.partialorder %v1051, inf
        %v1146 = vsel %vm1145, %v1051, %v1144
        %vm1147 = vcmp.eq.f32.partialorder %v1051, 0.0
        %v1148 = vand.u32 %v1051, 2147483648
        %v1149 = vsel %vm1147, %v1148, %v1146
        %v1150 = vrsqrt.pop %v1052
        %v1151 = vmul.f32 %v1052, %v1150
        %vm1152 = vcmp.eq.f32.partialorder %v1052, inf
        %v1153 = vsel %vm1152, %v1052, %v1151
        %vm1154 = vcmp.eq.f32.partialorder %v1052, 0.0
        %v1155 = vand.u32 %v1052, 2147483648
        %v1156 = vsel %vm1154, %v1155, %v1153
        %v1157 = vrsqrt.pop %v1053
        %v1158 = vmul.f32 %v1053, %v1157
        %vm1159 = vcmp.eq.f32.partialorder %v1053, inf
        %v1160 = vsel %vm1159, %v1053, %v1158
        %vm1161 = vcmp.eq.f32.partialorder %v1053, 0.0
        %v1162 = vand.u32 %v1053, 2147483648
        %v1163 = vsel %vm1161, %v1162, %v1160
        %v1164 = vrsqrt.pop %v1054
        %v1165 = vmul.f32 %v1054, %v1164
        %vm1166 = vcmp.eq.f32.partialorder %v1054, inf
        %v1167 = vsel %vm1166, %v1054, %v1165
        %vm1168 = vcmp.eq.f32.partialorder %v1054, 0.0
        %v1169 = vand.u32 %v1054, 2147483648
        %v1170 = vsel %vm1168, %v1169, %v1167
        %v1171 = vrsqrt.pop %v1055
        %v1172 = vmul.f32 %v1055, %v1171
        %vm1173 = vcmp.eq.f32.partialorder %v1055, inf
        %v1174 = vsel %vm1173, %v1055, %v1172
        %vm1175 = vcmp.eq.f32.partialorder %v1055, 0.0
        %v1176 = vand.u32 %v1055, 2147483648
        %v1177 = vsel %vm1175, %v1176, %v1174
        %v1178 = vrsqrt.pop %v1056
        %v1179 = vmul.f32 %v1056, %v1178
        %vm1180 = vcmp.eq.f32.partialorder %v1056, inf
        %v1181 = vsel %vm1180, %v1056, %v1179
        %vm1182 = vcmp.eq.f32.partialorder %v1056, 0.0
        %v1183 = vand.u32 %v1056, 2147483648
        %v1184 = vsel %vm1182, %v1183, %v1181
        %v1185 = vrsqrt.pop %v1057
        %v1186 = vmul.f32 %v1057, %v1185
        %vm1187 = vcmp.eq.f32.partialorder %v1057, inf
        %v1188 = vsel %vm1187, %v1057, %v1186
        %vm1189 = vcmp.eq.f32.partialorder %v1057, 0.0
        %v1190 = vand.u32 %v1057, 2147483648
        %v1191 = vsel %vm1189, %v1190, %v1188
        %v1192 = vrsqrt.pop %v1058
        %v1193 = vmul.f32 %v1058, %v1192
        %vm1194 = vcmp.eq.f32.partialorder %v1058, inf
        %v1195 = vsel %vm1194, %v1058, %v1193
        %vm1196 = vcmp.eq.f32.partialorder %v1058, 0.0
        %v1197 = vand.u32 %v1058, 2147483648
        %v1198 = vsel %vm1196, %v1197, %v1195
        %v1199 = vrsqrt.pop %v1059
        %v1200 = vmul.f32 %v1059, %v1199
        %vm1201 = vcmp.eq.f32.partialorder %v1059, inf
        %v1202 = vsel %vm1201, %v1059, %v1200
        %vm1203 = vcmp.eq.f32.partialorder %v1059, 0.0
        %v1204 = vand.u32 %v1059, 2147483648
        %v1205 = vsel %vm1203, %v1204, %v1202
        %v1206 = vrsqrt.pop %v1060
        %v1207 = vmul.f32 %v1060, %v1206
        %vm1208 = vcmp.eq.f32.partialorder %v1060, inf
        %v1209 = vsel %vm1208, %v1060, %v1207
        %vm1210 = vcmp.eq.f32.partialorder %v1060, 0.0
        %v1211 = vand.u32 %v1060, 2147483648
        %v1212 = vsel %vm1210, %v1211, %v1209
        %v1213 = vrsqrt.pop %v1061
        %v1214 = vmul.f32 %v1061, %v1213
        %vm1215 = vcmp.eq.f32.partialorder %v1061, inf
        %v1216 = vsel %vm1215, %v1061, %v1214
        %vm1217 = vcmp.eq.f32.partialorder %v1061, 0.0
        %v1218 = vand.u32 %v1061, 2147483648
        %v1219 = vsel %vm1217, %v1218, %v1216
        %v1220 = vrsqrt.pop %v1062
        %v1221 = vmul.f32 %v1062, %v1220
        %vm1222 = vcmp.eq.f32.partialorder %v1062, inf
        %v1223 = vsel %vm1222, %v1062, %v1221
        %vm1224 = vcmp.eq.f32.partialorder %v1062, 0.0
        %v1225 = vand.u32 %v1062, 2147483648
        %v1226 = vsel %vm1224, %v1225, %v1223
        %v1227 = vrsqrt.pop %v1063
        %v1228 = vmul.f32 %v1063, %v1227
        %vm1229 = vcmp.eq.f32.partialorder %v1063, inf
        %v1230 = vsel %vm1229, %v1063, %v1228
        %vm1231 = vcmp.eq.f32.partialorder %v1063, 0.0
        %v1232 = vand.u32 %v1063, 2147483648
        %v1233 = vsel %vm1231, %v1232, %v1230
        %v1234 = vrsqrt.pop %v1064
        %v1235 = vmul.f32 %v1064, %v1234
        %vm1236 = vcmp.eq.f32.partialorder %v1064, inf
        %v1237 = vsel %vm1236, %v1064, %v1235
        %vm1238 = vcmp.eq.f32.partialorder %v1064, 0.0
        %v1239 = vand.u32 %v1064, 2147483648
        %v1240 = vsel %vm1238, %v1239, %v1237
        %v1241 = vrsqrt.pop %v1065
        %v1242 = vmul.f32 %v1065, %v1241
        %vm1243 = vcmp.eq.f32.partialorder %v1065, inf
        %v1244 = vsel %vm1243, %v1065, %v1242
        %vm1245 = vcmp.eq.f32.partialorder %v1065, 0.0
        %v1246 = vand.u32 %v1065, 2147483648
        %v1247 = vsel %vm1245, %v1246, %v1244
        %v1248 = vrsqrt.pop %v1066
        %v1249 = vmul.f32 %v1066, %v1248
        %vm1250 = vcmp.eq.f32.partialorder %v1066, inf
        %v1251 = vsel %vm1250, %v1066, %v1249
        %vm1252 = vcmp.eq.f32.partialorder %v1066, 0.0
        %v1253 = vand.u32 %v1066, 2147483648
        %v1254 = vsel %vm1252, %v1253, %v1251
        %v1255 = vrsqrt.pop %v1067
        %v1256 = vmul.f32 %v1067, %v1255
        %vm1257 = vcmp.eq.f32.partialorder %v1067, inf
        %v1258 = vsel %vm1257, %v1067, %v1256
        %vm1259 = vcmp.eq.f32.partialorder %v1067, 0.0
        %v1260 = vand.u32 %v1067, 2147483648
        %v1261 = vsel %vm1259, %v1260, %v1258
        %v1262 = vrsqrt.pop %v1068
        %v1263 = vmul.f32 %v1068, %v1262
        %vm1264 = vcmp.eq.f32.partialorder %v1068, inf
        %v1265 = vsel %vm1264, %v1068, %v1263
        %vm1266 = vcmp.eq.f32.partialorder %v1068, 0.0
        %v1267 = vand.u32 %v1068, 2147483648
        %v1268 = vsel %vm1266, %v1267, %v1265
        %v1269 = vrsqrt.pop %v1069
        %v1270 = vmul.f32 %v1069, %v1269
        %vm1271 = vcmp.eq.f32.partialorder %v1069, inf
        %v1272 = vsel %vm1271, %v1069, %v1270
        %vm1273 = vcmp.eq.f32.partialorder %v1069, 0.0
        %v1274 = vand.u32 %v1069, 2147483648
        %v1275 = vsel %vm1273, %v1274, %v1272
        %v1276 = vrsqrt.pop %v1070
        %v1277 = vmul.f32 %v1070, %v1276
        %vm1278 = vcmp.eq.f32.partialorder %v1070, inf
        %v1279 = vsel %vm1278, %v1070, %v1277
        %vm1280 = vcmp.eq.f32.partialorder %v1070, 0.0
        %v1281 = vand.u32 %v1070, 2147483648
        %v1282 = vsel %vm1280, %v1281, %v1279
        %v1283 = vrsqrt.pop %v1071
        %v1284 = vmul.f32 %v1071, %v1283
        %vm1285 = vcmp.eq.f32.partialorder %v1071, inf
        %v1286 = vsel %vm1285, %v1071, %v1284
        %vm1287 = vcmp.eq.f32.partialorder %v1071, 0.0
        %v1288 = vand.u32 %v1071, 2147483648
        %v1289 = vsel %vm1287, %v1288, %v1286
        %v1290 = vrsqrt.pop %v1072
        %v1291 = vmul.f32 %v1072, %v1290
        %vm1292 = vcmp.eq.f32.partialorder %v1072, inf
        %v1293 = vsel %vm1292, %v1072, %v1291
        %vm1294 = vcmp.eq.f32.partialorder %v1072, 0.0
        %v1295 = vand.u32 %v1072, 2147483648
        %v1296 = vsel %vm1294, %v1295, %v1293
        %v1297 = vrsqrt.pop %v1041
        %v1298 = vrsqrt.pop %v1042
        %v1299 = vrsqrt.pop %v1043
        %v1300 = vrsqrt.pop %v1044
        %v1301 = vrsqrt.pop %v1045
        %v1302 = vrsqrt.pop %v1046
        %v1303 = vrsqrt.pop %v1047
        %v1304 = vrsqrt.pop %v1048
        %v1305 = vrsqrt.pop %v1049
        %v1306 = vrsqrt.pop %v1050
        %v1307 = vrsqrt.pop %v1051
        %v1308 = vrsqrt.pop %v1052
        %v1309 = vrsqrt.pop %v1053
        %v1310 = vrsqrt.pop %v1054
        %v1311 = vrsqrt.pop %v1055
        %v1312 = vrsqrt.pop %v1056
        %v1313 = vrsqrt.pop %v1057
        %v1314 = vrsqrt.pop %v1058
        %v1315 = vrsqrt.pop %v1059
        %v1316 = vrsqrt.pop %v1060
        %v1317 = vrsqrt.pop %v1061
        %v1318 = vrsqrt.pop %v1062
        %v1319 = vrsqrt.pop %v1063
        %v1320 = vrsqrt.pop %v1064
        %v1321 = vrsqrt.pop %v1065
        %v1322 = vrsqrt.pop %v1066
        %v1323 = vrsqrt.pop %v1067
        %v1324 = vrsqrt.pop %v1068
        %v1325 = vrsqrt.pop %v1069
        %v1326 = vrsqrt.pop %v1070
        %v1327 = vrsqrt.pop %v1071
        %v1328 = vrsqrt.pop %v1072
        %v1329 = vmul.f32 %v1079, %v592
        %v1330 = vmul.f32 %v1086, %v593
        %v1331 = vmul.f32 %v1093, %v594
        %v1332 = vmul.f32 %v1100, %v595
        %v1333 = vmul.f32 %v1107, %v596
        %v1334 = vmul.f32 %v1114, %v597
        %v1335 = vmul.f32 %v1121, %v598
        %v1336 = vmul.f32 %v1128, %v599
        %v1337 = vmul.f32 %v1135, %v600
        %v1338 = vmul.f32 %v1142, %v601
        %v1339 = vmul.f32 %v1149, %v602
        %v1340 = vmul.f32 %v1156, %v603
        %v1341 = vmul.f32 %v1163, %v604
        %v1342 = vmul.f32 %v1170, %v605
        %v1343 = vmul.f32 %v1177, %v606
        %v1344 = vmul.f32 %v1184, %v607
        %v1345 = vmul.f32 %v1191, %v608
        %v1346 = vmul.f32 %v1198, %v609
        %v1347 = vmul.f32 %v1205, %v610
        %v1348 = vmul.f32 %v1212, %v611
        %v1349 = vmul.f32 %v1219, %v612
        %v1350 = vmul.f32 %v1226, %v613
        %v1351 = vmul.f32 %v1233, %v614
        %v1352 = vmul.f32 %v1240, %v615
        %v1353 = vmul.f32 %v1247, %v616
        %v1354 = vmul.f32 %v1254, %v617
        %v1355 = vmul.f32 %v1261, %v618
        %v1356 = vmul.f32 %v1268, %v619
        %v1357 = vmul.f32 %v1275, %v620
        %v1358 = vmul.f32 %v1282, %v621
        %v1359 = vmul.f32 %v1289, %v622
        %v1360 = vmul.f32 %v1296, %v623
        %v1361 = vmax.f32 %v374, -0.9999999
        %v1362 = vmax.f32 %v381, -0.9999999
        %v1363 = vmax.f32 %v388, -0.9999999
        %v1364 = vmax.f32 %v395, -0.9999999
        %v1365 = vmax.f32 %v402, -0.9999999
        %v1366 = vmax.f32 %v409, -0.9999999
        %v1367 = vmax.f32 %v416, -0.9999999
        %v1368 = vmax.f32 %v423, -0.9999999
        %v1369 = vmax.f32 %v430, -0.9999999
        %v1370 = vmax.f32 %v437, -0.9999999
        %v1371 = vmax.f32 %v444, -0.9999999
        %v1372 = vmax.f32 %v451, -0.9999999
        %v1373 = vmax.f32 %v458, -0.9999999
        %v1374 = vmax.f32 %v465, -0.9999999
        %v1375 = vmax.f32 %v472, -0.9999999
        %v1376 = vmax.f32 %v479, -0.9999999
        %v1377 = vmax.f32 %v486, -0.9999999
        %v1378 = vmax.f32 %v493, -0.9999999
        %v1379 = vmax.f32 %v500, -0.9999999
        %v1380 = vmax.f32 %v507, -0.9999999
        %v1381 = vmax.f32 %v514, -0.9999999
        %v1382 = vmax.f32 %v521, -0.9999999
        %v1383 = vmax.f32 %v528, -0.9999999
        %v1384 = vmax.f32 %v535, -0.9999999
        %v1385 = vmax.f32 %v542, -0.9999999
        %v1386 = vmax.f32 %v549, -0.9999999
        %v1387 = vmax.f32 %v556, -0.9999999
        %v1388 = vmax.f32 %v563, -0.9999999
        %v1389 = vmax.f32 %v570, -0.9999999
        %v1390 = vmax.f32 %v577, -0.9999999
        %v1391 = vmax.f32 %v584, -0.9999999
        %v1392 = vmax.f32 %v591, -0.9999999
        %v1393 = vmin.f32 %v1361, 0.9999999
        %v1394 = vmin.f32 %v1362, 0.9999999
        %v1395 = vmin.f32 %v1363, 0.9999999
        %v1396 = vmin.f32 %v1364, 0.9999999
        %v1397 = vmin.f32 %v1365, 0.9999999
        %v1398 = vmin.f32 %v1366, 0.9999999
        %v1399 = vmin.f32 %v1367, 0.9999999
        %v1400 = vmin.f32 %v1368, 0.9999999
        %v1401 = vmin.f32 %v1369, 0.9999999
        %v1402 = vmin.f32 %v1370, 0.9999999
        %v1403 = vmin.f32 %v1371, 0.9999999
        %v1404 = vmin.f32 %v1372, 0.9999999
        %v1405 = vmin.f32 %v1373, 0.9999999
        %v1406 = vmin.f32 %v1374, 0.9999999
        %v1407 = vmin.f32 %v1375, 0.9999999
        %v1408 = vmin.f32 %v1376, 0.9999999
        %v1409 = vmin.f32 %v1377, 0.9999999
        %v1410 = vmin.f32 %v1378, 0.9999999
        %v1411 = vmin.f32 %v1379, 0.9999999
        %v1412 = vmin.f32 %v1380, 0.9999999
        %v1413 = vmin.f32 %v1381, 0.9999999
        %v1414 = vmin.f32 %v1382, 0.9999999
        %v1415 = vmin.f32 %v1383, 0.9999999
        %v1416 = vmin.f32 %v1384, 0.9999999
        %v1417 = vmin.f32 %v1385, 0.9999999
        %v1418 = vmin.f32 %v1386, 0.9999999
        %v1419 = vmin.f32 %v1387, 0.9999999
        %v1420 = vmin.f32 %v1388, 0.9999999
        %v1421 = vmin.f32 %v1389, 0.9999999
        %v1422 = vmin.f32 %v1390, 0.9999999
        %v1423 = vmin.f32 %v1391, 0.9999999
        %v1424 = vmin.f32 %v1392, 0.9999999
        %v1425 = vadd.f32 %v1393, 1.0
        %v1426 = vadd.f32 %v1394, 1.0
        %v1427 = vadd.f32 %v1395, 1.0
        %v1428 = vadd.f32 %v1396, 1.0
        %v1429 = vadd.f32 %v1397, 1.0
        %v1430 = vadd.f32 %v1398, 1.0
        %v1431 = vadd.f32 %v1399, 1.0
        %v1432 = vadd.f32 %v1400, 1.0
        %v1433 = vadd.f32 %v1401, 1.0
        %v1434 = vadd.f32 %v1402, 1.0
        %v1435 = vadd.f32 %v1403, 1.0
        %v1436 = vadd.f32 %v1404, 1.0
        %v1437 = vadd.f32 %v1405, 1.0
        %v1438 = vadd.f32 %v1406, 1.0
        %v1439 = vadd.f32 %v1407, 1.0
        %v1440 = vadd.f32 %v1408, 1.0
        %v1441 = vadd.f32 %v1409, 1.0
        %v1442 = vadd.f32 %v1410, 1.0
        %v1443 = vadd.f32 %v1411, 1.0
        %v1444 = vadd.f32 %v1412, 1.0
        %v1445 = vadd.f32 %v1413, 1.0
        %v1446 = vadd.f32 %v1414, 1.0
        %v1447 = vadd.f32 %v1415, 1.0
        %v1448 = vadd.f32 %v1416, 1.0
        %v1449 = vadd.f32 %v1417, 1.0
        %v1450 = vadd.f32 %v1418, 1.0
        %v1451 = vadd.f32 %v1419, 1.0
        %v1452 = vadd.f32 %v1420, 1.0
        %v1453 = vadd.f32 %v1421, 1.0
        %v1454 = vadd.f32 %v1422, 1.0
        %v1455 = vadd.f32 %v1423, 1.0
        %v1456 = vadd.f32 %v1424, 1.0
        %v1457 = vsub.f32 1.0, %v1393
        %v1458 = vsub.f32 1.0, %v1394
        %v1459 = vsub.f32 1.0, %v1395
        %v1460 = vsub.f32 1.0, %v1396
        %v1461 = vsub.f32 1.0, %v1397
        %v1462 = vsub.f32 1.0, %v1398
        %v1463 = vsub.f32 1.0, %v1399
        %v1464 = vsub.f32 1.0, %v1400
        %v1465 = vsub.f32 1.0, %v1401
        %v1466 = vsub.f32 1.0, %v1402
        %v1467 = vsub.f32 1.0, %v1403
        %v1468 = vsub.f32 1.0, %v1404
        %v1469 = vsub.f32 1.0, %v1405
        %v1470 = vsub.f32 1.0, %v1406
        %v1471 = vsub.f32 1.0, %v1407
        %v1472 = vsub.f32 1.0, %v1408
        %v1473 = vsub.f32 1.0, %v1409
        %v1474 = vsub.f32 1.0, %v1410
        %v1475 = vsub.f32 1.0, %v1411
        %v1476 = vsub.f32 1.0, %v1412
        %v1477 = vsub.f32 1.0, %v1413
        %v1478 = vsub.f32 1.0, %v1414
        %v1479 = vsub.f32 1.0, %v1415
        %v1480 = vsub.f32 1.0, %v1416
        %v1481 = vsub.f32 1.0, %v1417
        %v1482 = vsub.f32 1.0, %v1418
        %v1483 = vsub.f32 1.0, %v1419
        %v1484 = vsub.f32 1.0, %v1420
        %v1485 = vsub.f32 1.0, %v1421
        %v1486 = vsub.f32 1.0, %v1422
        %v1487 = vsub.f32 1.0, %v1423
        %v1488 = vsub.f32 1.0, %v1424
        %v1489 = vrcp.pop %v1457
        %v1490 = vmul.f32 %v1425, %v1489
        %v1491 = vrcp.pop %v1458
        %v1492 = vmul.f32 %v1426, %v1491
        %v1493 = vrcp.pop %v1459
        %v1494 = vmul.f32 %v1427, %v1493
        %v1495 = vrcp.pop %v1460
        %v1496 = vmul.f32 %v1428, %v1495
        %v1497 = vrcp.pop %v1461
        %v1498 = vmul.f32 %v1429, %v1497
        %v1499 = vrcp.pop %v1462
        %v1500 = vmul.f32 %v1430, %v1499
        %v1501 = vrcp.pop %v1463
        %v1502 = vmul.f32 %v1431, %v1501
        %v1503 = vrcp.pop %v1464
        %v1504 = vmul.f32 %v1432, %v1503
        %v1505 = vrcp.pop %v1465
        %v1506 = vmul.f32 %v1433, %v1505
        %v1507 = vrcp.pop %v1466
        %v1508 = vmul.f32 %v1434, %v1507
        %v1509 = vrcp.pop %v1467
        %v1510 = vmul.f32 %v1435, %v1509
        %v1511 = vrcp.pop %v1468
        %v1512 = vmul.f32 %v1436, %v1511
        %v1513 = vrcp.pop %v1469
        %v1514 = vmul.f32 %v1437, %v1513
        %v1515 = vrcp.pop %v1470
        %v1516 = vmul.f32 %v1438, %v1515
        %v1517 = vrcp.pop %v1471
        %v1518 = vmul.f32 %v1439, %v1517
        %v1519 = vrcp.pop %v1472
        %v1520 = vmul.f32 %v1440, %v1519
        %v1521 = vrcp.pop %v1473
        %v1522 = vmul.f32 %v1441, %v1521
        %v1523 = vrcp.pop %v1474
        %v1524 = vmul.f32 %v1442, %v1523
        %v1525 = vrcp.pop %v1475
        %v1526 = vmul.f32 %v1443, %v1525
        %v1527 = vrcp.pop %v1476
        %v1528 = vmul.f32 %v1444, %v1527
        %v1529 = vrcp.pop %v1477
        %v1530 = vmul.f32 %v1445, %v1529
        %v1531 = vrcp.pop %v1478
        %v1532 = vmul.f32 %v1446, %v1531
        %v1533 = vrcp.pop %v1479
        %v1534 = vmul.f32 %v1447, %v1533
        %v1535 = vrcp.pop %v1480
        %v1536 = vmul.f32 %v1448, %v1535
        %v1537 = vrcp.pop %v1481
        %v1538 = vmul.f32 %v1449, %v1537
        %v1539 = vrcp.pop %v1482
        %v1540 = vmul.f32 %v1450, %v1539
        %v1541 = vrcp.pop %v1483
        %v1542 = vmul.f32 %v1451, %v1541
        %v1543 = vrcp.pop %v1484
        %v1544 = vmul.f32 %v1452, %v1543
        %v1545 = vrcp.pop %v1485
        %v1546 = vmul.f32 %v1453, %v1545
        %v1547 = vrcp.pop %v1486
        %v1548 = vmul.f32 %v1454, %v1547
        %v1549 = vrcp.pop %v1487
        %v1550 = vmul.f32 %v1455, %v1549
        %v1551 = vrcp.pop %v1488
        %v1552 = vmul.f32 %v1456, %v1551
        %v1553 = vlog2.pop %v1490
        %v1554 = vmul.f32 %v1553, 0.6931472
        %v1555 = vlog2.pop %v1492
        %v1556 = vmul.f32 %v1555, 0.6931472
        %v1557 = vlog2.pop %v1494
        %v1558 = vmul.f32 %v1557, 0.6931472
        %v1559 = vlog2.pop %v1496
        %v1560 = vmul.f32 %v1559, 0.6931472
        %v1561 = vlog2.pop %v1498
        %v1562 = vmul.f32 %v1561, 0.6931472
        %v1563 = vlog2.pop %v1500
        %v1564 = vmul.f32 %v1563, 0.6931472
        %v1565 = vlog2.pop %v1502
        %v1566 = vmul.f32 %v1565, 0.6931472
        %v1567 = vlog2.pop %v1504
        %v1568 = vmul.f32 %v1567, 0.6931472
        %v1569 = vlog2.pop %v1506
        %v1570 = vmul.f32 %v1569, 0.6931472
        %v1571 = vlog2.pop %v1508
        %v1572 = vmul.f32 %v1571, 0.6931472
        %v1573 = vlog2.pop %v1510
        %v1574 = vmul.f32 %v1573, 0.6931472
        %v1575 = vlog2.pop %v1512
        %v1576 = vmul.f32 %v1575, 0.6931472
        %v1577 = vlog2.pop %v1514
        %v1578 = vmul.f32 %v1577, 0.6931472
        %v1579 = vlog2.pop %v1516
        %v1580 = vmul.f32 %v1579, 0.6931472
        %v1581 = vlog2.pop %v1518
        %v1582 = vmul.f32 %v1581, 0.6931472
        %v1583 = vlog2.pop %v1520
        %v1584 = vmul.f32 %v1583, 0.6931472
        %v1585 = vlog2.pop %v1522
        %v1586 = vmul.f32 %v1585, 0.6931472
        %v1587 = vlog2.pop %v1524
        %v1588 = vmul.f32 %v1587, 0.6931472
        %v1589 = vlog2.pop %v1526
        %v1590 = vmul.f32 %v1589, 0.6931472
        %v1591 = vlog2.pop %v1528
        %v1592 = vmul.f32 %v1591, 0.6931472
        %v1593 = vlog2.pop %v1530
        %v1594 = vmul.f32 %v1593, 0.6931472
        %v1595 = vlog2.pop %v1532
        %v1596 = vmul.f32 %v1595, 0.6931472
        %v1597 = vlog2.pop %v1534
        %v1598 = vmul.f32 %v1597, 0.6931472
        %v1599 = vlog2.pop %v1536
        %v1600 = vmul.f32 %v1599, 0.6931472
        %v1601 = vlog2.pop %v1538
        %v1602 = vmul.f32 %v1601, 0.6931472
        %v1603 = vlog2.pop %v1540
        %v1604 = vmul.f32 %v1603, 0.6931472
        %v1605 = vlog2.pop %v1542
        %v1606 = vmul.f32 %v1605, 0.6931472
        %v1607 = vlog2.pop %v1544
        %v1608 = vmul.f32 %v1607, 0.6931472
        %v1609 = vlog2.pop %v1546
        %v1610 = vmul.f32 %v1609, 0.6931472
        %v1611 = vlog2.pop %v1548
        %v1612 = vmul.f32 %v1611, 0.6931472
        %v1613 = vlog2.pop %v1550
        %v1614 = vmul.f32 %v1613, 0.6931472
        %v1615 = vlog2.pop %v1552
        %v1616 = vmul.f32 %v1615, 0.6931472
        %v1617 = vmul.f32 %v1554, 0.5
        %v1618 = vmul.f32 %v1556, 0.5
        %v1619 = vmul.f32 %v1558, 0.5
        %v1620 = vmul.f32 %v1560, 0.5
        %v1621 = vmul.f32 %v1562, 0.5
        %v1622 = vmul.f32 %v1564, 0.5
        %v1623 = vmul.f32 %v1566, 0.5
        %v1624 = vmul.f32 %v1568, 0.5
        %v1625 = vmul.f32 %v1570, 0.5
        %v1626 = vmul.f32 %v1572, 0.5
        %v1627 = vmul.f32 %v1574, 0.5
        %v1628 = vmul.f32 %v1576, 0.5
        %v1629 = vmul.f32 %v1578, 0.5
        %v1630 = vmul.f32 %v1580, 0.5
        %v1631 = vmul.f32 %v1582, 0.5
        %v1632 = vmul.f32 %v1584, 0.5
        %v1633 = vmul.f32 %v1586, 0.5
        %v1634 = vmul.f32 %v1588, 0.5
        %v1635 = vmul.f32 %v1590, 0.5
        %v1636 = vmul.f32 %v1592, 0.5
        %v1637 = vmul.f32 %v1594, 0.5
        %v1638 = vmul.f32 %v1596, 0.5
        %v1639 = vmul.f32 %v1598, 0.5
        %v1640 = vmul.f32 %v1600, 0.5
        %v1641 = vmul.f32 %v1602, 0.5
        %v1642 = vmul.f32 %v1604, 0.5
        %v1643 = vmul.f32 %v1606, 0.5
        %v1644 = vmul.f32 %v1608, 0.5
        %v1645 = vmul.f32 %v1610, 0.5
        %v1646 = vmul.f32 %v1612, 0.5
        %v1647 = vmul.f32 %v1614, 0.5
        %v1648 = vmul.f32 %v1616, 0.5
        %v1649 = vmul.f32 %v1329, %v1617
        %v1650 = vmul.f32 %v1330, %v1618
        %v1651 = vmul.f32 %v1331, %v1619
        %v1652 = vmul.f32 %v1332, %v1620
        %v1653 = vmul.f32 %v1333, %v1621
        %v1654 = vmul.f32 %v1334, %v1622
        %v1655 = vmul.f32 %v1335, %v1623
        %v1656 = vmul.f32 %v1336, %v1624
        %v1657 = vmul.f32 %v1337, %v1625
        %v1658 = vmul.f32 %v1338, %v1626
        %v1659 = vmul.f32 %v1339, %v1627
        %v1660 = vmul.f32 %v1340, %v1628
        %v1661 = vmul.f32 %v1341, %v1629
        %v1662 = vmul.f32 %v1342, %v1630
        %v1663 = vmul.f32 %v1343, %v1631
        %v1664 = vmul.f32 %v1344, %v1632
        %v1665 = vmul.f32 %v1345, %v1633
        %v1666 = vmul.f32 %v1346, %v1634
        %v1667 = vmul.f32 %v1347, %v1635
        %v1668 = vmul.f32 %v1348, %v1636
        %v1669 = vmul.f32 %v1349, %v1637
        %v1670 = vmul.f32 %v1350, %v1638
        %v1671 = vmul.f32 %v1351, %v1639
        %v1672 = vmul.f32 %v1352, %v1640
        %v1673 = vmul.f32 %v1353, %v1641
        %v1674 = vmul.f32 %v1354, %v1642
        %v1675 = vmul.f32 %v1355, %v1643
        %v1676 = vmul.f32 %v1356, %v1644
        %v1677 = vmul.f32 %v1357, %v1645
        %v1678 = vmul.f32 %v1358, %v1646
        %v1679 = vmul.f32 %v1359, %v1647
        %v1680 = vmul.f32 %v1360, %v1648
        %v1681 = vtanh.pop %v1649
        %v1682 = vtanh.pop %v1650
        %v1683 = vtanh.pop %v1651
        %v1684 = vtanh.pop %v1652
        %v1685 = vtanh.pop %v1653
        %v1686 = vtanh.pop %v1654
        %v1687 = vtanh.pop %v1655
        %v1688 = vtanh.pop %v1656
        %v1689 = vtanh.pop %v1657
        %v1690 = vtanh.pop %v1658
        %v1691 = vtanh.pop %v1659
        %v1692 = vtanh.pop %v1660
        %v1693 = vtanh.pop %v1661
        %v1694 = vtanh.pop %v1662
        %v1695 = vtanh.pop %v1663
        %v1696 = vtanh.pop %v1664
        %v1697 = vtanh.pop %v1665
        %v1698 = vtanh.pop %v1666
        %v1699 = vtanh.pop %v1667
        %v1700 = vtanh.pop %v1668
        %v1701 = vtanh.pop %v1669
        %v1702 = vtanh.pop %v1670
        %v1703 = vtanh.pop %v1671
        %v1704 = vtanh.pop %v1672
        %v1705 = vtanh.pop %v1673
        %v1706 = vtanh.pop %v1674
        %v1707 = vtanh.pop %v1675
        %v1708 = vtanh.pop %v1676
        %v1709 = vtanh.pop %v1677
        %v1710 = vtanh.pop %v1678
        %v1711 = vtanh.pop %v1679
        %v1712 = vtanh.pop %v1680
        %v1713 = vmin.f32 %v1681, 0.996
        %v1714 = vmin.f32 %v1682, 0.996
        %v1715 = vmin.f32 %v1683, 0.996
        %v1716 = vmin.f32 %v1684, 0.996
        %v1717 = vmin.f32 %v1685, 0.996
        %v1718 = vmin.f32 %v1686, 0.996
        %v1719 = vmin.f32 %v1687, 0.996
        %v1720 = vmin.f32 %v1688, 0.996
        %v1721 = vmin.f32 %v1689, 0.996
        %v1722 = vmin.f32 %v1690, 0.996
        %v1723 = vmin.f32 %v1691, 0.996
        %v1724 = vmin.f32 %v1692, 0.996
        %v1725 = vmin.f32 %v1693, 0.996
        %v1726 = vmin.f32 %v1694, 0.996
        %v1727 = vmin.f32 %v1695, 0.996
        %v1728 = vmin.f32 %v1696, 0.996
        %v1729 = vmin.f32 %v1697, 0.996
        %v1730 = vmin.f32 %v1698, 0.996
        %v1731 = vmin.f32 %v1699, 0.996
        %v1732 = vmin.f32 %v1700, 0.996
        %v1733 = vmin.f32 %v1701, 0.996
        %v1734 = vmin.f32 %v1702, 0.996
        %v1735 = vmin.f32 %v1703, 0.996
        %v1736 = vmin.f32 %v1704, 0.996
        %v1737 = vmin.f32 %v1705, 0.996
        %v1738 = vmin.f32 %v1706, 0.996
        %v1739 = vmin.f32 %v1707, 0.996
        %v1740 = vmin.f32 %v1708, 0.996
        %v1741 = vmin.f32 %v1709, 0.996
        %v1742 = vmin.f32 %v1710, 0.996
        %v1743 = vmin.f32 %v1711, 0.996
        %v1744 = vmin.f32 %v1712, 0.996
        %vm1745 = vcmp.eq.f32.partialorder %v978, 0.0
        %vm1746 = vcmp.eq.f32.partialorder %v980, 0.0
        %vm1747 = vcmp.eq.f32.partialorder %v982, 0.0
        %vm1748 = vcmp.eq.f32.partialorder %v984, 0.0
        %vm1749 = vcmp.eq.f32.partialorder %v986, 0.0
        %vm1750 = vcmp.eq.f32.partialorder %v988, 0.0
        %vm1751 = vcmp.eq.f32.partialorder %v990, 0.0
        %vm1752 = vcmp.eq.f32.partialorder %v992, 0.0
        %vm1753 = vcmp.eq.f32.partialorder %v994, 0.0
        %vm1754 = vcmp.eq.f32.partialorder %v996, 0.0
        %vm1755 = vcmp.eq.f32.partialorder %v998, 0.0
        %vm1756 = vcmp.eq.f32.partialorder %v1000, 0.0
        %vm1757 = vcmp.eq.f32.partialorder %v1002, 0.0
        %vm1758 = vcmp.eq.f32.partialorder %v1004, 0.0
        %vm1759 = vcmp.eq.f32.partialorder %v1006, 0.0
        %vm1760 = vcmp.eq.f32.partialorder %v1008, 0.0
        %vm1761 = vcmp.eq.f32.partialorder %v1010, 0.0
        %vm1762 = vcmp.eq.f32.partialorder %v1012, 0.0
        %vm1763 = vcmp.eq.f32.partialorder %v1014, 0.0
        %vm1764 = vcmp.eq.f32.partialorder %v1016, 0.0
        %vm1765 = vcmp.eq.f32.partialorder %v1018, 0.0
        %vm1766 = vcmp.eq.f32.partialorder %v1020, 0.0
        %vm1767 = vcmp.eq.f32.partialorder %v1022, 0.0
        %vm1768 = vcmp.eq.f32.partialorder %v1024, 0.0
        %vm1769 = vcmp.eq.f32.partialorder %v1026, 0.0
        %vm1770 = vcmp.eq.f32.partialorder %v1028, 0.0
        %vm1771 = vcmp.eq.f32.partialorder %v1030, 0.0
        %vm1772 = vcmp.eq.f32.partialorder %v1032, 0.0
        %vm1773 = vcmp.eq.f32.partialorder %v1034, 0.0
        %vm1774 = vcmp.eq.f32.partialorder %v1036, 0.0
        %vm1775 = vcmp.eq.f32.partialorder %v1038, 0.0
        %vm1776 = vcmp.eq.f32.partialorder %v1040, 0.0
        %v1777 = vmul.f32 %v787, %v1297
        %v1778 = vmul.f32 %v792, %v1298
        %v1779 = vmul.f32 %v797, %v1299
        %v1780 = vmul.f32 %v802, %v1300
        %v1781 = vmul.f32 %v807, %v1301
        %v1782 = vmul.f32 %v812, %v1302
        %v1783 = vmul.f32 %v817, %v1303
        %v1784 = vmul.f32 %v822, %v1304
        %v1785 = vmul.f32 %v827, %v1305
        %v1786 = vmul.f32 %v832, %v1306
        %v1787 = vmul.f32 %v837, %v1307
        %v1788 = vmul.f32 %v842, %v1308
        %v1789 = vmul.f32 %v847, %v1309
        %v1790 = vmul.f32 %v852, %v1310
        %v1791 = vmul.f32 %v857, %v1311
        %v1792 = vmul.f32 %v862, %v1312
        %v1793 = vmul.f32 %v867, %v1313
        %v1794 = vmul.f32 %v872, %v1314
        %v1795 = vmul.f32 %v877, %v1315
        %v1796 = vmul.f32 %v882, %v1316
        %v1797 = vmul.f32 %v887, %v1317
        %v1798 = vmul.f32 %v892, %v1318
        %v1799 = vmul.f32 %v897, %v1319
        %v1800 = vmul.f32 %v902, %v1320
        %v1801 = vmul.f32 %v907, %v1321
        %v1802 = vmul.f32 %v912, %v1322
        %v1803 = vmul.f32 %v917, %v1323
        %v1804 = vmul.f32 %v922, %v1324
        %v1805 = vmul.f32 %v927, %v1325
        %v1806 = vmul.f32 %v932, %v1326
        %v1807 = vmul.f32 %v937, %v1327
        %v1808 = vmul.f32 %v942, %v1328
        %v1809 = vmul.f32 %v1713, %v1777
        %v1810 = vmul.f32 %v1714, %v1778
        %v1811 = vmul.f32 %v1715, %v1779
        %v1812 = vmul.f32 %v1716, %v1780
        %v1813 = vmul.f32 %v1717, %v1781
        %v1814 = vmul.f32 %v1718, %v1782
        %v1815 = vmul.f32 %v1719, %v1783
        %v1816 = vmul.f32 %v1720, %v1784
        %v1817 = vmul.f32 %v1721, %v1785
        %v1818 = vmul.f32 %v1722, %v1786
        %v1819 = vmul.f32 %v1723, %v1787
        %v1820 = vmul.f32 %v1724, %v1788
        %v1821 = vmul.f32 %v1725, %v1789
        %v1822 = vmul.f32 %v1726, %v1790
        %v1823 = vmul.f32 %v1727, %v1791
        %v1824 = vmul.f32 %v1728, %v1792
        %v1825 = vmul.f32 %v1729, %v1793
        %v1826 = vmul.f32 %v1730, %v1794
        %v1827 = vmul.f32 %v1731, %v1795
        %v1828 = vmul.f32 %v1732, %v1796
        %v1829 = vmul.f32 %v1733, %v1797
        %v1830 = vmul.f32 %v1734, %v1798
        %v1831 = vmul.f32 %v1735, %v1799
        %v1832 = vmul.f32 %v1736, %v1800
        %v1833 = vmul.f32 %v1737, %v1801
        %v1834 = vmul.f32 %v1738, %v1802
        %v1835 = vmul.f32 %v1739, %v1803
        %v1836 = vmul.f32 %v1740, %v1804
        %v1837 = vmul.f32 %v1741, %v1805
        %v1838 = vmul.f32 %v1742, %v1806
        %v1839 = vmul.f32 %v1743, %v1807
        %v1840 = vmul.f32 %v1744, %v1808
        %v1841 = vsel %vm1745, 1, 0
        %v1842 = vsel %vm1746, 1, 0
        %v1843 = vsel %vm1747, 1, 0
        %v1844 = vsel %vm1748, 1, 0
        %v1845 = vsel %vm1749, 1, 0
        %v1846 = vsel %vm1750, 1, 0
        %v1847 = vsel %vm1751, 1, 0
        %v1848 = vsel %vm1752, 1, 0
        %v1849 = vsel %vm1753, 1, 0
        %v1850 = vsel %vm1754, 1, 0
        %v1851 = vsel %vm1755, 1, 0
        %v1852 = vsel %vm1756, 1, 0
        %v1853 = vsel %vm1757, 1, 0
        %v1854 = vsel %vm1758, 1, 0
        %v1855 = vsel %vm1759, 1, 0
        %v1856 = vsel %vm1760, 1, 0
        %v1857 = vsel %vm1761, 1, 0
        %v1858 = vsel %vm1762, 1, 0
        %v1859 = vsel %vm1763, 1, 0
        %v1860 = vsel %vm1764, 1, 0
        %v1861 = vsel %vm1765, 1, 0
        %v1862 = vsel %vm1766, 1, 0
        %v1863 = vsel %vm1767, 1, 0
        %v1864 = vsel %vm1768, 1, 0
        %v1865 = vsel %vm1769, 1, 0
        %v1866 = vsel %vm1770, 1, 0
        %v1867 = vsel %vm1771, 1, 0
        %v1868 = vsel %vm1772, 1, 0
        %v1869 = vsel %vm1773, 1, 0
        %v1870 = vsel %vm1774, 1, 0
        %v1871 = vsel %vm1775, 1, 0
        %v1872 = vsel %vm1776, 1, 0
        %vm1873 = vcmp.eq.s32.totalorder %v1841, 1
        %vm1874 = vcmp.eq.s32.totalorder %v1842, 1
        %vm1875 = vcmp.eq.s32.totalorder %v1843, 1
        %vm1876 = vcmp.eq.s32.totalorder %v1844, 1
        %vm1877 = vcmp.eq.s32.totalorder %v1845, 1
        %vm1878 = vcmp.eq.s32.totalorder %v1846, 1
        %vm1879 = vcmp.eq.s32.totalorder %v1847, 1
        %vm1880 = vcmp.eq.s32.totalorder %v1848, 1
        %vm1881 = vcmp.eq.s32.totalorder %v1849, 1
        %vm1882 = vcmp.eq.s32.totalorder %v1850, 1
        %vm1883 = vcmp.eq.s32.totalorder %v1851, 1
        %vm1884 = vcmp.eq.s32.totalorder %v1852, 1
        %vm1885 = vcmp.eq.s32.totalorder %v1853, 1
        %vm1886 = vcmp.eq.s32.totalorder %v1854, 1
        %vm1887 = vcmp.eq.s32.totalorder %v1855, 1
        %vm1888 = vcmp.eq.s32.totalorder %v1856, 1
        %vm1889 = vcmp.eq.s32.totalorder %v1857, 1
        %vm1890 = vcmp.eq.s32.totalorder %v1858, 1
        %vm1891 = vcmp.eq.s32.totalorder %v1859, 1
        %vm1892 = vcmp.eq.s32.totalorder %v1860, 1
        %vm1893 = vcmp.eq.s32.totalorder %v1861, 1
        %vm1894 = vcmp.eq.s32.totalorder %v1862, 1
        %vm1895 = vcmp.eq.s32.totalorder %v1863, 1
        %vm1896 = vcmp.eq.s32.totalorder %v1864, 1
        %vm1897 = vcmp.eq.s32.totalorder %v1865, 1
        %vm1898 = vcmp.eq.s32.totalorder %v1866, 1
        %vm1899 = vcmp.eq.s32.totalorder %v1867, 1
        %vm1900 = vcmp.eq.s32.totalorder %v1868, 1
        %vm1901 = vcmp.eq.s32.totalorder %v1869, 1
        %vm1902 = vcmp.eq.s32.totalorder %v1870, 1
        %vm1903 = vcmp.eq.s32.totalorder %v1871, 1
        %vm1904 = vcmp.eq.s32.totalorder %v1872, 1
        %v1905 = vsel %vm1873, 0.0, %v1809
        %v1906 = vsel %vm1874, 0.0, %v1810
        %v1907 = vsel %vm1875, 0.0, %v1811
        %v1908 = vsel %vm1876, 0.0, %v1812
        %v1909 = vsel %vm1877, 0.0, %v1813
        %v1910 = vsel %vm1878, 0.0, %v1814
        %v1911 = vsel %vm1879, 0.0, %v1815
        %v1912 = vsel %vm1880, 0.0, %v1816
        %v1913 = vsel %vm1881, 0.0, %v1817
        %v1914 = vsel %vm1882, 0.0, %v1818
        %v1915 = vsel %vm1883, 0.0, %v1819
        %v1916 = vsel %vm1884, 0.0, %v1820
        %v1917 = vsel %vm1885, 0.0, %v1821
        %v1918 = vsel %vm1886, 0.0, %v1822
        %v1919 = vsel %vm1887, 0.0, %v1823
        %v1920 = vsel %vm1888, 0.0, %v1824
        %v1921 = vsel %vm1889, 0.0, %v1825
        %v1922 = vsel %vm1890, 0.0, %v1826
        %v1923 = vsel %vm1891, 0.0, %v1827
        %v1924 = vsel %vm1892, 0.0, %v1828
        %v1925 = vsel %vm1893, 0.0, %v1829
        %v1926 = vsel %vm1894, 0.0, %v1830
        %v1927 = vsel %vm1895, 0.0, %v1831
        %v1928 = vsel %vm1896, 0.0, %v1832
        %v1929 = vsel %vm1897, 0.0, %v1833
        %v1930 = vsel %vm1898, 0.0, %v1834
        %v1931 = vsel %vm1899, 0.0, %v1835
        %v1932 = vsel %vm1900, 0.0, %v1836
        %v1933 = vsel %vm1901, 0.0, %v1837
        %v1934 = vsel %vm1902, 0.0, %v1838
        %v1935 = vsel %vm1903, 0.0, %v1839
        %v1936 = vsel %vm1904, 0.0, %v1840
        %v1937 = vmul.f32 %v1713, %v1713
        %v1938 = vmul.f32 %v1714, %v1714
        %v1939 = vmul.f32 %v1715, %v1715
        %v1940 = vmul.f32 %v1716, %v1716
        %v1941 = vmul.f32 %v1717, %v1717
        %v1942 = vmul.f32 %v1718, %v1718
        %v1943 = vmul.f32 %v1719, %v1719
        %v1944 = vmul.f32 %v1720, %v1720
        %v1945 = vmul.f32 %v1721, %v1721
        %v1946 = vmul.f32 %v1722, %v1722
        %v1947 = vmul.f32 %v1723, %v1723
        %v1948 = vmul.f32 %v1724, %v1724
        %v1949 = vmul.f32 %v1725, %v1725
        %v1950 = vmul.f32 %v1726, %v1726
        %v1951 = vmul.f32 %v1727, %v1727
        %v1952 = vmul.f32 %v1728, %v1728
        %v1953 = vmul.f32 %v1729, %v1729
        %v1954 = vmul.f32 %v1730, %v1730
        %v1955 = vmul.f32 %v1731, %v1731
        %v1956 = vmul.f32 %v1732, %v1732
        %v1957 = vmul.f32 %v1733, %v1733
        %v1958 = vmul.f32 %v1734, %v1734
        %v1959 = vmul.f32 %v1735, %v1735
        %v1960 = vmul.f32 %v1736, %v1736
        %v1961 = vmul.f32 %v1737, %v1737
        %v1962 = vmul.f32 %v1738, %v1738
        %v1963 = vmul.f32 %v1739, %v1739
        %v1964 = vmul.f32 %v1740, %v1740
        %v1965 = vmul.f32 %v1741, %v1741
        %v1966 = vmul.f32 %v1742, %v1742
        %v1967 = vmul.f32 %v1743, %v1743
        %v1968 = vmul.f32 %v1744, %v1744
        %v1969 = vsel %vm1745, 0.0, %v1937
        %v1970 = vsel %vm1746, 0.0, %v1938
        %v1971 = vsel %vm1747, 0.0, %v1939
        %v1972 = vsel %vm1748, 0.0, %v1940
        %v1973 = vsel %vm1749, 0.0, %v1941
        %v1974 = vsel %vm1750, 0.0, %v1942
        %v1975 = vsel %vm1751, 0.0, %v1943
        %v1976 = vsel %vm1752, 0.0, %v1944
        %v1977 = vsel %vm1753, 0.0, %v1945
        %v1978 = vsel %vm1754, 0.0, %v1946
        %v1979 = vsel %vm1755, 0.0, %v1947
        %v1980 = vsel %vm1756, 0.0, %v1948
        %v1981 = vsel %vm1757, 0.0, %v1949
        %v1982 = vsel %vm1758, 0.0, %v1950
        %v1983 = vsel %vm1759, 0.0, %v1951
        %v1984 = vsel %vm1760, 0.0, %v1952
        %v1985 = vsel %vm1761, 0.0, %v1953
        %v1986 = vsel %vm1762, 0.0, %v1954
        %v1987 = vsel %vm1763, 0.0, %v1955
        %v1988 = vsel %vm1764, 0.0, %v1956
        %v1989 = vsel %vm1765, 0.0, %v1957
        %v1990 = vsel %vm1766, 0.0, %v1958
        %v1991 = vsel %vm1767, 0.0, %v1959
        %v1992 = vsel %vm1768, 0.0, %v1960
        %v1993 = vsel %vm1769, 0.0, %v1961
        %v1994 = vsel %vm1770, 0.0, %v1962
        %v1995 = vsel %vm1771, 0.0, %v1963
        %v1996 = vsel %vm1772, 0.0, %v1964
        %v1997 = vsel %vm1773, 0.0, %v1965
        %v1998 = vsel %vm1774, 0.0, %v1966
        %v1999 = vsel %vm1775, 0.0, %v1967
        %v2000 = vsel %vm1776, 0.0, %v1968
        %v2001 = vmul.f32 %v206, %v206
        %vm2002 = vcmask 1040384
        %v2003 = vsel %vm2002, %v2001, 0.0
        %2004 = vadd.xlane.f32.xlu0 %v2003
        %v2005 = vpop.xlane.xlu0 %2004
        %v2007 = vlaneseq
        %v2008 = vshrl.u32 %v2007, 7
        %v2009 = vsub.s32 0, %v2008
        %v2010 = vrot.slane %v206, %v2009
        %v2012 = vmul.f32 %v1905, %v2010
        %v2013 = vmul.f32 %v1906, %v2010
        %v2014 = vmul.f32 %v1907, %v2010
        %v2015 = vmul.f32 %v1908, %v2010
        %v2016 = vmul.f32 %v1909, %v2010
        %v2017 = vmul.f32 %v1910, %v2010
        %v2018 = vmul.f32 %v1911, %v2010
        %v2019 = vmul.f32 %v1912, %v2010
        %v2020 = vmul.f32 %v1913, %v2010
        %v2021 = vmul.f32 %v1914, %v2010
        %v2022 = vmul.f32 %v1915, %v2010
        %v2023 = vmul.f32 %v1916, %v2010
        %v2024 = vmul.f32 %v1917, %v2010
        %v2025 = vmul.f32 %v1918, %v2010
        %v2026 = vmul.f32 %v1919, %v2010
        %v2027 = vmul.f32 %v1920, %v2010
        %v2028 = vmul.f32 %v1921, %v2010
        %v2029 = vmul.f32 %v1922, %v2010
        %v2030 = vmul.f32 %v1923, %v2010
        %v2031 = vmul.f32 %v1924, %v2010
        %v2032 = vmul.f32 %v1925, %v2010
        %v2033 = vmul.f32 %v1926, %v2010
        %v2034 = vmul.f32 %v1927, %v2010
        %v2035 = vmul.f32 %v1928, %v2010
        %v2036 = vmul.f32 %v1929, %v2010
        %v2037 = vmul.f32 %v1930, %v2010
        %v2038 = vmul.f32 %v1931, %v2010
        %v2039 = vmul.f32 %v1932, %v2010
        %v2040 = vmul.f32 %v1933, %v2010
        %v2041 = vmul.f32 %v1934, %v2010
        %v2042 = vmul.f32 %v1935, %v2010
        %v2043 = vmul.f32 %v1936, %v2010
        %2044 = vadd.xlane.f32.xlu0 %v2012
        %v2045 = vpop.xlane.xlu0 %2044
        %2046 = vadd.xlane.f32.xlu0 %v2013
        %v2047 = vpop.xlane.xlu0 %2046
        %2048 = vadd.xlane.f32.xlu0 %v2014
        %v2049 = vpop.xlane.xlu0 %2048
        %2050 = vadd.xlane.f32.xlu0 %v2015
        %v2051 = vpop.xlane.xlu0 %2050
        %2052 = vadd.xlane.f32.xlu0 %v2016
        %v2053 = vpop.xlane.xlu0 %2052
        %2054 = vadd.xlane.f32.xlu0 %v2017
        %v2055 = vpop.xlane.xlu0 %2054
        %2056 = vadd.xlane.f32.xlu0 %v2018
        %v2057 = vpop.xlane.xlu0 %2056
        %2058 = vadd.xlane.f32.xlu0 %v2019
        %v2059 = vpop.xlane.xlu0 %2058
        %2060 = vadd.xlane.f32.xlu0 %v2020
        %v2061 = vpop.xlane.xlu0 %2060
        %2062 = vadd.xlane.f32.xlu0 %v2021
        %v2063 = vpop.xlane.xlu0 %2062
        %2064 = vadd.xlane.f32.xlu0 %v2022
        %v2065 = vpop.xlane.xlu0 %2064
        %2066 = vadd.xlane.f32.xlu0 %v2023
        %v2067 = vpop.xlane.xlu0 %2066
        %2068 = vadd.xlane.f32.xlu0 %v2024
        %v2069 = vpop.xlane.xlu0 %2068
        %2070 = vadd.xlane.f32.xlu0 %v2025
        %v2071 = vpop.xlane.xlu0 %2070
        %2072 = vadd.xlane.f32.xlu0 %v2026
        %v2073 = vpop.xlane.xlu0 %2072
        %2074 = vadd.xlane.f32.xlu0 %v2027
        %v2075 = vpop.xlane.xlu0 %2074
        %2076 = vadd.xlane.f32.xlu0 %v2028
        %v2077 = vpop.xlane.xlu0 %2076
        %2078 = vadd.xlane.f32.xlu0 %v2029
        %v2079 = vpop.xlane.xlu0 %2078
        %2080 = vadd.xlane.f32.xlu0 %v2030
        %v2081 = vpop.xlane.xlu0 %2080
        %2082 = vadd.xlane.f32.xlu0 %v2031
        %v2083 = vpop.xlane.xlu0 %2082
        %2084 = vadd.xlane.f32.xlu0 %v2032
        %v2085 = vpop.xlane.xlu0 %2084
        %2086 = vadd.xlane.f32.xlu0 %v2033
        %v2087 = vpop.xlane.xlu0 %2086
        %2088 = vadd.xlane.f32.xlu0 %v2034
        %v2089 = vpop.xlane.xlu0 %2088
        %2090 = vadd.xlane.f32.xlu0 %v2035
        %v2091 = vpop.xlane.xlu0 %2090
        %2092 = vadd.xlane.f32.xlu0 %v2036
        %v2093 = vpop.xlane.xlu0 %2092
        %2094 = vadd.xlane.f32.xlu0 %v2037
        %v2095 = vpop.xlane.xlu0 %2094
        %2096 = vadd.xlane.f32.xlu0 %v2038
        %v2097 = vpop.xlane.xlu0 %2096
        %2098 = vadd.xlane.f32.xlu0 %v2039
        %v2099 = vpop.xlane.xlu0 %2098
        %2100 = vadd.xlane.f32.xlu0 %v2040
        %v2101 = vpop.xlane.xlu0 %2100
        %2102 = vadd.xlane.f32.xlu0 %v2041
        %v2103 = vpop.xlane.xlu0 %2102
        %2104 = vadd.xlane.f32.xlu0 %v2042
        %v2105 = vpop.xlane.xlu0 %2104
        %2106 = vadd.xlane.f32.xlu0 %v2043
        %v2107 = vpop.xlane.xlu0 %2106
        %v2108 = vmul.f32 %v2045, 2.0
        %v2109 = vmul.f32 %v2047, 2.0
        %v2110 = vmul.f32 %v2049, 2.0
        %v2111 = vmul.f32 %v2051, 2.0
        %v2112 = vmul.f32 %v2053, 2.0
        %v2113 = vmul.f32 %v2055, 2.0
        %v2114 = vmul.f32 %v2057, 2.0
        %v2115 = vmul.f32 %v2059, 2.0
        %v2116 = vmul.f32 %v2061, 2.0
        %v2117 = vmul.f32 %v2063, 2.0
        %v2118 = vmul.f32 %v2065, 2.0
        %v2119 = vmul.f32 %v2067, 2.0
        %v2120 = vmul.f32 %v2069, 2.0
        %v2121 = vmul.f32 %v2071, 2.0
        %v2122 = vmul.f32 %v2073, 2.0
        %v2123 = vmul.f32 %v2075, 2.0
        %v2124 = vmul.f32 %v2077, 2.0
        %v2125 = vmul.f32 %v2079, 2.0
        %v2126 = vmul.f32 %v2081, 2.0
        %v2127 = vmul.f32 %v2083, 2.0
        %v2128 = vmul.f32 %v2085, 2.0
        %v2129 = vmul.f32 %v2087, 2.0
        %v2130 = vmul.f32 %v2089, 2.0
        %v2131 = vmul.f32 %v2091, 2.0
        %v2132 = vmul.f32 %v2093, 2.0
        %v2133 = vmul.f32 %v2095, 2.0
        %v2134 = vmul.f32 %v2097, 2.0
        %v2135 = vmul.f32 %v2099, 2.0
        %v2136 = vmul.f32 %v2101, 2.0
        %v2137 = vmul.f32 %v2103, 2.0
        %v2138 = vmul.f32 %v2105, 2.0
        %v2139 = vmul.f32 %v2107, 2.0
        %v2140 = vadd.f32 %v2108, 1.0
        %v2141 = vadd.f32 %v2109, 1.0
        %v2142 = vadd.f32 %v2110, 1.0
        %v2143 = vadd.f32 %v2111, 1.0
        %v2144 = vadd.f32 %v2112, 1.0
        %v2145 = vadd.f32 %v2113, 1.0
        %v2146 = vadd.f32 %v2114, 1.0
        %v2147 = vadd.f32 %v2115, 1.0
        %v2148 = vadd.f32 %v2116, 1.0
        %v2149 = vadd.f32 %v2117, 1.0
        %v2150 = vadd.f32 %v2118, 1.0
        %v2151 = vadd.f32 %v2119, 1.0
        %v2152 = vadd.f32 %v2120, 1.0
        %v2153 = vadd.f32 %v2121, 1.0
        %v2154 = vadd.f32 %v2122, 1.0
        %v2155 = vadd.f32 %v2123, 1.0
        %v2156 = vadd.f32 %v2124, 1.0
        %v2157 = vadd.f32 %v2125, 1.0
        %v2158 = vadd.f32 %v2126, 1.0
        %v2159 = vadd.f32 %v2127, 1.0
        %v2160 = vadd.f32 %v2128, 1.0
        %v2161 = vadd.f32 %v2129, 1.0
        %v2162 = vadd.f32 %v2130, 1.0
        %v2163 = vadd.f32 %v2131, 1.0
        %v2164 = vadd.f32 %v2132, 1.0
        %v2165 = vadd.f32 %v2133, 1.0
        %v2166 = vadd.f32 %v2134, 1.0
        %v2167 = vadd.f32 %v2135, 1.0
        %v2168 = vadd.f32 %v2136, 1.0
        %v2169 = vadd.f32 %v2137, 1.0
        %v2170 = vadd.f32 %v2138, 1.0
        %v2171 = vadd.f32 %v2139, 1.0
        %v2172 = vlaneseq
        %v2173 = vshrl.u32 %v2172, 7
        %v2174 = vsub.s32 0, %v2173
        %v2175 = vrot.slane %v2005, %v2174
        %v2176 = vadd.f32 %v2140, %v2175
        %v2177 = vadd.f32 %v2141, %v2175
        %v2178 = vadd.f32 %v2142, %v2175
        %v2179 = vadd.f32 %v2143, %v2175
        %v2180 = vadd.f32 %v2144, %v2175
        %v2181 = vadd.f32 %v2145, %v2175
        %v2182 = vadd.f32 %v2146, %v2175
        %v2183 = vadd.f32 %v2147, %v2175
        %v2184 = vadd.f32 %v2148, %v2175
        %v2185 = vadd.f32 %v2149, %v2175
        %v2186 = vadd.f32 %v2150, %v2175
        %v2187 = vadd.f32 %v2151, %v2175
        %v2188 = vadd.f32 %v2152, %v2175
        %v2189 = vadd.f32 %v2153, %v2175
        %v2190 = vadd.f32 %v2154, %v2175
        %v2191 = vadd.f32 %v2155, %v2175
        %v2192 = vadd.f32 %v2156, %v2175
        %v2193 = vadd.f32 %v2157, %v2175
        %v2194 = vadd.f32 %v2158, %v2175
        %v2195 = vadd.f32 %v2159, %v2175
        %v2196 = vadd.f32 %v2160, %v2175
        %v2197 = vadd.f32 %v2161, %v2175
        %v2198 = vadd.f32 %v2162, %v2175
        %v2199 = vadd.f32 %v2163, %v2175
        %v2200 = vadd.f32 %v2164, %v2175
        %v2201 = vadd.f32 %v2165, %v2175
        %v2202 = vadd.f32 %v2166, %v2175
        %v2203 = vadd.f32 %v2167, %v2175
        %v2204 = vadd.f32 %v2168, %v2175
        %v2205 = vadd.f32 %v2169, %v2175
        %v2206 = vadd.f32 %v2170, %v2175
        %v2207 = vadd.f32 %v2171, %v2175
        %v2208 = vmul.f32 %v2176, %v1905
        %v2209 = vmul.f32 %v2177, %v1906
        %v2210 = vmul.f32 %v2178, %v1907
        %v2211 = vmul.f32 %v2179, %v1908
        %v2212 = vmul.f32 %v2180, %v1909
        %v2213 = vmul.f32 %v2181, %v1910
        %v2214 = vmul.f32 %v2182, %v1911
        %v2215 = vmul.f32 %v2183, %v1912
        %v2216 = vmul.f32 %v2184, %v1913
        %v2217 = vmul.f32 %v2185, %v1914
        %v2218 = vmul.f32 %v2186, %v1915
        %v2219 = vmul.f32 %v2187, %v1916
        %v2220 = vmul.f32 %v2188, %v1917
        %v2221 = vmul.f32 %v2189, %v1918
        %v2222 = vmul.f32 %v2190, %v1919
        %v2223 = vmul.f32 %v2191, %v1920
        %v2224 = vmul.f32 %v2192, %v1921
        %v2225 = vmul.f32 %v2193, %v1922
        %v2226 = vmul.f32 %v2194, %v1923
        %v2227 = vmul.f32 %v2195, %v1924
        %v2228 = vmul.f32 %v2196, %v1925
        %v2229 = vmul.f32 %v2197, %v1926
        %v2230 = vmul.f32 %v2198, %v1927
        %v2231 = vmul.f32 %v2199, %v1928
        %v2232 = vmul.f32 %v2200, %v1929
        %v2233 = vmul.f32 %v2201, %v1930
        %v2234 = vmul.f32 %v2202, %v1931
        %v2235 = vmul.f32 %v2203, %v1932
        %v2236 = vmul.f32 %v2204, %v1933
        %v2237 = vmul.f32 %v2205, %v1934
        %v2238 = vmul.f32 %v2206, %v1935
        %v2239 = vmul.f32 %v2207, %v1936
        %v2240 = vsub.f32 1.0, %v1969
        %v2241 = vsub.f32 1.0, %v1970
        %v2242 = vsub.f32 1.0, %v1971
        %v2243 = vsub.f32 1.0, %v1972
        %v2244 = vsub.f32 1.0, %v1973
        %v2245 = vsub.f32 1.0, %v1974
        %v2246 = vsub.f32 1.0, %v1975
        %v2247 = vsub.f32 1.0, %v1976
        %v2248 = vsub.f32 1.0, %v1977
        %v2249 = vsub.f32 1.0, %v1978
        %v2250 = vsub.f32 1.0, %v1979
        %v2251 = vsub.f32 1.0, %v1980
        %v2252 = vsub.f32 1.0, %v1981
        %v2253 = vsub.f32 1.0, %v1982
        %v2254 = vsub.f32 1.0, %v1983
        %v2255 = vsub.f32 1.0, %v1984
        %v2256 = vsub.f32 1.0, %v1985
        %v2257 = vsub.f32 1.0, %v1986
        %v2258 = vsub.f32 1.0, %v1987
        %v2259 = vsub.f32 1.0, %v1988
        %v2260 = vsub.f32 1.0, %v1989
        %v2261 = vsub.f32 1.0, %v1990
        %v2262 = vsub.f32 1.0, %v1991
        %v2263 = vsub.f32 1.0, %v1992
        %v2264 = vsub.f32 1.0, %v1993
        %v2265 = vsub.f32 1.0, %v1994
        %v2266 = vsub.f32 1.0, %v1995
        %v2267 = vsub.f32 1.0, %v1996
        %v2268 = vsub.f32 1.0, %v1997
        %v2269 = vsub.f32 1.0, %v1998
        %v2270 = vsub.f32 1.0, %v1999
        %v2271 = vsub.f32 1.0, %v2000
        %v2272 = vmul.f32 %v2240, %v2010
        %v2273 = vmul.f32 %v2241, %v2010
        %v2274 = vmul.f32 %v2242, %v2010
        %v2275 = vmul.f32 %v2243, %v2010
        %v2276 = vmul.f32 %v2244, %v2010
        %v2277 = vmul.f32 %v2245, %v2010
        %v2278 = vmul.f32 %v2246, %v2010
        %v2279 = vmul.f32 %v2247, %v2010
        %v2280 = vmul.f32 %v2248, %v2010
        %v2281 = vmul.f32 %v2249, %v2010
        %v2282 = vmul.f32 %v2250, %v2010
        %v2283 = vmul.f32 %v2251, %v2010
        %v2284 = vmul.f32 %v2252, %v2010
        %v2285 = vmul.f32 %v2253, %v2010
        %v2286 = vmul.f32 %v2254, %v2010
        %v2287 = vmul.f32 %v2255, %v2010
        %v2288 = vmul.f32 %v2256, %v2010
        %v2289 = vmul.f32 %v2257, %v2010
        %v2290 = vmul.f32 %v2258, %v2010
        %v2291 = vmul.f32 %v2259, %v2010
        %v2292 = vmul.f32 %v2260, %v2010
        %v2293 = vmul.f32 %v2261, %v2010
        %v2294 = vmul.f32 %v2262, %v2010
        %v2295 = vmul.f32 %v2263, %v2010
        %v2296 = vmul.f32 %v2264, %v2010
        %v2297 = vmul.f32 %v2265, %v2010
        %v2298 = vmul.f32 %v2266, %v2010
        %v2299 = vmul.f32 %v2267, %v2010
        %v2300 = vmul.f32 %v2268, %v2010
        %v2301 = vmul.f32 %v2269, %v2010
        %v2302 = vmul.f32 %v2270, %v2010
        %v2303 = vmul.f32 %v2271, %v2010
        %v2304 = vadd.f32 %v2208, %v2272
        %v2305 = vadd.f32 %v2209, %v2273
        %v2306 = vadd.f32 %v2210, %v2274
        %v2307 = vadd.f32 %v2211, %v2275
        %v2308 = vadd.f32 %v2212, %v2276
        %v2309 = vadd.f32 %v2213, %v2277
        %v2310 = vadd.f32 %v2214, %v2278
        %v2311 = vadd.f32 %v2215, %v2279
        %v2312 = vadd.f32 %v2216, %v2280
        %v2313 = vadd.f32 %v2217, %v2281
        %v2314 = vadd.f32 %v2218, %v2282
        %v2315 = vadd.f32 %v2219, %v2283
        %v2316 = vadd.f32 %v2220, %v2284
        %v2317 = vadd.f32 %v2221, %v2285
        %v2318 = vadd.f32 %v2222, %v2286
        %v2319 = vadd.f32 %v2223, %v2287
        %v2320 = vadd.f32 %v2224, %v2288
        %v2321 = vadd.f32 %v2225, %v2289
        %v2322 = vadd.f32 %v2226, %v2290
        %v2323 = vadd.f32 %v2227, %v2291
        %v2324 = vadd.f32 %v2228, %v2292
        %v2325 = vadd.f32 %v2229, %v2293
        %v2326 = vadd.f32 %v2230, %v2294
        %v2327 = vadd.f32 %v2231, %v2295
        %v2328 = vadd.f32 %v2232, %v2296
        %v2329 = vadd.f32 %v2233, %v2297
        %v2330 = vadd.f32 %v2234, %v2298
        %v2331 = vadd.f32 %v2235, %v2299
        %v2332 = vadd.f32 %v2236, %v2300
        %v2333 = vadd.f32 %v2237, %v2301
        %v2334 = vadd.f32 %v2238, %v2302
        %v2335 = vadd.f32 %v2239, %v2303
        %v2336 = vmul.f32 %v1969, %v2175
        %v2337 = vmul.f32 %v1970, %v2175
        %v2338 = vmul.f32 %v1971, %v2175
        %v2339 = vmul.f32 %v1972, %v2175
        %v2340 = vmul.f32 %v1973, %v2175
        %v2341 = vmul.f32 %v1974, %v2175
        %v2342 = vmul.f32 %v1975, %v2175
        %v2343 = vmul.f32 %v1976, %v2175
        %v2344 = vmul.f32 %v1977, %v2175
        %v2345 = vmul.f32 %v1978, %v2175
        %v2346 = vmul.f32 %v1979, %v2175
        %v2347 = vmul.f32 %v1980, %v2175
        %v2348 = vmul.f32 %v1981, %v2175
        %v2349 = vmul.f32 %v1982, %v2175
        %v2350 = vmul.f32 %v1983, %v2175
        %v2351 = vmul.f32 %v1984, %v2175
        %v2352 = vmul.f32 %v1985, %v2175
        %v2353 = vmul.f32 %v1986, %v2175
        %v2354 = vmul.f32 %v1987, %v2175
        %v2355 = vmul.f32 %v1988, %v2175
        %v2356 = vmul.f32 %v1989, %v2175
        %v2357 = vmul.f32 %v1990, %v2175
        %v2358 = vmul.f32 %v1991, %v2175
        %v2359 = vmul.f32 %v1992, %v2175
        %v2360 = vmul.f32 %v1993, %v2175
        %v2361 = vmul.f32 %v1994, %v2175
        %v2362 = vmul.f32 %v1995, %v2175
        %v2363 = vmul.f32 %v1996, %v2175
        %v2364 = vmul.f32 %v1997, %v2175
        %v2365 = vmul.f32 %v1998, %v2175
        %v2366 = vmul.f32 %v1999, %v2175
        %v2367 = vmul.f32 %v2000, %v2175
        %v2368 = vadd.f32 %v2140, %v2336
        %v2369 = vadd.f32 %v2141, %v2337
        %v2370 = vadd.f32 %v2142, %v2338
        %v2371 = vadd.f32 %v2143, %v2339
        %v2372 = vadd.f32 %v2144, %v2340
        %v2373 = vadd.f32 %v2145, %v2341
        %v2374 = vadd.f32 %v2146, %v2342
        %v2375 = vadd.f32 %v2147, %v2343
        %v2376 = vadd.f32 %v2148, %v2344
        %v2377 = vadd.f32 %v2149, %v2345
        %v2378 = vadd.f32 %v2150, %v2346
        %v2379 = vadd.f32 %v2151, %v2347
        %v2380 = vadd.f32 %v2152, %v2348
        %v2381 = vadd.f32 %v2153, %v2349
        %v2382 = vadd.f32 %v2154, %v2350
        %v2383 = vadd.f32 %v2155, %v2351
        %v2384 = vadd.f32 %v2156, %v2352
        %v2385 = vadd.f32 %v2157, %v2353
        %v2386 = vadd.f32 %v2158, %v2354
        %v2387 = vadd.f32 %v2159, %v2355
        %v2388 = vadd.f32 %v2160, %v2356
        %v2389 = vadd.f32 %v2161, %v2357
        %v2390 = vadd.f32 %v2162, %v2358
        %v2391 = vadd.f32 %v2163, %v2359
        %v2392 = vadd.f32 %v2164, %v2360
        %v2393 = vadd.f32 %v2165, %v2361
        %v2394 = vadd.f32 %v2166, %v2362
        %v2395 = vadd.f32 %v2167, %v2363
        %v2396 = vadd.f32 %v2168, %v2364
        %v2397 = vadd.f32 %v2169, %v2365
        %v2398 = vadd.f32 %v2170, %v2366
        %v2399 = vadd.f32 %v2171, %v2367
        %v2400 = vmax.f32 %v2368, 1e-15
        %v2401 = vmax.f32 %v2369, 1e-15
        %v2402 = vmax.f32 %v2370, 1e-15
        %v2403 = vmax.f32 %v2371, 1e-15
        %v2404 = vmax.f32 %v2372, 1e-15
        %v2405 = vmax.f32 %v2373, 1e-15
        %v2406 = vmax.f32 %v2374, 1e-15
        %v2407 = vmax.f32 %v2375, 1e-15
        %v2408 = vmax.f32 %v2376, 1e-15
        %v2409 = vmax.f32 %v2377, 1e-15
        %v2410 = vmax.f32 %v2378, 1e-15
        %v2411 = vmax.f32 %v2379, 1e-15
        %v2412 = vmax.f32 %v2380, 1e-15
        %v2413 = vmax.f32 %v2381, 1e-15
        %v2414 = vmax.f32 %v2382, 1e-15
        %v2415 = vmax.f32 %v2383, 1e-15
        %v2416 = vmax.f32 %v2384, 1e-15
        %v2417 = vmax.f32 %v2385, 1e-15
        %v2418 = vmax.f32 %v2386, 1e-15
        %v2419 = vmax.f32 %v2387, 1e-15
        %v2420 = vmax.f32 %v2388, 1e-15
        %v2421 = vmax.f32 %v2389, 1e-15
        %v2422 = vmax.f32 %v2390, 1e-15
        %v2423 = vmax.f32 %v2391, 1e-15
        %v2424 = vmax.f32 %v2392, 1e-15
        %v2425 = vmax.f32 %v2393, 1e-15
        %v2426 = vmax.f32 %v2394, 1e-15
        %v2427 = vmax.f32 %v2395, 1e-15
        %v2428 = vmax.f32 %v2396, 1e-15
        %v2429 = vmax.f32 %v2397, 1e-15
        %v2430 = vmax.f32 %v2398, 1e-15
        %v2431 = vmax.f32 %v2399, 1e-15
        %v2432 = vrcp.pop %v2400
        %v2433 = vmul.f32 1.0, %v2432
        %v2434 = vrcp.pop %v2401
        %v2435 = vmul.f32 1.0, %v2434
        %v2436 = vrcp.pop %v2402
        %v2437 = vmul.f32 1.0, %v2436
        %v2438 = vrcp.pop %v2403
        %v2439 = vmul.f32 1.0, %v2438
        %v2440 = vrcp.pop %v2404
        %v2441 = vmul.f32 1.0, %v2440
        %v2442 = vrcp.pop %v2405
        %v2443 = vmul.f32 1.0, %v2442
        %v2444 = vrcp.pop %v2406
        %v2445 = vmul.f32 1.0, %v2444
        %v2446 = vrcp.pop %v2407
        %v2447 = vmul.f32 1.0, %v2446
        %v2448 = vrcp.pop %v2408
        %v2449 = vmul.f32 1.0, %v2448
        %v2450 = vrcp.pop %v2409
        %v2451 = vmul.f32 1.0, %v2450
        %v2452 = vrcp.pop %v2410
        %v2453 = vmul.f32 1.0, %v2452
        %v2454 = vrcp.pop %v2411
        %v2455 = vmul.f32 1.0, %v2454
        %v2456 = vrcp.pop %v2412
        %v2457 = vmul.f32 1.0, %v2456
        %v2458 = vrcp.pop %v2413
        %v2459 = vmul.f32 1.0, %v2458
        %v2460 = vrcp.pop %v2414
        %v2461 = vmul.f32 1.0, %v2460
        %v2462 = vrcp.pop %v2415
        %v2463 = vmul.f32 1.0, %v2462
        %v2464 = vrcp.pop %v2416
        %v2465 = vmul.f32 1.0, %v2464
        %v2466 = vrcp.pop %v2417
        %v2467 = vmul.f32 1.0, %v2466
        %v2468 = vrcp.pop %v2418
        %v2469 = vmul.f32 1.0, %v2468
        %v2470 = vrcp.pop %v2419
        %v2471 = vmul.f32 1.0, %v2470
        %v2472 = vrcp.pop %v2420
        %v2473 = vmul.f32 1.0, %v2472
        %v2474 = vrcp.pop %v2421
        %v2475 = vmul.f32 1.0, %v2474
        %v2476 = vrcp.pop %v2422
        %v2477 = vmul.f32 1.0, %v2476
        %v2478 = vrcp.pop %v2423
        %v2479 = vmul.f32 1.0, %v2478
        %v2480 = vrcp.pop %v2424
        %v2481 = vmul.f32 1.0, %v2480
        %v2482 = vrcp.pop %v2425
        %v2483 = vmul.f32 1.0, %v2482
        %v2484 = vrcp.pop %v2426
        %v2485 = vmul.f32 1.0, %v2484
        %v2486 = vrcp.pop %v2427
        %v2487 = vmul.f32 1.0, %v2486
        %v2488 = vrcp.pop %v2428
        %v2489 = vmul.f32 1.0, %v2488
        %v2490 = vrcp.pop %v2429
        %v2491 = vmul.f32 1.0, %v2490
        %v2492 = vrcp.pop %v2430
        %v2493 = vmul.f32 1.0, %v2492
        %v2494 = vrcp.pop %v2431
        %v2495 = vmul.f32 1.0, %v2494
        %v2496 = vmul.f32 %v2304, %v2433
        %v2497 = vmul.f32 %v2305, %v2435
        %v2498 = vmul.f32 %v2306, %v2437
        %v2499 = vmul.f32 %v2307, %v2439
        %v2500 = vmul.f32 %v2308, %v2441
        %v2501 = vmul.f32 %v2309, %v2443
        %v2502 = vmul.f32 %v2310, %v2445
        %v2503 = vmul.f32 %v2311, %v2447
        %v2504 = vmul.f32 %v2312, %v2449
        %v2505 = vmul.f32 %v2313, %v2451
        %v2506 = vmul.f32 %v2314, %v2453
        %v2507 = vmul.f32 %v2315, %v2455
        %v2508 = vmul.f32 %v2316, %v2457
        %v2509 = vmul.f32 %v2317, %v2459
        %v2510 = vmul.f32 %v2318, %v2461
        %v2511 = vmul.f32 %v2319, %v2463
        %v2512 = vmul.f32 %v2320, %v2465
        %v2513 = vmul.f32 %v2321, %v2467
        %v2514 = vmul.f32 %v2322, %v2469
        %v2515 = vmul.f32 %v2323, %v2471
        %v2516 = vmul.f32 %v2324, %v2473
        %v2517 = vmul.f32 %v2325, %v2475
        %v2518 = vmul.f32 %v2326, %v2477
        %v2519 = vmul.f32 %v2327, %v2479
        %v2520 = vmul.f32 %v2328, %v2481
        %v2521 = vmul.f32 %v2329, %v2483
        %v2522 = vmul.f32 %v2330, %v2485
        %v2523 = vmul.f32 %v2331, %v2487
        %v2524 = vmul.f32 %v2332, %v2489
        %v2525 = vmul.f32 %v2333, %v2491
        %v2526 = vmul.f32 %v2334, %v2493
        %v2527 = vmul.f32 %v2335, %v2495
        %v2528 = vmul.f32 %v2496, %v2496
        %v2529 = vmul.f32 %v2497, %v2497
        %v2530 = vmul.f32 %v2498, %v2498
        %v2531 = vmul.f32 %v2499, %v2499
        %v2532 = vmul.f32 %v2500, %v2500
        %v2533 = vmul.f32 %v2501, %v2501
        %v2534 = vmul.f32 %v2502, %v2502
        %v2535 = vmul.f32 %v2503, %v2503
        %v2536 = vmul.f32 %v2504, %v2504
        %v2537 = vmul.f32 %v2505, %v2505
        %v2538 = vmul.f32 %v2506, %v2506
        %v2539 = vmul.f32 %v2507, %v2507
        %v2540 = vmul.f32 %v2508, %v2508
        %v2541 = vmul.f32 %v2509, %v2509
        %v2542 = vmul.f32 %v2510, %v2510
        %v2543 = vmul.f32 %v2511, %v2511
        %v2544 = vmul.f32 %v2512, %v2512
        %v2545 = vmul.f32 %v2513, %v2513
        %v2546 = vmul.f32 %v2514, %v2514
        %v2547 = vmul.f32 %v2515, %v2515
        %v2548 = vmul.f32 %v2516, %v2516
        %v2549 = vmul.f32 %v2517, %v2517
        %v2550 = vmul.f32 %v2518, %v2518
        %v2551 = vmul.f32 %v2519, %v2519
        %v2552 = vmul.f32 %v2520, %v2520
        %v2553 = vmul.f32 %v2521, %v2521
        %v2554 = vmul.f32 %v2522, %v2522
        %v2555 = vmul.f32 %v2523, %v2523
        %v2556 = vmul.f32 %v2524, %v2524
        %v2557 = vmul.f32 %v2525, %v2525
        %v2558 = vmul.f32 %v2526, %v2526
        %v2559 = vmul.f32 %v2527, %v2527
        %2560 = vadd.xlane.f32.xlu0 %v2528
        %v2561 = vpop.xlane.xlu0 %2560
        %2562 = vadd.xlane.f32.xlu0 %v2529
        %v2563 = vpop.xlane.xlu0 %2562
        %2564 = vadd.xlane.f32.xlu0 %v2530
        %v2565 = vpop.xlane.xlu0 %2564
        %2566 = vadd.xlane.f32.xlu0 %v2531
        %v2567 = vpop.xlane.xlu0 %2566
        %2568 = vadd.xlane.f32.xlu0 %v2532
        %v2569 = vpop.xlane.xlu0 %2568
        %2570 = vadd.xlane.f32.xlu0 %v2533
        %v2571 = vpop.xlane.xlu0 %2570
        %2572 = vadd.xlane.f32.xlu0 %v2534
        %v2573 = vpop.xlane.xlu0 %2572
        %2574 = vadd.xlane.f32.xlu0 %v2535
        %v2575 = vpop.xlane.xlu0 %2574
        %2576 = vadd.xlane.f32.xlu0 %v2536
        %v2577 = vpop.xlane.xlu0 %2576
        %2578 = vadd.xlane.f32.xlu0 %v2537
        %v2579 = vpop.xlane.xlu0 %2578
        %2580 = vadd.xlane.f32.xlu0 %v2538
        %v2581 = vpop.xlane.xlu0 %2580
        %2582 = vadd.xlane.f32.xlu0 %v2539
        %v2583 = vpop.xlane.xlu0 %2582
        %2584 = vadd.xlane.f32.xlu0 %v2540
        %v2585 = vpop.xlane.xlu0 %2584
        %2586 = vadd.xlane.f32.xlu0 %v2541
        %v2587 = vpop.xlane.xlu0 %2586
        %2588 = vadd.xlane.f32.xlu0 %v2542
        %v2589 = vpop.xlane.xlu0 %2588
        %2590 = vadd.xlane.f32.xlu0 %v2543
        %v2591 = vpop.xlane.xlu0 %2590
        %2592 = vadd.xlane.f32.xlu0 %v2544
        %v2593 = vpop.xlane.xlu0 %2592
        %2594 = vadd.xlane.f32.xlu0 %v2545
        %v2595 = vpop.xlane.xlu0 %2594
        %2596 = vadd.xlane.f32.xlu0 %v2546
        %v2597 = vpop.xlane.xlu0 %2596
        %2598 = vadd.xlane.f32.xlu0 %v2547
        %v2599 = vpop.xlane.xlu0 %2598
        %2600 = vadd.xlane.f32.xlu0 %v2548
        %v2601 = vpop.xlane.xlu0 %2600
        %2602 = vadd.xlane.f32.xlu0 %v2549
        %v2603 = vpop.xlane.xlu0 %2602
        %2604 = vadd.xlane.f32.xlu0 %v2550
        %v2605 = vpop.xlane.xlu0 %2604
        %2606 = vadd.xlane.f32.xlu0 %v2551
        %v2607 = vpop.xlane.xlu0 %2606
        %2608 = vadd.xlane.f32.xlu0 %v2552
        %v2609 = vpop.xlane.xlu0 %2608
        %2610 = vadd.xlane.f32.xlu0 %v2553
        %v2611 = vpop.xlane.xlu0 %2610
        %2612 = vadd.xlane.f32.xlu0 %v2554
        %v2613 = vpop.xlane.xlu0 %2612
        %2614 = vadd.xlane.f32.xlu0 %v2555
        %v2615 = vpop.xlane.xlu0 %2614
        %2616 = vadd.xlane.f32.xlu0 %v2556
        %v2617 = vpop.xlane.xlu0 %2616
        %2618 = vadd.xlane.f32.xlu0 %v2557
        %v2619 = vpop.xlane.xlu0 %2618
        %2620 = vadd.xlane.f32.xlu0 %v2558
        %v2621 = vpop.xlane.xlu0 %2620
        %2622 = vadd.xlane.f32.xlu0 %v2559
        %v2623 = vpop.xlane.xlu0 %2622
        %v2624 = vmax.f32 %v2561, 1e-30
        %v2625 = vmax.f32 %v2563, 1e-30
        %v2626 = vmax.f32 %v2565, 1e-30
        %v2627 = vmax.f32 %v2567, 1e-30
        %v2628 = vmax.f32 %v2569, 1e-30
        %v2629 = vmax.f32 %v2571, 1e-30
        %v2630 = vmax.f32 %v2573, 1e-30
        %v2631 = vmax.f32 %v2575, 1e-30
        %v2632 = vmax.f32 %v2577, 1e-30
        %v2633 = vmax.f32 %v2579, 1e-30
        %v2634 = vmax.f32 %v2581, 1e-30
        %v2635 = vmax.f32 %v2583, 1e-30
        %v2636 = vmax.f32 %v2585, 1e-30
        %v2637 = vmax.f32 %v2587, 1e-30
        %v2638 = vmax.f32 %v2589, 1e-30
        %v2639 = vmax.f32 %v2591, 1e-30
        %v2640 = vmax.f32 %v2593, 1e-30
        %v2641 = vmax.f32 %v2595, 1e-30
        %v2642 = vmax.f32 %v2597, 1e-30
        %v2643 = vmax.f32 %v2599, 1e-30
        %v2644 = vmax.f32 %v2601, 1e-30
        %v2645 = vmax.f32 %v2603, 1e-30
        %v2646 = vmax.f32 %v2605, 1e-30
        %v2647 = vmax.f32 %v2607, 1e-30
        %v2648 = vmax.f32 %v2609, 1e-30
        %v2649 = vmax.f32 %v2611, 1e-30
        %v2650 = vmax.f32 %v2613, 1e-30
        %v2651 = vmax.f32 %v2615, 1e-30
        %v2652 = vmax.f32 %v2617, 1e-30
        %v2653 = vmax.f32 %v2619, 1e-30
        %v2654 = vmax.f32 %v2621, 1e-30
        %v2655 = vmax.f32 %v2623, 1e-30
        %v2656 = vrsqrt.pop %v2624
        %v2657 = vmul.f32 %v2624, %v2656
        %vm2658 = vcmp.eq.f32.partialorder %v2624, inf
        %v2659 = vsel %vm2658, %v2624, %v2657
        %vm2660 = vcmp.eq.f32.partialorder %v2624, 0.0
        %v2661 = vand.u32 %v2624, 2147483648
        %v2662 = vsel %vm2660, %v2661, %v2659
        %v2663 = vrsqrt.pop %v2625
        %v2664 = vmul.f32 %v2625, %v2663
        %vm2665 = vcmp.eq.f32.partialorder %v2625, inf
        %v2666 = vsel %vm2665, %v2625, %v2664
        %vm2667 = vcmp.eq.f32.partialorder %v2625, 0.0
        %v2668 = vand.u32 %v2625, 2147483648
        %v2669 = vsel %vm2667, %v2668, %v2666
        %v2670 = vrsqrt.pop %v2626
        %v2671 = vmul.f32 %v2626, %v2670
        %vm2672 = vcmp.eq.f32.partialorder %v2626, inf
        %v2673 = vsel %vm2672, %v2626, %v2671
        %vm2674 = vcmp.eq.f32.partialorder %v2626, 0.0
        %v2675 = vand.u32 %v2626, 2147483648
        %v2676 = vsel %vm2674, %v2675, %v2673
        %v2677 = vrsqrt.pop %v2627
        %v2678 = vmul.f32 %v2627, %v2677
        %vm2679 = vcmp.eq.f32.partialorder %v2627, inf
        %v2680 = vsel %vm2679, %v2627, %v2678
        %vm2681 = vcmp.eq.f32.partialorder %v2627, 0.0
        %v2682 = vand.u32 %v2627, 2147483648
        %v2683 = vsel %vm2681, %v2682, %v2680
        %v2684 = vrsqrt.pop %v2628
        %v2685 = vmul.f32 %v2628, %v2684
        %vm2686 = vcmp.eq.f32.partialorder %v2628, inf
        %v2687 = vsel %vm2686, %v2628, %v2685
        %vm2688 = vcmp.eq.f32.partialorder %v2628, 0.0
        %v2689 = vand.u32 %v2628, 2147483648
        %v2690 = vsel %vm2688, %v2689, %v2687
        %v2691 = vrsqrt.pop %v2629
        %v2692 = vmul.f32 %v2629, %v2691
        %vm2693 = vcmp.eq.f32.partialorder %v2629, inf
        %v2694 = vsel %vm2693, %v2629, %v2692
        %vm2695 = vcmp.eq.f32.partialorder %v2629, 0.0
        %v2696 = vand.u32 %v2629, 2147483648
        %v2697 = vsel %vm2695, %v2696, %v2694
        %v2698 = vrsqrt.pop %v2630
        %v2699 = vmul.f32 %v2630, %v2698
        %vm2700 = vcmp.eq.f32.partialorder %v2630, inf
        %v2701 = vsel %vm2700, %v2630, %v2699
        %vm2702 = vcmp.eq.f32.partialorder %v2630, 0.0
        %v2703 = vand.u32 %v2630, 2147483648
        %v2704 = vsel %vm2702, %v2703, %v2701
        %v2705 = vrsqrt.pop %v2631
        %v2706 = vmul.f32 %v2631, %v2705
        %vm2707 = vcmp.eq.f32.partialorder %v2631, inf
        %v2708 = vsel %vm2707, %v2631, %v2706
        %vm2709 = vcmp.eq.f32.partialorder %v2631, 0.0
        %v2710 = vand.u32 %v2631, 2147483648
        %v2711 = vsel %vm2709, %v2710, %v2708
        %v2712 = vrsqrt.pop %v2632
        %v2713 = vmul.f32 %v2632, %v2712
        %vm2714 = vcmp.eq.f32.partialorder %v2632, inf
        %v2715 = vsel %vm2714, %v2632, %v2713
        %vm2716 = vcmp.eq.f32.partialorder %v2632, 0.0
        %v2717 = vand.u32 %v2632, 2147483648
        %v2718 = vsel %vm2716, %v2717, %v2715
        %v2719 = vrsqrt.pop %v2633
        %v2720 = vmul.f32 %v2633, %v2719
        %vm2721 = vcmp.eq.f32.partialorder %v2633, inf
        %v2722 = vsel %vm2721, %v2633, %v2720
        %vm2723 = vcmp.eq.f32.partialorder %v2633, 0.0
        %v2724 = vand.u32 %v2633, 2147483648
        %v2725 = vsel %vm2723, %v2724, %v2722
        %v2726 = vrsqrt.pop %v2634
        %v2727 = vmul.f32 %v2634, %v2726
        %vm2728 = vcmp.eq.f32.partialorder %v2634, inf
        %v2729 = vsel %vm2728, %v2634, %v2727
        %vm2730 = vcmp.eq.f32.partialorder %v2634, 0.0
        %v2731 = vand.u32 %v2634, 2147483648
        %v2732 = vsel %vm2730, %v2731, %v2729
        %v2733 = vrsqrt.pop %v2635
        %v2734 = vmul.f32 %v2635, %v2733
        %vm2735 = vcmp.eq.f32.partialorder %v2635, inf
        %v2736 = vsel %vm2735, %v2635, %v2734
        %vm2737 = vcmp.eq.f32.partialorder %v2635, 0.0
        %v2738 = vand.u32 %v2635, 2147483648
        %v2739 = vsel %vm2737, %v2738, %v2736
        %v2740 = vrsqrt.pop %v2636
        %v2741 = vmul.f32 %v2636, %v2740
        %vm2742 = vcmp.eq.f32.partialorder %v2636, inf
        %v2743 = vsel %vm2742, %v2636, %v2741
        %vm2744 = vcmp.eq.f32.partialorder %v2636, 0.0
        %v2745 = vand.u32 %v2636, 2147483648
        %v2746 = vsel %vm2744, %v2745, %v2743
        %v2747 = vrsqrt.pop %v2637
        %v2748 = vmul.f32 %v2637, %v2747
        %vm2749 = vcmp.eq.f32.partialorder %v2637, inf
        %v2750 = vsel %vm2749, %v2637, %v2748
        %vm2751 = vcmp.eq.f32.partialorder %v2637, 0.0
        %v2752 = vand.u32 %v2637, 2147483648
        %v2753 = vsel %vm2751, %v2752, %v2750
        %v2754 = vrsqrt.pop %v2638
        %v2755 = vmul.f32 %v2638, %v2754
        %vm2756 = vcmp.eq.f32.partialorder %v2638, inf
        %v2757 = vsel %vm2756, %v2638, %v2755
        %vm2758 = vcmp.eq.f32.partialorder %v2638, 0.0
        %v2759 = vand.u32 %v2638, 2147483648
        %v2760 = vsel %vm2758, %v2759, %v2757
        %v2761 = vrsqrt.pop %v2639
        %v2762 = vmul.f32 %v2639, %v2761
        %vm2763 = vcmp.eq.f32.partialorder %v2639, inf
        %v2764 = vsel %vm2763, %v2639, %v2762
        %vm2765 = vcmp.eq.f32.partialorder %v2639, 0.0
        %v2766 = vand.u32 %v2639, 2147483648
        %v2767 = vsel %vm2765, %v2766, %v2764
        %v2768 = vrsqrt.pop %v2640
        %v2769 = vmul.f32 %v2640, %v2768
        %vm2770 = vcmp.eq.f32.partialorder %v2640, inf
        %v2771 = vsel %vm2770, %v2640, %v2769
        %vm2772 = vcmp.eq.f32.partialorder %v2640, 0.0
        %v2773 = vand.u32 %v2640, 2147483648
        %v2774 = vsel %vm2772, %v2773, %v2771
        %v2775 = vrsqrt.pop %v2641
        %v2776 = vmul.f32 %v2641, %v2775
        %vm2777 = vcmp.eq.f32.partialorder %v2641, inf
        %v2778 = vsel %vm2777, %v2641, %v2776
        %vm2779 = vcmp.eq.f32.partialorder %v2641, 0.0
        %v2780 = vand.u32 %v2641, 2147483648
        %v2781 = vsel %vm2779, %v2780, %v2778
        %v2782 = vrsqrt.pop %v2642
        %v2783 = vmul.f32 %v2642, %v2782
        %vm2784 = vcmp.eq.f32.partialorder %v2642, inf
        %v2785 = vsel %vm2784, %v2642, %v2783
        %vm2786 = vcmp.eq.f32.partialorder %v2642, 0.0
        %v2787 = vand.u32 %v2642, 2147483648
        %v2788 = vsel %vm2786, %v2787, %v2785
        %v2789 = vrsqrt.pop %v2643
        %v2790 = vmul.f32 %v2643, %v2789
        %vm2791 = vcmp.eq.f32.partialorder %v2643, inf
        %v2792 = vsel %vm2791, %v2643, %v2790
        %vm2793 = vcmp.eq.f32.partialorder %v2643, 0.0
        %v2794 = vand.u32 %v2643, 2147483648
        %v2795 = vsel %vm2793, %v2794, %v2792
        %v2796 = vrsqrt.pop %v2644
        %v2797 = vmul.f32 %v2644, %v2796
        %vm2798 = vcmp.eq.f32.partialorder %v2644, inf
        %v2799 = vsel %vm2798, %v2644, %v2797
        %vm2800 = vcmp.eq.f32.partialorder %v2644, 0.0
        %v2801 = vand.u32 %v2644, 2147483648
        %v2802 = vsel %vm2800, %v2801, %v2799
        %v2803 = vrsqrt.pop %v2645
        %v2804 = vmul.f32 %v2645, %v2803
        %vm2805 = vcmp.eq.f32.partialorder %v2645, inf
        %v2806 = vsel %vm2805, %v2645, %v2804
        %vm2807 = vcmp.eq.f32.partialorder %v2645, 0.0
        %v2808 = vand.u32 %v2645, 2147483648
        %v2809 = vsel %vm2807, %v2808, %v2806
        %v2810 = vrsqrt.pop %v2646
        %v2811 = vmul.f32 %v2646, %v2810
        %vm2812 = vcmp.eq.f32.partialorder %v2646, inf
        %v2813 = vsel %vm2812, %v2646, %v2811
        %vm2814 = vcmp.eq.f32.partialorder %v2646, 0.0
        %v2815 = vand.u32 %v2646, 2147483648
        %v2816 = vsel %vm2814, %v2815, %v2813
        %v2817 = vrsqrt.pop %v2647
        %v2818 = vmul.f32 %v2647, %v2817
        %vm2819 = vcmp.eq.f32.partialorder %v2647, inf
        %v2820 = vsel %vm2819, %v2647, %v2818
        %vm2821 = vcmp.eq.f32.partialorder %v2647, 0.0
        %v2822 = vand.u32 %v2647, 2147483648
        %v2823 = vsel %vm2821, %v2822, %v2820
        %v2824 = vrsqrt.pop %v2648
        %v2825 = vmul.f32 %v2648, %v2824
        %vm2826 = vcmp.eq.f32.partialorder %v2648, inf
        %v2827 = vsel %vm2826, %v2648, %v2825
        %vm2828 = vcmp.eq.f32.partialorder %v2648, 0.0
        %v2829 = vand.u32 %v2648, 2147483648
        %v2830 = vsel %vm2828, %v2829, %v2827
        %v2831 = vrsqrt.pop %v2649
        %v2832 = vmul.f32 %v2649, %v2831
        %vm2833 = vcmp.eq.f32.partialorder %v2649, inf
        %v2834 = vsel %vm2833, %v2649, %v2832
        %vm2835 = vcmp.eq.f32.partialorder %v2649, 0.0
        %v2836 = vand.u32 %v2649, 2147483648
        %v2837 = vsel %vm2835, %v2836, %v2834
        %v2838 = vrsqrt.pop %v2650
        %v2839 = vmul.f32 %v2650, %v2838
        %vm2840 = vcmp.eq.f32.partialorder %v2650, inf
        %v2841 = vsel %vm2840, %v2650, %v2839
        %vm2842 = vcmp.eq.f32.partialorder %v2650, 0.0
        %v2843 = vand.u32 %v2650, 2147483648
        %v2844 = vsel %vm2842, %v2843, %v2841
        %v2845 = vrsqrt.pop %v2651
        %v2846 = vmul.f32 %v2651, %v2845
        %vm2847 = vcmp.eq.f32.partialorder %v2651, inf
        %v2848 = vsel %vm2847, %v2651, %v2846
        %vm2849 = vcmp.eq.f32.partialorder %v2651, 0.0
        %v2850 = vand.u32 %v2651, 2147483648
        %v2851 = vsel %vm2849, %v2850, %v2848
        %v2852 = vrsqrt.pop %v2652
        %v2853 = vmul.f32 %v2652, %v2852
        %vm2854 = vcmp.eq.f32.partialorder %v2652, inf
        %v2855 = vsel %vm2854, %v2652, %v2853
        %vm2856 = vcmp.eq.f32.partialorder %v2652, 0.0
        %v2857 = vand.u32 %v2652, 2147483648
        %v2858 = vsel %vm2856, %v2857, %v2855
        %v2859 = vrsqrt.pop %v2653
        %v2860 = vmul.f32 %v2653, %v2859
        %vm2861 = vcmp.eq.f32.partialorder %v2653, inf
        %v2862 = vsel %vm2861, %v2653, %v2860
        %vm2863 = vcmp.eq.f32.partialorder %v2653, 0.0
        %v2864 = vand.u32 %v2653, 2147483648
        %v2865 = vsel %vm2863, %v2864, %v2862
        %v2866 = vrsqrt.pop %v2654
        %v2867 = vmul.f32 %v2654, %v2866
        %vm2868 = vcmp.eq.f32.partialorder %v2654, inf
        %v2869 = vsel %vm2868, %v2654, %v2867
        %vm2870 = vcmp.eq.f32.partialorder %v2654, 0.0
        %v2871 = vand.u32 %v2654, 2147483648
        %v2872 = vsel %vm2870, %v2871, %v2869
        %v2873 = vrsqrt.pop %v2655
        %v2874 = vmul.f32 %v2655, %v2873
        %vm2875 = vcmp.eq.f32.partialorder %v2655, inf
        %v2876 = vsel %vm2875, %v2655, %v2874
        %vm2877 = vcmp.eq.f32.partialorder %v2655, 0.0
        %v2878 = vand.u32 %v2655, 2147483648
        %v2879 = vsel %vm2877, %v2878, %v2876
        %v2880 = vrsqrt.pop %v2624
        %v2881 = vrsqrt.pop %v2625
        %v2882 = vrsqrt.pop %v2626
        %v2883 = vrsqrt.pop %v2627
        %v2884 = vrsqrt.pop %v2628
        %v2885 = vrsqrt.pop %v2629
        %v2886 = vrsqrt.pop %v2630
        %v2887 = vrsqrt.pop %v2631
        %v2888 = vrsqrt.pop %v2632
        %v2889 = vrsqrt.pop %v2633
        %v2890 = vrsqrt.pop %v2634
        %v2891 = vrsqrt.pop %v2635
        %v2892 = vrsqrt.pop %v2636
        %v2893 = vrsqrt.pop %v2637
        %v2894 = vrsqrt.pop %v2638
        %v2895 = vrsqrt.pop %v2639
        %v2896 = vrsqrt.pop %v2640
        %v2897 = vrsqrt.pop %v2641
        %v2898 = vrsqrt.pop %v2642
        %v2899 = vrsqrt.pop %v2643
        %v2900 = vrsqrt.pop %v2644
        %v2901 = vrsqrt.pop %v2645
        %v2902 = vrsqrt.pop %v2646
        %v2903 = vrsqrt.pop %v2647
        %v2904 = vrsqrt.pop %v2648
        %v2905 = vrsqrt.pop %v2649
        %v2906 = vrsqrt.pop %v2650
        %v2907 = vrsqrt.pop %v2651
        %v2908 = vrsqrt.pop %v2652
        %v2909 = vrsqrt.pop %v2653
        %v2910 = vrsqrt.pop %v2654
        %v2911 = vrsqrt.pop %v2655
        %vm2912 = vcmp.gt.f32.partialorder %v2662, 0.996
        %vm2913 = vcmp.gt.f32.partialorder %v2669, 0.996
        %vm2914 = vcmp.gt.f32.partialorder %v2676, 0.996
        %vm2915 = vcmp.gt.f32.partialorder %v2683, 0.996
        %vm2916 = vcmp.gt.f32.partialorder %v2690, 0.996
        %vm2917 = vcmp.gt.f32.partialorder %v2697, 0.996
        %vm2918 = vcmp.gt.f32.partialorder %v2704, 0.996
        %vm2919 = vcmp.gt.f32.partialorder %v2711, 0.996
        %vm2920 = vcmp.gt.f32.partialorder %v2718, 0.996
        %vm2921 = vcmp.gt.f32.partialorder %v2725, 0.996
        %vm2922 = vcmp.gt.f32.partialorder %v2732, 0.996
        %vm2923 = vcmp.gt.f32.partialorder %v2739, 0.996
        %vm2924 = vcmp.gt.f32.partialorder %v2746, 0.996
        %vm2925 = vcmp.gt.f32.partialorder %v2753, 0.996
        %vm2926 = vcmp.gt.f32.partialorder %v2760, 0.996
        %vm2927 = vcmp.gt.f32.partialorder %v2767, 0.996
        %vm2928 = vcmp.gt.f32.partialorder %v2774, 0.996
        %vm2929 = vcmp.gt.f32.partialorder %v2781, 0.996
        %vm2930 = vcmp.gt.f32.partialorder %v2788, 0.996
        %vm2931 = vcmp.gt.f32.partialorder %v2795, 0.996
        %vm2932 = vcmp.gt.f32.partialorder %v2802, 0.996
        %vm2933 = vcmp.gt.f32.partialorder %v2809, 0.996
        %vm2934 = vcmp.gt.f32.partialorder %v2816, 0.996
        %vm2935 = vcmp.gt.f32.partialorder %v2823, 0.996
        %vm2936 = vcmp.gt.f32.partialorder %v2830, 0.996
        %vm2937 = vcmp.gt.f32.partialorder %v2837, 0.996
        %vm2938 = vcmp.gt.f32.partialorder %v2844, 0.996
        %vm2939 = vcmp.gt.f32.partialorder %v2851, 0.996
        %vm2940 = vcmp.gt.f32.partialorder %v2858, 0.996
        %vm2941 = vcmp.gt.f32.partialorder %v2865, 0.996
        %vm2942 = vcmp.gt.f32.partialorder %v2872, 0.996
        %vm2943 = vcmp.gt.f32.partialorder %v2879, 0.996
        %v2944 = vmul.f32 %v2880, 0.996
        %v2945 = vmul.f32 %v2881, 0.996
        %v2946 = vmul.f32 %v2882, 0.996
        %v2947 = vmul.f32 %v2883, 0.996
        %v2948 = vmul.f32 %v2884, 0.996
        %v2949 = vmul.f32 %v2885, 0.996
        %v2950 = vmul.f32 %v2886, 0.996
        %v2951 = vmul.f32 %v2887, 0.996
        %v2952 = vmul.f32 %v2888, 0.996
        %v2953 = vmul.f32 %v2889, 0.996
        %v2954 = vmul.f32 %v2890, 0.996
        %v2955 = vmul.f32 %v2891, 0.996
        %v2956 = vmul.f32 %v2892, 0.996
        %v2957 = vmul.f32 %v2893, 0.996
        %v2958 = vmul.f32 %v2894, 0.996
        %v2959 = vmul.f32 %v2895, 0.996
        %v2960 = vmul.f32 %v2896, 0.996
        %v2961 = vmul.f32 %v2897, 0.996
        %v2962 = vmul.f32 %v2898, 0.996
        %v2963 = vmul.f32 %v2899, 0.996
        %v2964 = vmul.f32 %v2900, 0.996
        %v2965 = vmul.f32 %v2901, 0.996
        %v2966 = vmul.f32 %v2902, 0.996
        %v2967 = vmul.f32 %v2903, 0.996
        %v2968 = vmul.f32 %v2904, 0.996
        %v2969 = vmul.f32 %v2905, 0.996
        %v2970 = vmul.f32 %v2906, 0.996
        %v2971 = vmul.f32 %v2907, 0.996
        %v2972 = vmul.f32 %v2908, 0.996
        %v2973 = vmul.f32 %v2909, 0.996
        %v2974 = vmul.f32 %v2910, 0.996
        %v2975 = vmul.f32 %v2911, 0.996
        %v2976 = vmul.f32 %v2944, %v2496
        %v2977 = vmul.f32 %v2945, %v2497
        %v2978 = vmul.f32 %v2946, %v2498
        %v2979 = vmul.f32 %v2947, %v2499
        %v2980 = vmul.f32 %v2948, %v2500
        %v2981 = vmul.f32 %v2949, %v2501
        %v2982 = vmul.f32 %v2950, %v2502
        %v2983 = vmul.f32 %v2951, %v2503
        %v2984 = vmul.f32 %v2952, %v2504
        %v2985 = vmul.f32 %v2953, %v2505
        %v2986 = vmul.f32 %v2954, %v2506
        %v2987 = vmul.f32 %v2955, %v2507
        %v2988 = vmul.f32 %v2956, %v2508
        %v2989 = vmul.f32 %v2957, %v2509
        %v2990 = vmul.f32 %v2958, %v2510
        %v2991 = vmul.f32 %v2959, %v2511
        %v2992 = vmul.f32 %v2960, %v2512
        %v2993 = vmul.f32 %v2961, %v2513
        %v2994 = vmul.f32 %v2962, %v2514
        %v2995 = vmul.f32 %v2963, %v2515
        %v2996 = vmul.f32 %v2964, %v2516
        %v2997 = vmul.f32 %v2965, %v2517
        %v2998 = vmul.f32 %v2966, %v2518
        %v2999 = vmul.f32 %v2967, %v2519
        %v3000 = vmul.f32 %v2968, %v2520
        %v3001 = vmul.f32 %v2969, %v2521
        %v3002 = vmul.f32 %v2970, %v2522
        %v3003 = vmul.f32 %v2971, %v2523
        %v3004 = vmul.f32 %v2972, %v2524
        %v3005 = vmul.f32 %v2973, %v2525
        %v3006 = vmul.f32 %v2974, %v2526
        %v3007 = vmul.f32 %v2975, %v2527
        %v3008 = vsel %vm2912, 1, 0
        %v3009 = vsel %vm2913, 1, 0
        %v3010 = vsel %vm2914, 1, 0
        %v3011 = vsel %vm2915, 1, 0
        %v3012 = vsel %vm2916, 1, 0
        %v3013 = vsel %vm2917, 1, 0
        %v3014 = vsel %vm2918, 1, 0
        %v3015 = vsel %vm2919, 1, 0
        %v3016 = vsel %vm2920, 1, 0
        %v3017 = vsel %vm2921, 1, 0
        %v3018 = vsel %vm2922, 1, 0
        %v3019 = vsel %vm2923, 1, 0
        %v3020 = vsel %vm2924, 1, 0
        %v3021 = vsel %vm2925, 1, 0
        %v3022 = vsel %vm2926, 1, 0
        %v3023 = vsel %vm2927, 1, 0
        %v3024 = vsel %vm2928, 1, 0
        %v3025 = vsel %vm2929, 1, 0
        %v3026 = vsel %vm2930, 1, 0
        %v3027 = vsel %vm2931, 1, 0
        %v3028 = vsel %vm2932, 1, 0
        %v3029 = vsel %vm2933, 1, 0
        %v3030 = vsel %vm2934, 1, 0
        %v3031 = vsel %vm2935, 1, 0
        %v3032 = vsel %vm2936, 1, 0
        %v3033 = vsel %vm2937, 1, 0
        %v3034 = vsel %vm2938, 1, 0
        %v3035 = vsel %vm2939, 1, 0
        %v3036 = vsel %vm2940, 1, 0
        %v3037 = vsel %vm2941, 1, 0
        %v3038 = vsel %vm2942, 1, 0
        %v3039 = vsel %vm2943, 1, 0
        %vm3040 = vcmp.eq.s32.totalorder %v3008, 1
        %vm3041 = vcmp.eq.s32.totalorder %v3009, 1
        %vm3042 = vcmp.eq.s32.totalorder %v3010, 1
        %vm3043 = vcmp.eq.s32.totalorder %v3011, 1
        %vm3044 = vcmp.eq.s32.totalorder %v3012, 1
        %vm3045 = vcmp.eq.s32.totalorder %v3013, 1
        %vm3046 = vcmp.eq.s32.totalorder %v3014, 1
        %vm3047 = vcmp.eq.s32.totalorder %v3015, 1
        %vm3048 = vcmp.eq.s32.totalorder %v3016, 1
        %vm3049 = vcmp.eq.s32.totalorder %v3017, 1
        %vm3050 = vcmp.eq.s32.totalorder %v3018, 1
        %vm3051 = vcmp.eq.s32.totalorder %v3019, 1
        %vm3052 = vcmp.eq.s32.totalorder %v3020, 1
        %vm3053 = vcmp.eq.s32.totalorder %v3021, 1
        %vm3054 = vcmp.eq.s32.totalorder %v3022, 1
        %vm3055 = vcmp.eq.s32.totalorder %v3023, 1
        %vm3056 = vcmp.eq.s32.totalorder %v3024, 1
        %vm3057 = vcmp.eq.s32.totalorder %v3025, 1
        %vm3058 = vcmp.eq.s32.totalorder %v3026, 1
        %vm3059 = vcmp.eq.s32.totalorder %v3027, 1
        %vm3060 = vcmp.eq.s32.totalorder %v3028, 1
        %vm3061 = vcmp.eq.s32.totalorder %v3029, 1
        %vm3062 = vcmp.eq.s32.totalorder %v3030, 1
        %vm3063 = vcmp.eq.s32.totalorder %v3031, 1
        %vm3064 = vcmp.eq.s32.totalorder %v3032, 1
        %vm3065 = vcmp.eq.s32.totalorder %v3033, 1
        %vm3066 = vcmp.eq.s32.totalorder %v3034, 1
        %vm3067 = vcmp.eq.s32.totalorder %v3035, 1
        %vm3068 = vcmp.eq.s32.totalorder %v3036, 1
        %vm3069 = vcmp.eq.s32.totalorder %v3037, 1
        %vm3070 = vcmp.eq.s32.totalorder %v3038, 1
        %vm3071 = vcmp.eq.s32.totalorder %v3039, 1
        %v3072 = vsel %vm3040, %v2976, %v2496
        %v3073 = vsel %vm3041, %v2977, %v2497
        %v3074 = vsel %vm3042, %v2978, %v2498
        %v3075 = vsel %vm3043, %v2979, %v2499
        %v3076 = vsel %vm3044, %v2980, %v2500
        %v3077 = vsel %vm3045, %v2981, %v2501
        %v3078 = vsel %vm3046, %v2982, %v2502
        %v3079 = vsel %vm3047, %v2983, %v2503
        %v3080 = vsel %vm3048, %v2984, %v2504
        %v3081 = vsel %vm3049, %v2985, %v2505
        %v3082 = vsel %vm3050, %v2986, %v2506
        %v3083 = vsel %vm3051, %v2987, %v2507
        %v3084 = vsel %vm3052, %v2988, %v2508
        %v3085 = vsel %vm3053, %v2989, %v2509
        %v3086 = vsel %vm3054, %v2990, %v2510
        %v3087 = vsel %vm3055, %v2991, %v2511
        %v3088 = vsel %vm3056, %v2992, %v2512
        %v3089 = vsel %vm3057, %v2993, %v2513
        %v3090 = vsel %vm3058, %v2994, %v2514
        %v3091 = vsel %vm3059, %v2995, %v2515
        %v3092 = vsel %vm3060, %v2996, %v2516
        %v3093 = vsel %vm3061, %v2997, %v2517
        %v3094 = vsel %vm3062, %v2998, %v2518
        %v3095 = vsel %vm3063, %v2999, %v2519
        %v3096 = vsel %vm3064, %v3000, %v2520
        %v3097 = vsel %vm3065, %v3001, %v2521
        %v3098 = vsel %vm3066, %v3002, %v2522
        %v3099 = vsel %vm3067, %v3003, %v2523
        %v3100 = vsel %vm3068, %v3004, %v2524
        %v3101 = vsel %vm3069, %v3005, %v2525
        %v3102 = vsel %vm3070, %v3006, %v2526
        %v3103 = vsel %vm3071, %v3007, %v2527
        %v3104 = vmin.f32 %v2662, 0.996
        %v3105 = vmin.f32 %v2669, 0.996
        %v3106 = vmin.f32 %v2676, 0.996
        %v3107 = vmin.f32 %v2683, 0.996
        %v3108 = vmin.f32 %v2690, 0.996
        %v3109 = vmin.f32 %v2697, 0.996
        %v3110 = vmin.f32 %v2704, 0.996
        %v3111 = vmin.f32 %v2711, 0.996
        %v3112 = vmin.f32 %v2718, 0.996
        %v3113 = vmin.f32 %v2725, 0.996
        %v3114 = vmin.f32 %v2732, 0.996
        %v3115 = vmin.f32 %v2739, 0.996
        %v3116 = vmin.f32 %v2746, 0.996
        %v3117 = vmin.f32 %v2753, 0.996
        %v3118 = vmin.f32 %v2760, 0.996
        %v3119 = vmin.f32 %v2767, 0.996
        %v3120 = vmin.f32 %v2774, 0.996
        %v3121 = vmin.f32 %v2781, 0.996
        %v3122 = vmin.f32 %v2788, 0.996
        %v3123 = vmin.f32 %v2795, 0.996
        %v3124 = vmin.f32 %v2802, 0.996
        %v3125 = vmin.f32 %v2809, 0.996
        %v3126 = vmin.f32 %v2816, 0.996
        %v3127 = vmin.f32 %v2823, 0.996
        %v3128 = vmin.f32 %v2830, 0.996
        %v3129 = vmin.f32 %v2837, 0.996
        %v3130 = vmin.f32 %v2844, 0.996
        %v3131 = vmin.f32 %v2851, 0.996
        %v3132 = vmin.f32 %v2858, 0.996
        %v3133 = vmin.f32 %v2865, 0.996
        %v3134 = vmin.f32 %v2872, 0.996
        %v3135 = vmin.f32 %v2879, 0.996
        %v3136 = vmax.f32 %v3104, -0.9999999
        %v3137 = vmax.f32 %v3105, -0.9999999
        %v3138 = vmax.f32 %v3106, -0.9999999
        %v3139 = vmax.f32 %v3107, -0.9999999
        %v3140 = vmax.f32 %v3108, -0.9999999
        %v3141 = vmax.f32 %v3109, -0.9999999
        %v3142 = vmax.f32 %v3110, -0.9999999
        %v3143 = vmax.f32 %v3111, -0.9999999
        %v3144 = vmax.f32 %v3112, -0.9999999
        %v3145 = vmax.f32 %v3113, -0.9999999
        %v3146 = vmax.f32 %v3114, -0.9999999
        %v3147 = vmax.f32 %v3115, -0.9999999
        %v3148 = vmax.f32 %v3116, -0.9999999
        %v3149 = vmax.f32 %v3117, -0.9999999
        %v3150 = vmax.f32 %v3118, -0.9999999
        %v3151 = vmax.f32 %v3119, -0.9999999
        %v3152 = vmax.f32 %v3120, -0.9999999
        %v3153 = vmax.f32 %v3121, -0.9999999
        %v3154 = vmax.f32 %v3122, -0.9999999
        %v3155 = vmax.f32 %v3123, -0.9999999
        %v3156 = vmax.f32 %v3124, -0.9999999
        %v3157 = vmax.f32 %v3125, -0.9999999
        %v3158 = vmax.f32 %v3126, -0.9999999
        %v3159 = vmax.f32 %v3127, -0.9999999
        %v3160 = vmax.f32 %v3128, -0.9999999
        %v3161 = vmax.f32 %v3129, -0.9999999
        %v3162 = vmax.f32 %v3130, -0.9999999
        %v3163 = vmax.f32 %v3131, -0.9999999
        %v3164 = vmax.f32 %v3132, -0.9999999
        %v3165 = vmax.f32 %v3133, -0.9999999
        %v3166 = vmax.f32 %v3134, -0.9999999
        %v3167 = vmax.f32 %v3135, -0.9999999
        %v3168 = vmin.f32 %v3136, 0.9999999
        %v3169 = vmin.f32 %v3137, 0.9999999
        %v3170 = vmin.f32 %v3138, 0.9999999
        %v3171 = vmin.f32 %v3139, 0.9999999
        %v3172 = vmin.f32 %v3140, 0.9999999
        %v3173 = vmin.f32 %v3141, 0.9999999
        %v3174 = vmin.f32 %v3142, 0.9999999
        %v3175 = vmin.f32 %v3143, 0.9999999
        %v3176 = vmin.f32 %v3144, 0.9999999
        %v3177 = vmin.f32 %v3145, 0.9999999
        %v3178 = vmin.f32 %v3146, 0.9999999
        %v3179 = vmin.f32 %v3147, 0.9999999
        %v3180 = vmin.f32 %v3148, 0.9999999
        %v3181 = vmin.f32 %v3149, 0.9999999
        %v3182 = vmin.f32 %v3150, 0.9999999
        %v3183 = vmin.f32 %v3151, 0.9999999
        %v3184 = vmin.f32 %v3152, 0.9999999
        %v3185 = vmin.f32 %v3153, 0.9999999
        %v3186 = vmin.f32 %v3154, 0.9999999
        %v3187 = vmin.f32 %v3155, 0.9999999
        %v3188 = vmin.f32 %v3156, 0.9999999
        %v3189 = vmin.f32 %v3157, 0.9999999
        %v3190 = vmin.f32 %v3158, 0.9999999
        %v3191 = vmin.f32 %v3159, 0.9999999
        %v3192 = vmin.f32 %v3160, 0.9999999
        %v3193 = vmin.f32 %v3161, 0.9999999
        %v3194 = vmin.f32 %v3162, 0.9999999
        %v3195 = vmin.f32 %v3163, 0.9999999
        %v3196 = vmin.f32 %v3164, 0.9999999
        %v3197 = vmin.f32 %v3165, 0.9999999
        %v3198 = vmin.f32 %v3166, 0.9999999
        %v3199 = vmin.f32 %v3167, 0.9999999
        %v3200 = vadd.f32 %v3168, 1.0
        %v3201 = vadd.f32 %v3169, 1.0
        %v3202 = vadd.f32 %v3170, 1.0
        %v3203 = vadd.f32 %v3171, 1.0
        %v3204 = vadd.f32 %v3172, 1.0
        %v3205 = vadd.f32 %v3173, 1.0
        %v3206 = vadd.f32 %v3174, 1.0
        %v3207 = vadd.f32 %v3175, 1.0
        %v3208 = vadd.f32 %v3176, 1.0
        %v3209 = vadd.f32 %v3177, 1.0
        %v3210 = vadd.f32 %v3178, 1.0
        %v3211 = vadd.f32 %v3179, 1.0
        %v3212 = vadd.f32 %v3180, 1.0
        %v3213 = vadd.f32 %v3181, 1.0
        %v3214 = vadd.f32 %v3182, 1.0
        %v3215 = vadd.f32 %v3183, 1.0
        %v3216 = vadd.f32 %v3184, 1.0
        %v3217 = vadd.f32 %v3185, 1.0
        %v3218 = vadd.f32 %v3186, 1.0
        %v3219 = vadd.f32 %v3187, 1.0
        %v3220 = vadd.f32 %v3188, 1.0
        %v3221 = vadd.f32 %v3189, 1.0
        %v3222 = vadd.f32 %v3190, 1.0
        %v3223 = vadd.f32 %v3191, 1.0
        %v3224 = vadd.f32 %v3192, 1.0
        %v3225 = vadd.f32 %v3193, 1.0
        %v3226 = vadd.f32 %v3194, 1.0
        %v3227 = vadd.f32 %v3195, 1.0
        %v3228 = vadd.f32 %v3196, 1.0
        %v3229 = vadd.f32 %v3197, 1.0
        %v3230 = vadd.f32 %v3198, 1.0
        %v3231 = vadd.f32 %v3199, 1.0
        %v3232 = vsub.f32 1.0, %v3168
        %v3233 = vsub.f32 1.0, %v3169
        %v3234 = vsub.f32 1.0, %v3170
        %v3235 = vsub.f32 1.0, %v3171
        %v3236 = vsub.f32 1.0, %v3172
        %v3237 = vsub.f32 1.0, %v3173
        %v3238 = vsub.f32 1.0, %v3174
        %v3239 = vsub.f32 1.0, %v3175
        %v3240 = vsub.f32 1.0, %v3176
        %v3241 = vsub.f32 1.0, %v3177
        %v3242 = vsub.f32 1.0, %v3178
        %v3243 = vsub.f32 1.0, %v3179
        %v3244 = vsub.f32 1.0, %v3180
        %v3245 = vsub.f32 1.0, %v3181
        %v3246 = vsub.f32 1.0, %v3182
        %v3247 = vsub.f32 1.0, %v3183
        %v3248 = vsub.f32 1.0, %v3184
        %v3249 = vsub.f32 1.0, %v3185
        %v3250 = vsub.f32 1.0, %v3186
        %v3251 = vsub.f32 1.0, %v3187
        %v3252 = vsub.f32 1.0, %v3188
        %v3253 = vsub.f32 1.0, %v3189
        %v3254 = vsub.f32 1.0, %v3190
        %v3255 = vsub.f32 1.0, %v3191
        %v3256 = vsub.f32 1.0, %v3192
        %v3257 = vsub.f32 1.0, %v3193
        %v3258 = vsub.f32 1.0, %v3194
        %v3259 = vsub.f32 1.0, %v3195
        %v3260 = vsub.f32 1.0, %v3196
        %v3261 = vsub.f32 1.0, %v3197
        %v3262 = vsub.f32 1.0, %v3198
        %v3263 = vsub.f32 1.0, %v3199
        %v3264 = vrcp.pop %v3232
        %v3265 = vmul.f32 %v3200, %v3264
        %v3266 = vrcp.pop %v3233
        %v3267 = vmul.f32 %v3201, %v3266
        %v3268 = vrcp.pop %v3234
        %v3269 = vmul.f32 %v3202, %v3268
        %v3270 = vrcp.pop %v3235
        %v3271 = vmul.f32 %v3203, %v3270
        %v3272 = vrcp.pop %v3236
        %v3273 = vmul.f32 %v3204, %v3272
        %v3274 = vrcp.pop %v3237
        %v3275 = vmul.f32 %v3205, %v3274
        %v3276 = vrcp.pop %v3238
        %v3277 = vmul.f32 %v3206, %v3276
        %v3278 = vrcp.pop %v3239
        %v3279 = vmul.f32 %v3207, %v3278
        %v3280 = vrcp.pop %v3240
        %v3281 = vmul.f32 %v3208, %v3280
        %v3282 = vrcp.pop %v3241
        %v3283 = vmul.f32 %v3209, %v3282
        %v3284 = vrcp.pop %v3242
        %v3285 = vmul.f32 %v3210, %v3284
        %v3286 = vrcp.pop %v3243
        %v3287 = vmul.f32 %v3211, %v3286
        %v3288 = vrcp.pop %v3244
        %v3289 = vmul.f32 %v3212, %v3288
        %v3290 = vrcp.pop %v3245
        %v3291 = vmul.f32 %v3213, %v3290
        %v3292 = vrcp.pop %v3246
        %v3293 = vmul.f32 %v3214, %v3292
        %v3294 = vrcp.pop %v3247
        %v3295 = vmul.f32 %v3215, %v3294
        %v3296 = vrcp.pop %v3248
        %v3297 = vmul.f32 %v3216, %v3296
        %v3298 = vrcp.pop %v3249
        %v3299 = vmul.f32 %v3217, %v3298
        %v3300 = vrcp.pop %v3250
        %v3301 = vmul.f32 %v3218, %v3300
        %v3302 = vrcp.pop %v3251
        %v3303 = vmul.f32 %v3219, %v3302
        %v3304 = vrcp.pop %v3252
        %v3305 = vmul.f32 %v3220, %v3304
        %v3306 = vrcp.pop %v3253
        %v3307 = vmul.f32 %v3221, %v3306
        %v3308 = vrcp.pop %v3254
        %v3309 = vmul.f32 %v3222, %v3308
        %v3310 = vrcp.pop %v3255
        %v3311 = vmul.f32 %v3223, %v3310
        %v3312 = vrcp.pop %v3256
        %v3313 = vmul.f32 %v3224, %v3312
        %v3314 = vrcp.pop %v3257
        %v3315 = vmul.f32 %v3225, %v3314
        %v3316 = vrcp.pop %v3258
        %v3317 = vmul.f32 %v3226, %v3316
        %v3318 = vrcp.pop %v3259
        %v3319 = vmul.f32 %v3227, %v3318
        %v3320 = vrcp.pop %v3260
        %v3321 = vmul.f32 %v3228, %v3320
        %v3322 = vrcp.pop %v3261
        %v3323 = vmul.f32 %v3229, %v3322
        %v3324 = vrcp.pop %v3262
        %v3325 = vmul.f32 %v3230, %v3324
        %v3326 = vrcp.pop %v3263
        %v3327 = vmul.f32 %v3231, %v3326
        %v3328 = vlog2.pop %v3265
        %v3329 = vmul.f32 %v3328, 0.6931472
        %v3330 = vlog2.pop %v3267
        %v3331 = vmul.f32 %v3330, 0.6931472
        %v3332 = vlog2.pop %v3269
        %v3333 = vmul.f32 %v3332, 0.6931472
        %v3334 = vlog2.pop %v3271
        %v3335 = vmul.f32 %v3334, 0.6931472
        %v3336 = vlog2.pop %v3273
        %v3337 = vmul.f32 %v3336, 0.6931472
        %v3338 = vlog2.pop %v3275
        %v3339 = vmul.f32 %v3338, 0.6931472
        %v3340 = vlog2.pop %v3277
        %v3341 = vmul.f32 %v3340, 0.6931472
        %v3342 = vlog2.pop %v3279
        %v3343 = vmul.f32 %v3342, 0.6931472
        %v3344 = vlog2.pop %v3281
        %v3345 = vmul.f32 %v3344, 0.6931472
        %v3346 = vlog2.pop %v3283
        %v3347 = vmul.f32 %v3346, 0.6931472
        %v3348 = vlog2.pop %v3285
        %v3349 = vmul.f32 %v3348, 0.6931472
        %v3350 = vlog2.pop %v3287
        %v3351 = vmul.f32 %v3350, 0.6931472
        %v3352 = vlog2.pop %v3289
        %v3353 = vmul.f32 %v3352, 0.6931472
        %v3354 = vlog2.pop %v3291
        %v3355 = vmul.f32 %v3354, 0.6931472
        %v3356 = vlog2.pop %v3293
        %v3357 = vmul.f32 %v3356, 0.6931472
        %v3358 = vlog2.pop %v3295
        %v3359 = vmul.f32 %v3358, 0.6931472
        %v3360 = vlog2.pop %v3297
        %v3361 = vmul.f32 %v3360, 0.6931472
        %v3362 = vlog2.pop %v3299
        %v3363 = vmul.f32 %v3362, 0.6931472
        %v3364 = vlog2.pop %v3301
        %v3365 = vmul.f32 %v3364, 0.6931472
        %v3366 = vlog2.pop %v3303
        %v3367 = vmul.f32 %v3366, 0.6931472
        %v3368 = vlog2.pop %v3305
        %v3369 = vmul.f32 %v3368, 0.6931472
        %v3370 = vlog2.pop %v3307
        %v3371 = vmul.f32 %v3370, 0.6931472
        %v3372 = vlog2.pop %v3309
        %v3373 = vmul.f32 %v3372, 0.6931472
        %v3374 = vlog2.pop %v3311
        %v3375 = vmul.f32 %v3374, 0.6931472
        %v3376 = vlog2.pop %v3313
        %v3377 = vmul.f32 %v3376, 0.6931472
        %v3378 = vlog2.pop %v3315
        %v3379 = vmul.f32 %v3378, 0.6931472
        %v3380 = vlog2.pop %v3317
        %v3381 = vmul.f32 %v3380, 0.6931472
        %v3382 = vlog2.pop %v3319
        %v3383 = vmul.f32 %v3382, 0.6931472
        %v3384 = vlog2.pop %v3321
        %v3385 = vmul.f32 %v3384, 0.6931472
        %v3386 = vlog2.pop %v3323
        %v3387 = vmul.f32 %v3386, 0.6931472
        %v3388 = vlog2.pop %v3325
        %v3389 = vmul.f32 %v3388, 0.6931472
        %v3390 = vlog2.pop %v3327
        %v3391 = vmul.f32 %v3390, 0.6931472
        %v3392 = vmul.f32 %v3329, 0.5
        %v3393 = vmul.f32 %v3331, 0.5
        %v3394 = vmul.f32 %v3333, 0.5
        %v3395 = vmul.f32 %v3335, 0.5
        %v3396 = vmul.f32 %v3337, 0.5
        %v3397 = vmul.f32 %v3339, 0.5
        %v3398 = vmul.f32 %v3341, 0.5
        %v3399 = vmul.f32 %v3343, 0.5
        %v3400 = vmul.f32 %v3345, 0.5
        %v3401 = vmul.f32 %v3347, 0.5
        %v3402 = vmul.f32 %v3349, 0.5
        %v3403 = vmul.f32 %v3351, 0.5
        %v3404 = vmul.f32 %v3353, 0.5
        %v3405 = vmul.f32 %v3355, 0.5
        %v3406 = vmul.f32 %v3357, 0.5
        %v3407 = vmul.f32 %v3359, 0.5
        %v3408 = vmul.f32 %v3361, 0.5
        %v3409 = vmul.f32 %v3363, 0.5
        %v3410 = vmul.f32 %v3365, 0.5
        %v3411 = vmul.f32 %v3367, 0.5
        %v3412 = vmul.f32 %v3369, 0.5
        %v3413 = vmul.f32 %v3371, 0.5
        %v3414 = vmul.f32 %v3373, 0.5
        %v3415 = vmul.f32 %v3375, 0.5
        %v3416 = vmul.f32 %v3377, 0.5
        %v3417 = vmul.f32 %v3379, 0.5
        %v3418 = vmul.f32 %v3381, 0.5
        %v3419 = vmul.f32 %v3383, 0.5
        %v3420 = vmul.f32 %v3385, 0.5
        %v3421 = vmul.f32 %v3387, 0.5
        %v3422 = vmul.f32 %v3389, 0.5
        %v3423 = vmul.f32 %v3391, 0.5
        %v3424 = vrcp.pop %v3104
        %v3425 = vmul.f32 %v3392, %v3424
        %v3426 = vrcp.pop %v3105
        %v3427 = vmul.f32 %v3393, %v3426
        %v3428 = vrcp.pop %v3106
        %v3429 = vmul.f32 %v3394, %v3428
        %v3430 = vrcp.pop %v3107
        %v3431 = vmul.f32 %v3395, %v3430
        %v3432 = vrcp.pop %v3108
        %v3433 = vmul.f32 %v3396, %v3432
        %v3434 = vrcp.pop %v3109
        %v3435 = vmul.f32 %v3397, %v3434
        %v3436 = vrcp.pop %v3110
        %v3437 = vmul.f32 %v3398, %v3436
        %v3438 = vrcp.pop %v3111
        %v3439 = vmul.f32 %v3399, %v3438
        %v3440 = vrcp.pop %v3112
        %v3441 = vmul.f32 %v3400, %v3440
        %v3442 = vrcp.pop %v3113
        %v3443 = vmul.f32 %v3401, %v3442
        %v3444 = vrcp.pop %v3114
        %v3445 = vmul.f32 %v3402, %v3444
        %v3446 = vrcp.pop %v3115
        %v3447 = vmul.f32 %v3403, %v3446
        %v3448 = vrcp.pop %v3116
        %v3449 = vmul.f32 %v3404, %v3448
        %v3450 = vrcp.pop %v3117
        %v3451 = vmul.f32 %v3405, %v3450
        %v3452 = vrcp.pop %v3118
        %v3453 = vmul.f32 %v3406, %v3452
        %v3454 = vrcp.pop %v3119
        %v3455 = vmul.f32 %v3407, %v3454
        %v3456 = vrcp.pop %v3120
        %v3457 = vmul.f32 %v3408, %v3456
        %v3458 = vrcp.pop %v3121
        %v3459 = vmul.f32 %v3409, %v3458
        %v3460 = vrcp.pop %v3122
        %v3461 = vmul.f32 %v3410, %v3460
        %v3462 = vrcp.pop %v3123
        %v3463 = vmul.f32 %v3411, %v3462
        %v3464 = vrcp.pop %v3124
        %v3465 = vmul.f32 %v3412, %v3464
        %v3466 = vrcp.pop %v3125
        %v3467 = vmul.f32 %v3413, %v3466
        %v3468 = vrcp.pop %v3126
        %v3469 = vmul.f32 %v3414, %v3468
        %v3470 = vrcp.pop %v3127
        %v3471 = vmul.f32 %v3415, %v3470
        %v3472 = vrcp.pop %v3128
        %v3473 = vmul.f32 %v3416, %v3472
        %v3474 = vrcp.pop %v3129
        %v3475 = vmul.f32 %v3417, %v3474
        %v3476 = vrcp.pop %v3130
        %v3477 = vmul.f32 %v3418, %v3476
        %v3478 = vrcp.pop %v3131
        %v3479 = vmul.f32 %v3419, %v3478
        %v3480 = vrcp.pop %v3132
        %v3481 = vmul.f32 %v3420, %v3480
        %v3482 = vrcp.pop %v3133
        %v3483 = vmul.f32 %v3421, %v3482
        %v3484 = vrcp.pop %v3134
        %v3485 = vmul.f32 %v3422, %v3484
        %v3486 = vrcp.pop %v3135
        %v3487 = vmul.f32 %v3423, %v3486
        %v3488 = vmul.f32 %v3425, %v3072
        %v3489 = vmul.f32 %v3427, %v3073
        %v3490 = vmul.f32 %v3429, %v3074
        %v3491 = vmul.f32 %v3431, %v3075
        %v3492 = vmul.f32 %v3433, %v3076
        %v3493 = vmul.f32 %v3435, %v3077
        %v3494 = vmul.f32 %v3437, %v3078
        %v3495 = vmul.f32 %v3439, %v3079
        %v3496 = vmul.f32 %v3441, %v3080
        %v3497 = vmul.f32 %v3443, %v3081
        %v3498 = vmul.f32 %v3445, %v3082
        %v3499 = vmul.f32 %v3447, %v3083
        %v3500 = vmul.f32 %v3449, %v3084
        %v3501 = vmul.f32 %v3451, %v3085
        %v3502 = vmul.f32 %v3453, %v3086
        %v3503 = vmul.f32 %v3455, %v3087
        %v3504 = vmul.f32 %v3457, %v3088
        %v3505 = vmul.f32 %v3459, %v3089
        %v3506 = vmul.f32 %v3461, %v3090
        %v3507 = vmul.f32 %v3463, %v3091
        %v3508 = vmul.f32 %v3465, %v3092
        %v3509 = vmul.f32 %v3467, %v3093
        %v3510 = vmul.f32 %v3469, %v3094
        %v3511 = vmul.f32 %v3471, %v3095
        %v3512 = vmul.f32 %v3473, %v3096
        %v3513 = vmul.f32 %v3475, %v3097
        %v3514 = vmul.f32 %v3477, %v3098
        %v3515 = vmul.f32 %v3479, %v3099
        %v3516 = vmul.f32 %v3481, %v3100
        %v3517 = vmul.f32 %v3483, %v3101
        %v3518 = vmul.f32 %v3485, %v3102
        %v3519 = vmul.f32 %v3487, %v3103
        %3520 = vst [vmem:[%s164] sm:$0xff] %v3488
        %3521 = vst [vmem:[%s164 + $0x8] sm:$0xff] %v3489
        %3522 = vst [vmem:[%s164 + $0x10] sm:$0xff] %v3490
        %3523 = vst [vmem:[%s164 + $0x18] sm:$0xff] %v3491
        %3524 = vst [vmem:[%s164 + $0x20] sm:$0xff] %v3492
        %3525 = vst [vmem:[%s164 + $0x28] sm:$0xff] %v3493
        %3526 = vst [vmem:[%s164 + $0x30] sm:$0xff] %v3494
        %3527 = vst [vmem:[%s164 + $0x38] sm:$0xff] %v3495
        %3528 = vst [vmem:[%s164 + $0x40] sm:$0xff] %v3496
        %3529 = vst [vmem:[%s164 + $0x48] sm:$0xff] %v3497
        %3530 = vst [vmem:[%s164 + $0x50] sm:$0xff] %v3498
        %3531 = vst [vmem:[%s164 + $0x58] sm:$0xff] %v3499
        %3532 = vst [vmem:[%s164 + $0x60] sm:$0xff] %v3500
        %3533 = vst [vmem:[%s164 + $0x68] sm:$0xff] %v3501
        %3534 = vst [vmem:[%s164 + $0x70] sm:$0xff] %v3502
        %3535 = vst [vmem:[%s164 + $0x78] sm:$0xff] %v3503
        %3536 = vst [vmem:[%s164 + $0x80] sm:$0xff] %v3504
        %3537 = vst [vmem:[%s164 + $0x88] sm:$0xff] %v3505
        %3538 = vst [vmem:[%s164 + $0x90] sm:$0xff] %v3506
        %3539 = vst [vmem:[%s164 + $0x98] sm:$0xff] %v3507
        %3540 = vst [vmem:[%s164 + $0xa0] sm:$0xff] %v3508
        %3541 = vst [vmem:[%s164 + $0xa8] sm:$0xff] %v3509
        %3542 = vst [vmem:[%s164 + $0xb0] sm:$0xff] %v3510
        %3543 = vst [vmem:[%s164 + $0xb8] sm:$0xff] %v3511
        %3544 = vst [vmem:[%s164 + $0xc0] sm:$0xff] %v3512
        %3545 = vst [vmem:[%s164 + $0xc8] sm:$0xff] %v3513
        %3546 = vst [vmem:[%s164 + $0xd0] sm:$0xff] %v3514
        %3547 = vst [vmem:[%s164 + $0xd8] sm:$0xff] %v3515
        %3548 = vst [vmem:[%s164 + $0xe0] sm:$0xff] %v3516
        %3549 = vst [vmem:[%s164 + $0xe8] sm:$0xff] %v3517
        %3550 = vst [vmem:[%s164 + $0xf0] sm:$0xff] %v3518
        %3551 = vst [vmem:[%s164 + $0xf8] sm:$0xff] %v3519
        %s3552 = sand.u32 %s93, 1
        %s3553 = scalar_lea.sflag [#allocation3], %s3552
        %s3554 = sand.u32 %s93, 1
        %s3555 = smul.addr %s3554, 256
        %s3556 = scalar_lea.vmem [#allocation2], %s3555
        // Predicated region
        $region33: #{tpu_custom_call.1} parent=31 // pred_check
          %p3557 = pneg %p103
        $region34: #{tpu_custom_call.1} parent=31 // pred_check_branch
          %3559 = sbr.rel (%p3557) target = $region36
        $region35: #{tpu_custom_call.1} parent=31 // pred_region
          %s3560 = smul.u32 32, %s17
          %s3562 = ssub.s32 4096, 4096
          %3563 = vsyncadd %s3553, %s3562
          %s3564 = smul.addr %s3560, 128
          %s3565 = scalar_lea.hbm %s3, %s3564
          %s3566 = sshll.u32 %s3556, 4
          %s3567 = int_to_ptr.vmem [resolvable:$true] %s3566
          %3572 = dma.vmem_to_hbm [thread:$0]  %s3567, 4096, %s3565, %s3553, 128, 128, 8
        $region36: #{tpu_custom_call.1} parent=31 // pred_fallthru
          _
      $region32: #{tpu_custom_call.1} parent=5 // pred_fallthru
        _
      %p3573 = scmp.le.s32.totalorder 2, %s12
      // Predicated region
      $region37: #{tpu_custom_call.1} parent=5 // pred_check
        %p3574 = pneg %p3573
      $region38: #{tpu_custom_call.1} parent=5 // pred_check_branch
        %3576 = sbr.rel (%p3574) target = $region40
      $region39: #{tpu_custom_call.1} parent=5 // pred_region
        %s3577 = ssub.s32 %s12, 2
        // Predicated region
        $region41: #{tpu_custom_call.1} parent=39 // pred_check
          %p3578 = pneg %p109
        $region42: #{tpu_custom_call.1} parent=39 // pred_check_branch
          %3580 = sbr.rel (%p3578) target = $region44
        $region43: #{tpu_custom_call.1} parent=39 // pred_region
          %s3581 = sand.u32 %s94, 1
          %s3582 = scalar_lea.sflag [#allocation3], %s3581
          %s3583 = sand.u32 %s94, 1
          %s3584 = smul.addr %s3583, 256
          %s3585 = scalar_lea.vmem [#allocation2], %s3584
          %3586 = dma.done %s3582, 4096
        $region44: #{tpu_custom_call.1} parent=39 // pred_fallthru
          _
      $region40: #{tpu_custom_call.1} parent=5 // pred_fallthru
        _
    $region6: #{tpu_custom_call.1} parent=1 // loop_footer
      %s16 = sadd.s32 1, %s12
    $region7: #{tpu_custom_call.1} parent=1 // loop_footer_branch
      %11 = sbr.rel target = $region3
    $region8: #{tpu_custom_call.1} parent=1 // loop_exit
      _
    %3587 = vsyncpa [#allocation3], 1
    %s3588 = scalar_lea.sflag [#allocation3], 1
    %3589 = vsyncpa %s3588, 1

</llo_original>
